<compile_context>
chip_gen: v5e
topology: v5e:2x2
jax: 0.10.0
libtpu: 0.0.40
codegen_flags: <defaults>
</compile_context>

<pallas_src>
import functools
import numpy as np
import jax
import jax.numpy as jnp
from jax.experimental import pallas as pl
from jax.experimental.pallas import tpu as pltpu

# ----------------------------- tiny synthetic config -----------------------------
BATCH = 2
IMG_SIZE = 16
PATCH = 8
CHANNELS = 3
NUM_PATCHES = (IMG_SIZE // PATCH) ** 2          # 4
VIS_HIDDEN = 32
VIS_INTER = 64
VIS_LAYERS = 2
VIS_HEADS = 4
VIS_HEAD_DIM = VIS_HIDDEN // VIS_HEADS          # 8

PROJ_DIM = 32                                   # projection_dim == text hidden_size
TXT_HIDDEN = 32
TXT_INTER = 64
TXT_LAYERS = 2
TXT_HEADS = 4
TXT_KV_HEADS = 4
TXT_HEAD_DIM = TXT_HIDDEN // TXT_HEADS          # 8
VOCAB = 128
ROPE_THETA = 10000.0
LN_EPS = 1e-6
RMS_EPS = 1e-6

IMAGE_TOKEN_ID = 99
PAD_TOKEN_ID = 0
SEQ_LEN = NUM_PATCHES + 4                       # 4 image tokens + bos + 3 text tokens = 8


# ----------------------------- in-kernel helpers -----------------------------
def _dot_bf16(a, b):
    """MXU matmul: bf16 operands, f32 accumulation."""
    return jnp.dot(a.astype(jnp.bfloat16), b.astype(jnp.bfloat16),
                   preferred_element_type=jnp.float32)


def _layernorm_f32(x, g, b, eps):
    mu = jnp.mean(x, axis=-1, keepdims=True)
    var = jnp.mean((x - mu) ** 2, axis=-1, keepdims=True)
    return (x - mu) * jax.lax.rsqrt(var + eps) * g + b


def _rmsnorm_f32(x, w, eps):
    ms = jnp.mean(x * x, axis=-1, keepdims=True)
    return x * jax.lax.rsqrt(ms + eps) * (1.0 + w)


def _softmax_f32(s):
    s = s - jnp.max(s, axis=-1, keepdims=True)
    p = jnp.exp(s)
    return p * pl.reciprocal(jnp.sum(p, axis=-1, keepdims=True), approx=True)


def _split_heads(x, head_src, batch, seq, hd):
    """(B*S, n_src*hd) f32 -> (len(head_src)*B, S, hd) bf16, head-major batch index."""
    parts = [x[:, hs * hd:(hs + 1) * hd].reshape(1, batch, seq, hd) for hs in head_src]
    stacked = jnp.concatenate(parts, axis=0)                      # (H, B, S, hd)
    return stacked.reshape(len(head_src) * batch, seq, hd).astype(jnp.bfloat16)


def _mha(q, k, v, batch, seq, num_heads, hd, kv_map, scale):
    """Head-batched SDPA. q:(B*S,H*hd) k/v:(B*S,KVH*hd) f32 -> ctx (B*S,H*hd) bf16."""
    qh = _split_heads(q, list(range(num_heads)), batch, seq, hd)
    kh = _split_heads(k, kv_map, batch, seq, hd)                  # GQA: direct head indexing
    vh = _split_heads(v, kv_map, batch, seq, hd)
    # NT contraction over last dims (no explicit transpose); bf16 operands, f32 accum.
    s = jnp.einsum("nqd,nkd->nqk", qh, kh, preferred_element_type=jnp.float32) * scale
    # Prefill uses an all-zero (prefix-LM) attention bias -> no mask add.
    p = _softmax_f32(s).astype(jnp.bfloat16)
    ctx = jnp.einsum("nqk,nkd->nqd", p, vh, preferred_element_type=jnp.float32)
    ctx = ctx.reshape(num_heads, batch * seq, hd)
    return jnp.concatenate([ctx[h] for h in range(num_heads)], axis=-1).astype(jnp.bfloat16)


# ----------------------------- Pallas kernels -----------------------------
def _patch_embed_kernel(x_ref, w_ref, b_ref, pos_ref, o_ref):
    # conv(stride==kernel) rewritten as matmul; bias + positional embedding fused.
    o_ref[...] = (_dot_bf16(x_ref[...], w_ref[...]) + b_ref[...] + pos_ref[...]).astype(o_ref.dtype)


def pl_patch_embed(patches, w, b, pos_tiled):
    rows, _ = patches.shape
    d_model = w.shape[1]
    return pl.pallas_call(
        _patch_embed_kernel,
        out_shape=jax.ShapeDtypeStruct((rows, d_model), jnp.bfloat16),
    )(patches, w, b, pos_tiled)


def _vision_layer_kernel(batch, seq, num_heads, hd, scale, eps,
                         x_ref, ln1g, ln1b, wqkv, bqkv, wo, bo, ln2g, ln2b,
                         fc1, b1, fc2, b2, o_ref):
    x = x_ref[...].astype(jnp.float32)                            # (B*P, D)
    d_model = num_heads * hd

    # ---- attention block: LN1 -> fused QKV -> head-batched SDPA -> O-proj -> + residual
    resid = x
    xn = _layernorm_f32(x, ln1g[...], ln1b[...], eps)
    qkv = _dot_bf16(xn, wqkv[...]) + bqkv[...]                    # (B*P, 3D) f32
    q, k, v = qkv[:, :d_model], qkv[:, d_model:2 * d_model], qkv[:, 2 * d_model:]
    ctx = _mha(q, k, v, batch, seq, num_heads, hd, list(range(num_heads)), scale)
    x = resid + _dot_bf16(ctx, wo[...]) + bo[...]

    # ---- MLP block: LN2 -> fc1 -> gelu(tanh) -> fc2 -> + residual
    resid = x
    xn = _layernorm_f32(x, ln2g[...], ln2b[...], eps)
    hmid = jax.nn.gelu(_dot_bf16(xn, fc1[...]) + b1[...], approximate=True)
    o_ref[...] = (resid + _dot_bf16(hmid, fc2[...]) + b2[...]).astype(o_ref.dtype)


def pl_vision_layer(x2d, batch, seq, layer):
    rows, d_model = x2d.shape
    kernel = functools.partial(_vision_layer_kernel, batch, seq, VIS_HEADS, VIS_HEAD_DIM,
                               VIS_HEAD_DIM ** -0.5, LN_EPS)
    return pl.pallas_call(
        kernel,
        out_shape=jax.ShapeDtypeStruct((rows, d_model), jnp.bfloat16),
    )(x2d, layer["ln1_g"], layer["ln1_b"], layer["wqkv"], layer["bqkv"],
      layer["o_w"], layer["o_b"], layer["ln2_g"], layer["ln2_b"],
      layer["fc1_w"], layer["fc1_b"], layer["fc2_w"], layer["fc2_b"])


def _postln_project_kernel(eps, out_scale, x_ref, g_ref, b_ref, w_ref, o_ref):
    # vision post-LayerNorm + multimodal projector + projection_dim**-0.5 scale, fused.
    xn = _layernorm_f32(x_ref[...].astype(jnp.float32), g_ref[...], b_ref[...], eps)
    o_ref[...] = _dot_bf16(xn, w_ref[...]) * out_scale


def pl_postln_project(x2d, g, b, w, out_scale):
    # TODO(synk): at real shapes add a row/vocab "parallel" grid so both v7x TCs are used.
    rows = x2d.shape[0]
    proj = w.shape[1]
    return pl.pallas_call(
        functools.partial(_postln_project_kernel, LN_EPS, out_scale),
        out_shape=jax.ShapeDtypeStruct((rows, proj), jnp.float32),
    )(x2d, g, b, w)


def _text_layer_kernel(batch, seq, num_heads, num_kv_heads, hd, scale, eps,
                       x_ref, cosq_ref, sinq_ref, rot_ref,
                       in_norm, wqkv, wo, post_norm, wgu, wdown, o_ref):
    x = x_ref[...].astype(jnp.float32)                            # (B*S, D)
    dq = num_heads * hd
    dkv = num_kv_heads * hd
    rep = num_heads // num_kv_heads

    # ---- attention: RMSNorm -> fused QKV -> packed-RoPE -> head-batched SDPA -> O-proj
    resid = x
    xn = _rmsnorm_f32(x, in_norm[...], eps)
    qkv = _dot_bf16(xn, wqkv[...])                                # (B*S, dq+2*dkv) f32
    q = qkv[:, :dq]
    k = qkv[:, dq:dq + dkv]
    v = qkv[:, dq + dkv:]
    cq = cosq_ref[...]
    sq = sinq_ref[...]
    rot = rot_ref[...]                                            # block-diag ±1 rotate_half
    q = q * cq + _dot_bf16(q, rot) * sq                           # one lane-dense MXU push
    k = k * cq[:, :dkv] + _dot_bf16(k, rot[:dkv, :dkv]) * sq[:, :dkv]
    kv_map = [h // rep for h in range(num_heads)]
    ctx = _mha(q, k, v, batch, seq, num_heads, hd, kv_map, scale)
    x = resid + _dot_bf16(ctx, wo[...])

    # ---- MLP: RMSNorm -> fused gate/up -> GeGLU -> down -> + residual
    resid = x
    xn = _rmsnorm_f32(x, post_norm[...], eps)
    gu = _dot_bf16(xn, wgu[...])                                  # (B*S, 2I) lane-dense
    inter = wgu.shape[1] // 2
    act = jax.nn.gelu(gu[:, :inter], approximate=True) * gu[:, inter:]
    o_ref[...] = (resid + _dot_bf16(act, wdown[...])).astype(o_ref.dtype)


def pl_text_layer(x2d, cosq, sinq, rot, batch, seq, layer):
    rows, d_model = x2d.shape
    kernel = functools.partial(_text_layer_kernel, batch, seq, TXT_HEADS, TXT_KV_HEADS,
                               TXT_HEAD_DIM, TXT_HEAD_DIM ** -0.5, RMS_EPS)
    return pl.pallas_call(
        kernel,
        out_shape=jax.ShapeDtypeStruct((rows, d_model), jnp.bfloat16),
    )(x2d, cosq, sinq, rot,
      layer["in_norm"], layer["wqkv"], layer["o_w"],
      layer["post_norm"], layer["wgu"], layer["down_w"])


def _final_norm_lmhead_kernel(eps, x_ref, w_ref, lm_ref, o_ref):
    xn = _rmsnorm_f32(x_ref[...].astype(jnp.float32), w_ref[...], eps)
    o_ref[...] = _dot_bf16(xn, lm_ref[...])                       # lane-dense (vocab = 128)


def pl_final_norm_lmhead(h2d, norm_w, lm_head):
    # Row-tiled "parallel" grid so v7x's second TensorCore is used; harmless on v5e/v6e.
    # TODO(synk): at vocab=257k the lm_head also needs N/K tiling with a VMEM accumulator.
    rows, d_model = h2d.shape
    vocab = lm_head.shape[1]
    tile = 8 if rows % 8 == 0 else rows
    return pl.pallas_call(
        functools.partial(_final_norm_lmhead_kernel, RMS_EPS),
        out_shape=jax.ShapeDtypeStruct((rows, vocab), jnp.float32),
        grid=(rows // tile,),
        in_specs=[
            pl.BlockSpec((tile, d_model), lambda i: (i, 0)),
            pl.BlockSpec((1, d_model), lambda i: (0, 0)),
            pl.BlockSpec((d_model, vocab), lambda i: (0, 0)),
        ],
        out_specs=pl.BlockSpec((tile, vocab), lambda i: (i, 0)),
        compiler_params=pltpu.CompilerParams(dimension_semantics=("parallel",)),
    )(h2d, norm_w, lm_head)


# ----------------------------- model glue (plain JAX) -----------------------------
def build_rope_rotation(head_dim, n_heads):
    """Block-diagonal ±1 matrix R with (x @ R) == rotate_half(x) per head (HF convention)."""
    hd = head_dim // 2
    r = np.zeros((head_dim, head_dim), np.float32)
    r[np.arange(hd), np.arange(hd) + hd] = 1.0
    r[np.arange(hd) + hd, np.arange(hd)] = -1.0
    return jnp.asarray(np.kron(np.eye(n_heads, dtype=np.float32), r), dtype=jnp.bfloat16)


def rope_packed_cos_sin(position_ids, head_dim, n_heads, theta=ROPE_THETA):
    """cos/sin tiled to the packed (B*S, n_heads*head_dim) q-slab width."""
    inv_freq = 1.0 / (theta ** (jnp.arange(0, head_dim, 2, dtype=jnp.float32) / head_dim))
    freqs = position_ids.astype(jnp.float32)[..., None] * inv_freq[None, None, :]   # (B,S,hd/2)
    emb = jnp.concatenate([freqs, freqs], axis=-1)                                  # (B,S,hd)
    cos = jnp.tile(jnp.cos(emb), (1, 1, n_heads))
    sin = jnp.tile(jnp.sin(emb), (1, 1, n_heads))
    rows = position_ids.shape[0] * position_ids.shape[1]
    return cos.reshape(rows, -1), sin.reshape(rows, -1)


def siglip_vision(vp, pixel_values):
    # pixel_values: NCHW (B, C, H, W); stride==kernel conv == patch extraction + matmul
    B, C, H, W = pixel_values.shape
    p = PATCH
    x = pixel_values.reshape(B, C, H // p, p, W // p, p)
    x = x.transpose(0, 2, 4, 1, 3, 5).reshape(B * (H // p) * (W // p), C * p * p)
    pos_tiled = jnp.tile(vp["pos_emb"], (B, 1))
    x = pl_patch_embed(x, vp["patch_w"], vp["patch_b"], pos_tiled)   # (B*P, Dv) bf16
    for layer in vp["layers"]:
        x = pl_vision_layer(x, B, NUM_PATCHES, layer)
    return x                                                         # (B*P, Dv) bf16, pre post-LN


def gemma_lm(tp, input_embeds, position_ids):
    B, S, D = input_embeds.shape
    h = (input_embeds * (TXT_HIDDEN ** 0.5)).astype(jnp.bfloat16).reshape(B * S, D)
    cosq, sinq = rope_packed_cos_sin(position_ids, TXT_HEAD_DIM, TXT_HEADS)
    for layer in tp["layers"]:
        h = pl_text_layer(h, cosq, sinq, tp["rope_rot"], B, S, layer)
    logits = pl_final_norm_lmhead(h, tp["final_norm"], tp["lm_head"])
    return logits.reshape(B, S, -1)


def paligemma_forward(params, input_ids, pixel_values, attention_mask):
    # 1. vision tower, then fused post-LN + projector + projection_dim**-0.5 scale
    vis_hidden = siglip_vision(params["vision"], pixel_values)
    scaled_img = pl_postln_project(vis_hidden, params["vision"]["post_g"],
                                   params["vision"]["post_b"], params["proj_w"],
                                   PROJ_DIM ** -0.5)
    B = pixel_values.shape[0]
    scaled_img = scaled_img.reshape(B, NUM_PATCHES, -1)                 # (B, P, Dt)

    # 2. text embeddings
    input_embeds = jnp.take(params["text"]["embed"], input_ids, axis=0)  # (B, S, Dt)

    # 3. merge (emulates torch.where + masked_scatter per-batch)
    pad_mask = input_ids == PAD_TOKEN_ID
    img_mask = input_ids == IMAGE_TOKEN_ID
    text_mask = (~img_mask) & (~pad_mask)
    S = input_ids.shape[1]
    D = input_embeds.shape[-1]
    final = jnp.zeros_like(input_embeds)
    final = jnp.where(text_mask[..., None], input_embeds, final)
    idx = jnp.clip(jnp.cumsum(img_mask.astype(jnp.int32), axis=1) - 1, 0, scaled_img.shape[1] - 1)
    gathered = jnp.take_along_axis(scaled_img, jnp.broadcast_to(idx[:, :, None], (B, S, D)), axis=1)
    final = jnp.where(img_mask[..., None], gathered, final)
    final = jnp.where(pad_mask[..., None], jnp.zeros_like(final), final)

    # 4. prefill: all-zero (prefix-LM) attention bias -> mask add skipped inside the kernels.
    # TODO(synk): generation phase (KVCache, causal mask over kv_len) and real padding masks
    # are not implemented; with padding the zero-bias assumption diverges from PyTorch.
    position_ids = jnp.cumsum(attention_mask, axis=-1)
    position_ids = jnp.where(attention_mask == 0, 1, position_ids)

    # 5. Gemma language model
    return gemma_lm(params["text"], final, position_ids)


# ----------------------------- deterministic parameter init -----------------------------
def init_params(key):
    keys = iter(jax.random.split(key, 256))

    def rnd(shape, scale=0.02):
        return jax.random.normal(next(keys), shape, jnp.float32) * scale

    # NOTE: fused QKV / gate-up weights are concatenated + cast to bf16 HERE (parameter-load
    # time), so the forward pass never re-packs or re-casts weights per step.
    vision_layers = []
    for _ in range(VIS_LAYERS):
        qw, kw, vw = rnd((VIS_HIDDEN, VIS_HIDDEN)), rnd((VIS_HIDDEN, VIS_HIDDEN)), rnd((VIS_HIDDEN, VIS_HIDDEN))
        vision_layers.append(dict(
            ln1_g=jnp.ones((1, VIS_HIDDEN)), ln1_b=jnp.zeros((1, VIS_HIDDEN)),
            wqkv=jnp.concatenate([qw, kw, vw], axis=1).astype(jnp.bfloat16),
            bqkv=jnp.zeros((1, 3 * VIS_HIDDEN)),
            o_w=rnd((VIS_HIDDEN, VIS_HIDDEN)).astype(jnp.bfloat16), o_b=jnp.zeros((1, VIS_HIDDEN)),
            ln2_g=jnp.ones((1, VIS_HIDDEN)), ln2_b=jnp.zeros((1, VIS_HIDDEN)),
            fc1_w=rnd((VIS_HIDDEN, VIS_INTER)).astype(jnp.bfloat16), fc1_b=jnp.zeros((1, VIS_INTER)),
            fc2_w=rnd((VIS_INTER, VIS_HIDDEN)).astype(jnp.bfloat16), fc2_b=jnp.zeros((1, VIS_HIDDEN)),
        ))
    vision = dict(
        patch_w=rnd((CHANNELS * PATCH * PATCH, VIS_HIDDEN)).astype(jnp.bfloat16),
        patch_b=jnp.zeros((1, VIS_HIDDEN)),
        pos_emb=rnd((NUM_PATCHES, VIS_HIDDEN)),
        layers=vision_layers,
        post_g=jnp.ones((1, VIS_HIDDEN)), post_b=jnp.zeros((1, VIS_HIDDEN)),
    )

    embed = rnd((VOCAB, TXT_HIDDEN))
    text_layers = []
    for _ in range(TXT_LAYERS):
        qw = rnd((TXT_HIDDEN, TXT_HEADS * TXT_HEAD_DIM))
        kw = rnd((TXT_HIDDEN, TXT_KV_HEADS * TXT_HEAD_DIM))
        vw = rnd((TXT_HIDDEN, TXT_KV_HEADS * TXT_HEAD_DIM))
        gw = rnd((TXT_HIDDEN, TXT_INTER))
        uw = rnd((TXT_HIDDEN, TXT_INTER))
        text_layers.append(dict(
            in_norm=jnp.zeros((1, TXT_HIDDEN)),
            wqkv=jnp.concatenate([qw, kw, vw], axis=1).astype(jnp.bfloat16),
            o_w=rnd((TXT_HEADS * TXT_HEAD_DIM, TXT_HIDDEN)).astype(jnp.bfloat16),
            post_norm=jnp.zeros((1, TXT_HIDDEN)),
            wgu=jnp.concatenate([gw, uw], axis=1).astype(jnp.bfloat16),
            down_w=rnd((TXT_INTER, TXT_HIDDEN)).astype(jnp.bfloat16),
        ))
    text = dict(
        embed=embed,
        layers=text_layers,
        final_norm=jnp.zeros((1, TXT_HIDDEN)),
        lm_head=embed.T.astype(jnp.bfloat16),                       # tie_weights()
        rope_rot=build_rope_rotation(TXT_HEAD_DIM, TXT_HEADS),
    )

    return dict(vision=vision,
                proj_w=rnd((VIS_HIDDEN, PROJ_DIM)).astype(jnp.bfloat16),
                text=text)


# ----------------------------- main -----------------------------
if __name__ == "__main__":
    key = jax.random.PRNGKey(0)
    pkey, xkey = jax.random.split(key)
    params = init_params(pkey)

    # pixel_values in PyTorch NCHW layout
    pixel_values = jax.random.normal(xkey, (BATCH, CHANNELS, IMG_SIZE, IMG_SIZE), jnp.float32)

    # <image><image><image><image><bos><tok><tok><newline-ish tok>
    one_seq = [IMAGE_TOKEN_ID] * NUM_PATCHES + [2, 17, 42, 10]
    input_ids = jnp.array([one_seq, one_seq], dtype=jnp.int32)
    attention_mask = jnp.ones((BATCH, SEQ_LEN), dtype=jnp.int32)

    fwd = jax.jit(paligemma_forward)
    logits = fwd(params, input_ids, pixel_values, attention_mask)
    jax.block_until_ready(logits)

    assert logits.shape == (BATCH, SEQ_LEN, VOCAB), logits.shape
    assert bool(jnp.all(jnp.isfinite(logits)))
    print("KERNEL_OK")
</pallas_src>

<mosaic_0001>
module attributes {stable_mosaic.version = 11 : i64} {
  func.func @_patch_embed_kernel(%arg0: memref<8x192xf32, #tpu.memory_space<vmem>>, %arg1: memref<192x32xbf16, #tpu.memory_space<vmem>>, %arg2: memref<1x32xf32, #tpu.memory_space<vmem>>, %arg3: memref<8x32xf32, #tpu.memory_space<vmem>>, %arg4: memref<8x32xbf16, #tpu.memory_space<vmem>>) attributes {dimension_semantics = [], scalar_prefetch = 0 : i64, scratch_operands = 0 : i64, tpu.core_type = #tpu.core_type<tc>} {
    %c0 = arith.constant 0 : index
    %c0_0 = arith.constant 0 : index
    %0 = vector.load %arg0[%c0, %c0_0] : memref<8x192xf32, #tpu.memory_space<vmem>>, vector<8x192xf32>
    %c0_1 = arith.constant 0 : index
    %c0_2 = arith.constant 0 : index
    %1 = vector.load %arg1[%c0_1, %c0_2] : memref<192x32xbf16, #tpu.memory_space<vmem>>, vector<192x32xbf16>
    %2 = arith.truncf %0 : vector<8x192xf32> to vector<8x192xbf16>
    %cst = arith.constant dense<0.000000e+00> : vector<8x32xf32>
    %3 = tpu.matmul %2, %1, %cst {dimension_numbers = #tpu.dot_dimension_numbers<[1], [0], [0], [1], [0, 0, 1, 1], [], []>} : vector<8x192xbf16>, vector<192x32xbf16>, vector<8x32xf32> -> vector<8x32xf32>
    %c0_3 = arith.constant 0 : index
    %c0_4 = arith.constant 0 : index
    %4 = vector.load %arg2[%c0_3, %c0_4] : memref<1x32xf32, #tpu.memory_space<vmem>>, vector<1x32xf32>
    %5 = vector.broadcast %4 : vector<1x32xf32> to vector<8x32xf32>
    %6 = arith.addf %3, %5 : vector<8x32xf32>
    %c0_5 = arith.constant 0 : index
    %c0_6 = arith.constant 0 : index
    %7 = vector.load %arg3[%c0_5, %c0_6] : memref<8x32xf32, #tpu.memory_space<vmem>>, vector<8x32xf32>
    %8 = arith.addf %6, %7 : vector<8x32xf32>
    %9 = arith.truncf %8 : vector<8x32xf32> to vector<8x32xbf16>
    %c0_7 = arith.constant 0 : index
    %c0_8 = arith.constant 0 : index
    %10 = vector.load %arg4[%c0_7, %c0_8] : memref<8x32xbf16, #tpu.memory_space<vmem>>, vector<8x32xbf16>
    tpu.vector_store %arg4[%c0_7, %c0_8], %9 {strides = array<i32>} : memref<8x32xbf16, #tpu.memory_space<vmem>>, vector<8x32xbf16>,
    return
  }
}

module attributes {stable_mosaic.version = 11 : i64} {
  func.func @_postln_project_kernel(%arg0: memref<8x32xbf16, #tpu.memory_space<vmem>>, %arg1: memref<1x32xf32, #tpu.memory_space<vmem>>, %arg2: memref<1x32xf32, #tpu.memory_space<vmem>>, %arg3: memref<32x32xbf16, #tpu.memory_space<vmem>>, %arg4: memref<8x32xf32, #tpu.memory_space<vmem>>) attributes {dimension_semantics = [], scalar_prefetch = 0 : i64, scratch_operands = 0 : i64, tpu.core_type = #tpu.core_type<tc>} {
    %c0 = arith.constant 0 : index
    %c0_0 = arith.constant 0 : index
    %0 = vector.load %arg0[%c0, %c0_0] : memref<8x32xbf16, #tpu.memory_space<vmem>>, vector<8x32xbf16>
    %1 = arith.extf %0 : vector<8x32xbf16> to vector<8x32xf32>
    %c0_1 = arith.constant 0 : index
    %c0_2 = arith.constant 0 : index
    %2 = vector.load %arg1[%c0_1, %c0_2] : memref<1x32xf32, #tpu.memory_space<vmem>>, vector<1x32xf32>
    %c0_3 = arith.constant 0 : index
    %c0_4 = arith.constant 0 : index
    %3 = vector.load %arg2[%c0_3, %c0_4] : memref<1x32xf32, #tpu.memory_space<vmem>>, vector<1x32xf32>
    %cst = arith.constant dense<0.000000e+00> : vector<8xf32>
    %4 = vector.multi_reduction <add>, %1, %cst [1] : vector<8x32xf32> to vector<8xf32>
    %5 = vector.shape_cast %4 : vector<8xf32> to vector<8x1xf32>
    %cst_5 = arith.constant 3.200000e+01 : f32
    %6 = vector.broadcast %cst_5 : f32 to vector<8x1xf32>
    %7 = arith.divf %5, %6 : vector<8x1xf32>
    %8 = vector.broadcast %7 : vector<8x1xf32> to vector<8x32xf32>
    %9 = arith.subf %1, %8 : vector<8x32xf32>
    %10 = arith.mulf %9, %9 : vector<8x32xf32>
    %cst_6 = arith.constant dense<0.000000e+00> : vector<8xf32>
    %11 = vector.multi_reduction <add>, %10, %cst_6 [1] : vector<8x32xf32> to vector<8xf32>
    %12 = vector.shape_cast %11 : vector<8xf32> to vector<8x1xf32>
    %cst_7 = arith.constant 3.200000e+01 : f32
    %13 = vector.broadcast %cst_7 : f32 to vector<8x1xf32>
    %14 = arith.divf %12, %13 : vector<8x1xf32>
    %15 = vector.broadcast %7 : vector<8x1xf32> to vector<8x32xf32>
    %16 = arith.subf %1, %15 : vector<8x32xf32>
    %cst_8 = arith.constant 9.99999997E-7 : f32
    %17 = vector.broadcast %cst_8 : f32 to vector<8x1xf32>
    %18 = arith.addf %14, %17 : vector<8x1xf32>
    %19 = math.rsqrt %18 : vector<8x1xf32>
    %20 = vector.broadcast %19 : vector<8x1xf32> to vector<8x32xf32>
    %21 = arith.mulf %16, %20 : vector<8x32xf32>
    %22 = vector.broadcast %2 : vector<1x32xf32> to vector<8x32xf32>
    %23 = arith.mulf %21, %22 : vector<8x32xf32>
    %24 = vector.broadcast %3 : vector<1x32xf32> to vector<8x32xf32>
    %25 = arith.addf %23, %24 : vector<8x32xf32>
    %c0_9 = arith.constant 0 : index
    %c0_10 = arith.constant 0 : index
    %26 = vector.load %arg3[%c0_9, %c0_10] : memref<32x32xbf16, #tpu.memory_space<vmem>>, vector<32x32xbf16>
    %27 = arith.truncf %25 : vector<8x32xf32> to vector<8x32xbf16>
    %cst_11 = arith.constant dense<0.000000e+00> : vector<8x32xf32>
    %28 = tpu.matmul %27, %26, %cst_11 {dimension_numbers = #tpu.dot_dimension_numbers<[1], [0], [0], [1], [0, 0, 1, 1], [], []>} : vector<8x32xbf16>, vector<32x32xbf16>, vector<8x32xf32> -> vector<8x32xf32>
    %cst_12 = arith.constant 0.176776692 : f32
    %29 = vector.broadcast %cst_12 : f32 to vector<8x32xf32>
    %30 = arith.mulf %28, %29 : vector<8x32xf32>
    %c0_13 = arith.constant 0 : index
    %c0_14 = arith.constant 0 : index
    %31 = vector.load %arg4[%c0_13, %c0_14] : memref<8x32xf32, #tpu.memory_space<vmem>>, vector<8x32xf32>
    tpu.vector_store %arg4[%c0_13, %c0_14], %30 {strides = array<i32>} : memref<8x32xf32, #tpu.memory_space<vmem>>, vector<8x32xf32>,
    return
  }
}

module attributes {stable_mosaic.version = 11 : i64} {
  func.func @_vision_layer_kernel(%arg0: memref<8x32xbf16, #tpu.memory_space<vmem>>, %arg1: memref<1x32xf32, #tpu.memory_space<vmem>>, %arg2: memref<1x32xf32, #tpu.memory_space<vmem>>, %arg3: memref<32x96xbf16, #tpu.memory_space<vmem>>, %arg4: memref<1x96xf32, #tpu.memory_space<vmem>>, %arg5: memref<32x32xbf16, #tpu.memory_space<vmem>>, %arg6: memref<1x32xf32, #tpu.memory_space<vmem>>, %arg7: memref<1x32xf32, #tpu.memory_space<vmem>>, %arg8: memref<1x32xf32, #tpu.memory_space<vmem>>, %arg9: memref<32x64xbf16, #tpu.memory_space<vmem>>, %arg10: memref<1x64xf32, #tpu.memory_space<vmem>>, %arg11: memref<64x32xbf16, #tpu.memory_space<vmem>>, %arg12: memref<1x32xf32, #tpu.memory_space<vmem>>, %arg13: memref<8x32xbf16, #tpu.memory_space<vmem>>) attributes {dimension_semantics = [], scalar_prefetch = 0 : i64, scratch_operands = 0 : i64, tpu.core_type = #tpu.core_type<tc>} {
    %c0 = arith.constant 0 : index
    %c0_0 = arith.constant 0 : index
    %0 = vector.load %arg0[%c0, %c0_0] : memref<8x32xbf16, #tpu.memory_space<vmem>>, vector<8x32xbf16>
    %1 = arith.extf %0 : vector<8x32xbf16> to vector<8x32xf32>
    %c0_1 = arith.constant 0 : index
    %c0_2 = arith.constant 0 : index
    %2 = vector.load %arg1[%c0_1, %c0_2] : memref<1x32xf32, #tpu.memory_space<vmem>>, vector<1x32xf32>
    %c0_3 = arith.constant 0 : index
    %c0_4 = arith.constant 0 : index
    %3 = vector.load %arg2[%c0_3, %c0_4] : memref<1x32xf32, #tpu.memory_space<vmem>>, vector<1x32xf32>
    %cst = arith.constant dense<0.000000e+00> : vector<8xf32>
    %4 = vector.multi_reduction <add>, %1, %cst [1] : vector<8x32xf32> to vector<8xf32>
    %5 = vector.shape_cast %4 : vector<8xf32> to vector<8x1xf32>
    %cst_5 = arith.constant 3.200000e+01 : f32
    %6 = vector.broadcast %cst_5 : f32 to vector<8x1xf32>
    %7 = arith.divf %5, %6 : vector<8x1xf32>
    %8 = vector.broadcast %7 : vector<8x1xf32> to vector<8x32xf32>
    %9 = arith.subf %1, %8 : vector<8x32xf32>
    %10 = arith.mulf %9, %9 : vector<8x32xf32>
    %cst_6 = arith.constant dense<0.000000e+00> : vector<8xf32>
    %11 = vector.multi_reduction <add>, %10, %cst_6 [1] : vector<8x32xf32> to vector<8xf32>
    %12 = vector.shape_cast %11 : vector<8xf32> to vector<8x1xf32>
    %cst_7 = arith.constant 3.200000e+01 : f32
    %13 = vector.broadcast %cst_7 : f32 to vector<8x1xf32>
    %14 = arith.divf %12, %13 : vector<8x1xf32>
    %15 = vector.broadcast %7 : vector<8x1xf32> to vector<8x32xf32>
    %16 = arith.subf %1, %15 : vector<8x32xf32>
    %cst_8 = arith.constant 9.99999997E-7 : f32
    %17 = vector.broadcast %cst_8 : f32 to vector<8x1xf32>
    %18 = arith.addf %14, %17 : vector<8x1xf32>
    %19 = math.rsqrt %18 : vector<8x1xf32>
    %20 = vector.broadcast %19 : vector<8x1xf32> to vector<8x32xf32>
    %21 = arith.mulf %16, %20 : vector<8x32xf32>
    %22 = vector.broadcast %2 : vector<1x32xf32> to vector<8x32xf32>
    %23 = arith.mulf %21, %22 : vector<8x32xf32>
    %24 = vector.broadcast %3 : vector<1x32xf32> to vector<8x32xf32>
    %25 = arith.addf %23, %24 : vector<8x32xf32>
    %c0_9 = arith.constant 0 : index
    %c0_10 = arith.constant 0 : index
    %26 = vector.load %arg3[%c0_9, %c0_10] : memref<32x96xbf16, #tpu.memory_space<vmem>>, vector<32x96xbf16>
    %27 = arith.truncf %25 : vector<8x32xf32> to vector<8x32xbf16>
    %cst_11 = arith.constant dense<0.000000e+00> : vector<8x96xf32>
    %28 = tpu.matmul %27, %26, %cst_11 {dimension_numbers = #tpu.dot_dimension_numbers<[1], [0], [0], [1], [0, 0, 1, 1], [], []>} : vector<8x32xbf16>, vector<32x96xbf16>, vector<8x96xf32> -> vector<8x96xf32>
    %c0_12 = arith.constant 0 : index
    %c0_13 = arith.constant 0 : index
    %29 = vector.load %arg4[%c0_12, %c0_13] : memref<1x96xf32, #tpu.memory_space<vmem>>, vector<1x96xf32>
    %30 = vector.broadcast %29 : vector<1x96xf32> to vector<8x96xf32>
    %31 = arith.addf %28, %30 : vector<8x96xf32>
    %32 = vector.extract_strided_slice %31 {offsets = [0, 0], sizes = [8, 32], strides = [1, 1]} : vector<8x96xf32> to vector<8x32xf32>
    %33 = vector.extract_strided_slice %31 {offsets = [0, 32], sizes = [8, 32], strides = [1, 1]} : vector<8x96xf32> to vector<8x32xf32>
    %34 = vector.extract_strided_slice %31 {offsets = [0, 64], sizes = [8, 32], strides = [1, 1]} : vector<8x96xf32> to vector<8x32xf32>
    %35 = vector.extract_strided_slice %32 {offsets = [0, 0], sizes = [8, 8], strides = [1, 1]} : vector<8x32xf32> to vector<8x8xf32>
    %36 = vector.shape_cast %35 : vector<8x8xf32> to vector<1x2x4x8xf32>
    %37 = vector.extract_strided_slice %32 {offsets = [0, 8], sizes = [8, 8], strides = [1, 1]} : vector<8x32xf32> to vector<8x8xf32>
    %38 = vector.shape_cast %37 : vector<8x8xf32> to vector<1x2x4x8xf32>
    %39 = vector.extract_strided_slice %32 {offsets = [0, 16], sizes = [8, 8], strides = [1, 1]} : vector<8x32xf32> to vector<8x8xf32>
    %40 = vector.shape_cast %39 : vector<8x8xf32> to vector<1x2x4x8xf32>
    %41 = vector.extract_strided_slice %32 {offsets = [0, 24], sizes = [8, 8], strides = [1, 1]} : vector<8x32xf32> to vector<8x8xf32>
    %42 = vector.shape_cast %41 : vector<8x8xf32> to vector<1x2x4x8xf32>
    %43 = tpu.concatenate %36, %38, %40, %42 in 0 : vector<1x2x4x8xf32>, vector<1x2x4x8xf32>, vector<1x2x4x8xf32>, vector<1x2x4x8xf32> -> vector<4x2x4x8xf32>
    %44 = vector.shape_cast %43 : vector<4x2x4x8xf32> to vector<8x4x8xf32>
    %45 = arith.truncf %44 : vector<8x4x8xf32> to vector<8x4x8xbf16>
    %46 = vector.extract_strided_slice %33 {offsets = [0, 0], sizes = [8, 8], strides = [1, 1]} : vector<8x32xf32> to vector<8x8xf32>
    %47 = vector.shape_cast %46 : vector<8x8xf32> to vector<1x2x4x8xf32>
    %48 = vector.extract_strided_slice %33 {offsets = [0, 8], sizes = [8, 8], strides = [1, 1]} : vector<8x32xf32> to vector<8x8xf32>
    %49 = vector.shape_cast %48 : vector<8x8xf32> to vector<1x2x4x8xf32>
    %50 = vector.extract_strided_slice %33 {offsets = [0, 16], sizes = [8, 8], strides = [1, 1]} : vector<8x32xf32> to vector<8x8xf32>
    %51 = vector.shape_cast %50 : vector<8x8xf32> to vector<1x2x4x8xf32>
    %52 = vector.extract_strided_slice %33 {offsets = [0, 24], sizes = [8, 8], strides = [1, 1]} : vector<8x32xf32> to vector<8x8xf32>
    %53 = vector.shape_cast %52 : vector<8x8xf32> to vector<1x2x4x8xf32>
    %54 = tpu.concatenate %47, %49, %51, %53 in 0 : vector<1x2x4x8xf32>, vector<1x2x4x8xf32>, vector<1x2x4x8xf32>, vector<1x2x4x8xf32> -> vector<4x2x4x8xf32>
    %55 = vector.shape_cast %54 : vector<4x2x4x8xf32> to vector<8x4x8xf32>
    %56 = arith.truncf %55 : vector<8x4x8xf32> to vector<8x4x8xbf16>
    %57 = vector.extract_strided_slice %34 {offsets = [0, 0], sizes = [8, 8], strides = [1, 1]} : vector<8x32xf32> to vector<8x8xf32>
    %58 = vector.shape_cast %57 : vector<8x8xf32> to vector<1x2x4x8xf32>
    %59 = vector.extract_strided_slice %34 {offsets = [0, 8], sizes = [8, 8], strides = [1, 1]} : vector<8x32xf32> to vector<8x8xf32>
    %60 = vector.shape_cast %59 : vector<8x8xf32> to vector<1x2x4x8xf32>
    %61 = vector.extract_strided_slice %34 {offsets = [0, 16], sizes = [8, 8], strides = [1, 1]} : vector<8x32xf32> to vector<8x8xf32>
    %62 = vector.shape_cast %61 : vector<8x8xf32> to vector<1x2x4x8xf32>
    %63 = vector.extract_strided_slice %34 {offsets = [0, 24], sizes = [8, 8], strides = [1, 1]} : vector<8x32xf32> to vector<8x8xf32>
    %64 = vector.shape_cast %63 : vector<8x8xf32> to vector<1x2x4x8xf32>
    %65 = tpu.concatenate %58, %60, %62, %64 in 0 : vector<1x2x4x8xf32>, vector<1x2x4x8xf32>, vector<1x2x4x8xf32>, vector<1x2x4x8xf32> -> vector<4x2x4x8xf32>
    %66 = vector.shape_cast %65 : vector<4x2x4x8xf32> to vector<8x4x8xf32>
    %67 = arith.truncf %66 : vector<8x4x8xf32> to vector<8x4x8xbf16>
    "tpu.trace_start"() <{level = 10 : i32, message = "nqd,nkd->nqk"}> : () -> ()
    %cst_14 = arith.constant dense<0.000000e+00> : vector<8x4x4xf32>
    %68 = tpu.matmul %45, %56, %cst_14 {dimension_numbers = #tpu.dot_dimension_numbers<[2], [2], [1], [1], [0, 0, 0, 1, 1, 1], [0], [0]>} : vector<8x4x8xbf16>, vector<8x4x8xbf16>, vector<8x4x4xf32> -> vector<8x4x4xf32>
    "tpu.trace_stop"() : () -> ()
    %cst_15 = arith.constant 0.353553385 : f32
    %69 = vector.broadcast %cst_15 : f32 to vector<8x4x4xf32>
    %70 = arith.mulf %68, %69 : vector<8x4x4xf32>
    %cst_16 = arith.constant dense<0xFF800000> : vector<8x4xf32>
    %71 = vector.multi_reduction <maximumf>, %70, %cst_16 [2] : vector<8x4x4xf32> to vector<8x4xf32>
    %72 = vector.shape_cast %71 : vector<8x4xf32> to vector<8x4x1xf32>
    %73 = vector.broadcast %72 : vector<8x4x1xf32> to vector<8x4x4xf32>
    %74 = arith.subf %70, %73 : vector<8x4x4xf32>
    %75 = math.exp %74 : vector<8x4x4xf32>
    %cst_17 = arith.constant dense<0.000000e+00> : vector<8x4xf32>
    %76 = vector.multi_reduction <add>, %75, %cst_17 [2] : vector<8x4x4xf32> to vector<8x4xf32>
    %77 = vector.shape_cast %76 : vector<8x4xf32> to vector<8x4x1xf32>
    %78 = tpu.reciprocal %77 {approx = true} : vector<8x4x1xf32> -> vector<8x4x1xf32>
    %79 = vector.broadcast %78 : vector<8x4x1xf32> to vector<8x4x4xf32>
    %80 = arith.mulf %75, %79 : vector<8x4x4xf32>
    %81 = arith.truncf %80 : vector<8x4x4xf32> to vector<8x4x4xbf16>
    "tpu.trace_start"() <{level = 10 : i32, message = "nqk,nkd->nqd"}> : () -> ()
    %cst_18 = arith.constant dense<0.000000e+00> : vector<8x4x8xf32>
    %82 = tpu.matmul %81, %67, %cst_18 {dimension_numbers = #tpu.dot_dimension_numbers<[2], [1], [1], [2], [0, 0, 0, 1, 1, 2], [0], [0]>} : vector<8x4x4xbf16>, vector<8x4x8xbf16>, vector<8x4x8xf32> -> vector<8x4x8xf32>
    "tpu.trace_stop"() : () -> ()
    %83 = vector.shape_cast %82 : vector<8x4x8xf32> to vector<4x8x8xf32>
    %84 = vector.extract_strided_slice %83 {offsets = [0, 0, 0], sizes = [1, 8, 8], strides = [1, 1, 1]} : vector<4x8x8xf32> to vector<1x8x8xf32>
    %85 = vector.shape_cast %84 : vector<1x8x8xf32> to vector<8x8xf32>
    %86 = vector.extract_strided_slice %83 {offsets = [1, 0, 0], sizes = [1, 8, 8], strides = [1, 1, 1]} : vector<4x8x8xf32> to vector<1x8x8xf32>
    %87 = vector.shape_cast %86 : vector<1x8x8xf32> to vector<8x8xf32>
    %88 = vector.extract_strided_slice %83 {offsets = [2, 0, 0], sizes = [1, 8, 8], strides = [1, 1, 1]} : vector<4x8x8xf32> to vector<1x8x8xf32>
    %89 = vector.shape_cast %88 : vector<1x8x8xf32> to vector<8x8xf32>
    %90 = vector.extract_strided_slice %83 {offsets = [3, 0, 0], sizes = [1, 8, 8], strides = [1, 1, 1]} : vector<4x8x8xf32> to vector<1x8x8xf32>
    %91 = vector.shape_cast %90 : vector<1x8x8xf32> to vector<8x8xf32>
    %92 = tpu.concatenate %85, %87, %89, %91 in 1 : vector<8x8xf32>, vector<8x8xf32>, vector<8x8xf32>, vector<8x8xf32> -> vector<8x32xf32>
    %93 = arith.truncf %92 : vector<8x32xf32> to vector<8x32xbf16>
    %c0_19 = arith.constant 0 : index
    %c0_20 = arith.constant 0 : index
    %94 = vector.load %arg5[%c0_19, %c0_20] : memref<32x32xbf16, #tpu.memory_space<vmem>>, vector<32x32xbf16>
    %cst_21 = arith.constant dense<0.000000e+00> : vector<8x32xf32>
    %95 = tpu.matmul %93, %94, %cst_21 {dimension_numbers = #tpu.dot_dimension_numbers<[1], [0], [0], [1], [0, 0, 1, 1], [], []>} : vector<8x32xbf16>, vector<32x32xbf16>, vector<8x32xf32> -> vector<8x32xf32>
    %96 = arith.addf %1, %95 : vector<8x32xf32>
    %c0_22 = arith.constant 0 : index
    %c0_23 = arith.constant 0 : index
    %97 = vector.load %arg6[%c0_22, %c0_23] : memref<1x32xf32, #tpu.memory_space<vmem>>, vector<1x32xf32>
    %98 = vector.broadcast %97 : vector<1x32xf32> to vector<8x32xf32>
    %99 = arith.addf %96, %98 : vector<8x32xf32>
    %c0_24 = arith.constant 0 : index
    %c0_25 = arith.constant 0 : index
    %100 = vector.load %arg7[%c0_24, %c0_25] : memref<1x32xf32, #tpu.memory_space<vmem>>, vector<1x32xf32>
    %c0_26 = arith.constant 0 : index
    %c0_27 = arith.constant 0 : index
    %101 = vector.load %arg8[%c0_26, %c0_27] : memref<1x32xf32, #tpu.memory_space<vmem>>, vector<1x32xf32>
    %cst_28 = arith.constant dense<0.000000e+00> : vector<8xf32>
    %102 = vector.multi_reduction <add>, %99, %cst_28 [1] : vector<8x32xf32> to vector<8xf32>
    %103 = vector.shape_cast %102 : vector<8xf32> to vector<8x1xf32>
    %cst_29 = arith.constant 3.200000e+01 : f32
    %104 = vector.broadcast %cst_29 : f32 to vector<8x1xf32>
    %105 = arith.divf %103, %104 : vector<8x1xf32>
    %106 = vector.broadcast %105 : vector<8x1xf32> to vector<8x32xf32>
    %107 = arith.subf %99, %106 : vector<8x32xf32>
    %108 = arith.mulf %107, %107 : vector<8x32xf32>
    %cst_30 = arith.constant dense<0.000000e+00> : vector<8xf32>
    %109 = vector.multi_reduction <add>, %108, %cst_30 [1] : vector<8x32xf32> to vector<8xf32>
    %110 = vector.shape_cast %109 : vector<8xf32> to vector<8x1xf32>
    %cst_31 = arith.constant 3.200000e+01 : f32
    %111 = vector.broadcast %cst_31 : f32 to vector<8x1xf32>
    %112 = arith.divf %110, %111 : vector<8x1xf32>
    %113 = vector.broadcast %105 : vector<8x1xf32> to vector<8x32xf32>
    %114 = arith.subf %99, %113 : vector<8x32xf32>
    %cst_32 = arith.constant 9.99999997E-7 : f32
    %115 = vector.broadcast %cst_32 : f32 to vector<8x1xf32>
    %116 = arith.addf %112, %115 : vector<8x1xf32>
    %117 = math.rsqrt %116 : vector<8x1xf32>
    %118 = vector.broadcast %117 : vector<8x1xf32> to vector<8x32xf32>
    %119 = arith.mulf %114, %118 : vector<8x32xf32>
    %120 = vector.broadcast %100 : vector<1x32xf32> to vector<8x32xf32>
    %121 = arith.mulf %119, %120 : vector<8x32xf32>
    %122 = vector.broadcast %101 : vector<1x32xf32> to vector<8x32xf32>
    %123 = arith.addf %121, %122 : vector<8x32xf32>
    %c0_33 = arith.constant 0 : index
    %c0_34 = arith.constant 0 : index
    %124 = vector.load %arg9[%c0_33, %c0_34] : memref<32x64xbf16, #tpu.memory_space<vmem>>, vector<32x64xbf16>
    %125 = arith.truncf %123 : vector<8x32xf32> to vector<8x32xbf16>
    %cst_35 = arith.constant dense<0.000000e+00> : vector<8x64xf32>
    %126 = tpu.matmul %125, %124, %cst_35 {dimension_numbers = #tpu.dot_dimension_numbers<[1], [0], [0], [1], [0, 0, 1, 1], [], []>} : vector<8x32xbf16>, vector<32x64xbf16>, vector<8x64xf32> -> vector<8x64xf32>
    %c0_36 = arith.constant 0 : index
    %c0_37 = arith.constant 0 : index
    %127 = vector.load %arg10[%c0_36, %c0_37] : memref<1x64xf32, #tpu.memory_space<vmem>>, vector<1x64xf32>
    %128 = vector.broadcast %127 : vector<1x64xf32> to vector<8x64xf32>
    %129 = arith.addf %126, %128 : vector<8x64xf32>
    %130 = arith.mulf %129, %129 : vector<8x64xf32>
    %131 = arith.mulf %129, %130 : vector<8x64xf32>
    %cst_38 = arith.constant 4.471500e-02 : f32
    %132 = vector.broadcast %cst_38 : f32 to vector<8x64xf32>
    %133 = arith.mulf %132, %131 : vector<8x64xf32>
    %134 = arith.addf %129, %133 : vector<8x64xf32>
    %cst_39 = arith.constant 0.797884583 : f32
    %135 = vector.broadcast %cst_39 : f32 to vector<8x64xf32>
    %136 = arith.mulf %135, %134 : vector<8x64xf32>
    %137 = math.tanh %136 : vector<8x64xf32>
    %cst_40 = arith.constant 1.000000e+00 : f32
    %138 = vector.broadcast %cst_40 : f32 to vector<8x64xf32>
    %139 = arith.addf %138, %137 : vector<8x64xf32>
    %cst_41 = arith.constant 5.000000e-01 : f32
    %140 = vector.broadcast %cst_41 : f32 to vector<8x64xf32>
    %141 = arith.mulf %140, %139 : vector<8x64xf32>
    %142 = arith.mulf %129, %141 : vector<8x64xf32>
    %c0_42 = arith.constant 0 : index
    %c0_43 = arith.constant 0 : index
    %143 = vector.load %arg11[%c0_42, %c0_43] : memref<64x32xbf16, #tpu.memory_space<vmem>>, vector<64x32xbf16>
    %144 = arith.truncf %142 : vector<8x64xf32> to vector<8x64xbf16>
    %cst_44 = arith.constant dense<0.000000e+00> : vector<8x32xf32>
    %145 = tpu.matmul %144, %143, %cst_44 {dimension_numbers = #tpu.dot_dimension_numbers<[1], [0], [0], [1], [0, 0, 1, 1], [], []>} : vector<8x64xbf16>, vector<64x32xbf16>, vector<8x32xf32> -> vector<8x32xf32>
    %146 = arith.addf %99, %145 : vector<8x32xf32>
    %c0_45 = arith.constant 0 : index
    %c0_46 = arith.constant 0 : index
    %147 = vector.load %arg12[%c0_45, %c0_46] : memref<1x32xf32, #tpu.memory_space<vmem>>, vector<1x32xf32>
    %148 = vector.broadcast %147 : vector<1x32xf32> to vector<8x32xf32>
    %149 = arith.addf %146, %148 : vector<8x32xf32>
    %150 = arith.truncf %149 : vector<8x32xf32> to vector<8x32xbf16>
    %c0_47 = arith.constant 0 : index
    %c0_48 = arith.constant 0 : index
    %151 = vector.load %arg13[%c0_47, %c0_48] : memref<8x32xbf16, #tpu.memory_space<vmem>>, vector<8x32xbf16>
    tpu.vector_store %arg13[%c0_47, %c0_48], %150 {strides = array<i32>} : memref<8x32xbf16, #tpu.memory_space<vmem>>, vector<8x32xbf16>,
    return
  }
}

module attributes {stable_mosaic.version = 11 : i64} {
  func.func @_final_norm_lmhead_kernel(%arg0: i32, %arg1: memref<8x32xbf16, #tpu.memory_space<vmem>>, %arg2: memref<1x32xf32, #tpu.memory_space<vmem>>, %arg3: memref<32x128xbf16, #tpu.memory_space<vmem>>, %arg4: memref<8x128xf32, #tpu.memory_space<vmem>>) attributes {dimension_semantics = [#tpu.dimension_semantics<parallel>], iteration_bounds = array<i64: 2>, scalar_prefetch = 0 : i64, scratch_operands = 0 : i64, tpu.core_type = #tpu.core_type<tc>, window_params = [{transform_indices = @transform_0, window_bounds = array<i64: 8, 32>}, {pipeline_mode = #tpu.pipeline_mode<synchronous>, transform_indices = @transform_1, window_bounds = array<i64: 1, 32>}, {pipeline_mode = #tpu.pipeline_mode<synchronous>, transform_indices = @transform_2, window_bounds = array<i64: 32, 128>}, {transform_indices = @transform_3, window_bounds = array<i64: 8, 128>}]} {
    %c0 = arith.constant 0 : index
    %c0_0 = arith.constant 0 : index
    %0 = vector.load %arg1[%c0, %c0_0] : memref<8x32xbf16, #tpu.memory_space<vmem>>, vector<8x32xbf16>
    %1 = arith.extf %0 : vector<8x32xbf16> to vector<8x32xf32>
    %c0_1 = arith.constant 0 : index
    %c0_2 = arith.constant 0 : index
    %2 = vector.load %arg2[%c0_1, %c0_2] : memref<1x32xf32, #tpu.memory_space<vmem>>, vector<1x32xf32>
    %3 = arith.mulf %1, %1 : vector<8x32xf32>
    %cst = arith.constant dense<0.000000e+00> : vector<8xf32>
    %4 = vector.multi_reduction <add>, %3, %cst [1] : vector<8x32xf32> to vector<8xf32>
    %5 = vector.shape_cast %4 : vector<8xf32> to vector<8x1xf32>
    %cst_3 = arith.constant 3.200000e+01 : f32
    %6 = vector.broadcast %cst_3 : f32 to vector<8x1xf32>
    %7 = arith.divf %5, %6 : vector<8x1xf32>
    %cst_4 = arith.constant 9.99999997E-7 : f32
    %8 = vector.broadcast %cst_4 : f32 to vector<8x1xf32>
    %9 = arith.addf %7, %8 : vector<8x1xf32>
    %10 = math.rsqrt %9 : vector<8x1xf32>
    %11 = vector.broadcast %10 : vector<8x1xf32> to vector<8x32xf32>
    %12 = arith.mulf %1, %11 : vector<8x32xf32>
    %cst_5 = arith.constant 1.000000e+00 : f32
    %13 = vector.broadcast %cst_5 : f32 to vector<1x32xf32>
    %14 = arith.addf %13, %2 : vector<1x32xf32>
    %15 = vector.broadcast %14 : vector<1x32xf32> to vector<8x32xf32>
    %16 = arith.mulf %12, %15 : vector<8x32xf32>
    %c0_6 = arith.constant 0 : index
    %c0_7 = arith.constant 0 : index
    %17 = vector.load %arg3[%c0_6, %c0_7] : memref<32x128xbf16, #tpu.memory_space<vmem>>, vector<32x128xbf16>
    %18 = arith.truncf %16 : vector<8x32xf32> to vector<8x32xbf16>
    %cst_8 = arith.constant dense<0.000000e+00> : vector<8x128xf32>
    %19 = tpu.matmul %18, %17, %cst_8 {dimension_numbers = #tpu.dot_dimension_numbers<[1], [0], [0], [1], [0, 0, 1, 1], [], []>} : vector<8x32xbf16>, vector<32x128xbf16>, vector<8x128xf32> -> vector<8x128xf32>
    %c0_9 = arith.constant 0 : index
    %c0_10 = arith.constant 0 : index
    %20 = vector.load %arg4[%c0_9, %c0_10] : memref<8x128xf32, #tpu.memory_space<vmem>>, vector<8x128xf32>
    tpu.vector_store %arg4[%c0_9, %c0_10], %19 {strides = array<i32>} : memref<8x128xf32, #tpu.memory_space<vmem>>, vector<8x128xf32>,
    return
  }
  func.func @transform_0(%arg0: i32) -> (i32, i32) {
    %c0_i32 = arith.constant 0 : i32
    %c0_i32_0 = arith.constant 0 : i32
    return %arg0, %c0_i32 : i32, i32
  }
  func.func @transform_1(%arg0: i32) -> (i32, i32) {
    %c0_i32 = arith.constant 0 : i32
    %c0_i32_0 = arith.constant 0 : i32
    %c0_i32_1 = arith.constant 0 : i32
    return %c0_i32, %c0_i32_0 : i32, i32
  }
  func.func @transform_2(%arg0: i32) -> (i32, i32) {
    %c0_i32 = arith.constant 0 : i32
    %c0_i32_0 = arith.constant 0 : i32
    %c0_i32_1 = arith.constant 0 : i32
    return %c0_i32, %c0_i32_0 : i32, i32
  }
  func.func @transform_3(%arg0: i32) -> (i32, i32) {
    %c0_i32 = arith.constant 0 : i32
    %c0_i32_0 = arith.constant 0 : i32
    return %arg0, %c0_i32 : i32, i32
  }
}

module attributes {stable_mosaic.version = 11 : i64} {
  func.func @_text_layer_kernel(%arg0: memref<16x32xbf16, #tpu.memory_space<vmem>>, %arg1: memref<16x32xf32, #tpu.memory_space<vmem>>, %arg2: memref<16x32xf32, #tpu.memory_space<vmem>>, %arg3: memref<32x32xbf16, #tpu.memory_space<vmem>>, %arg4: memref<1x32xf32, #tpu.memory_space<vmem>>, %arg5: memref<32x96xbf16, #tpu.memory_space<vmem>>, %arg6: memref<32x32xbf16, #tpu.memory_space<vmem>>, %arg7: memref<1x32xf32, #tpu.memory_space<vmem>>, %arg8: memref<32x128xbf16, #tpu.memory_space<vmem>>, %arg9: memref<64x32xbf16, #tpu.memory_space<vmem>>, %arg10: memref<16x32xbf16, #tpu.memory_space<vmem>>) attributes {dimension_semantics = [], scalar_prefetch = 0 : i64, scratch_operands = 0 : i64, tpu.core_type = #tpu.core_type<tc>} {
    %c0 = arith.constant 0 : index
    %c0_0 = arith.constant 0 : index
    %0 = vector.load %arg0[%c0, %c0_0] : memref<16x32xbf16, #tpu.memory_space<vmem>>, vector<16x32xbf16>
    %1 = arith.extf %0 : vector<16x32xbf16> to vector<16x32xf32>
    %c0_1 = arith.constant 0 : index
    %c0_2 = arith.constant 0 : index
    %2 = vector.load %arg4[%c0_1, %c0_2] : memref<1x32xf32, #tpu.memory_space<vmem>>, vector<1x32xf32>
    %3 = arith.mulf %1, %1 : vector<16x32xf32>
    %cst = arith.constant dense<0.000000e+00> : vector<16xf32>
    %4 = vector.multi_reduction <add>, %3, %cst [1] : vector<16x32xf32> to vector<16xf32>
    %5 = vector.shape_cast %4 : vector<16xf32> to vector<16x1xf32>
    %cst_3 = arith.constant 3.200000e+01 : f32
    %6 = vector.broadcast %cst_3 : f32 to vector<16x1xf32>
    %7 = arith.divf %5, %6 : vector<16x1xf32>
    %cst_4 = arith.constant 9.99999997E-7 : f32
    %8 = vector.broadcast %cst_4 : f32 to vector<16x1xf32>
    %9 = arith.addf %7, %8 : vector<16x1xf32>
    %10 = math.rsqrt %9 : vector<16x1xf32>
    %11 = vector.broadcast %10 : vector<16x1xf32> to vector<16x32xf32>
    %12 = arith.mulf %1, %11 : vector<16x32xf32>
    %cst_5 = arith.constant 1.000000e+00 : f32
    %13 = vector.broadcast %cst_5 : f32 to vector<1x32xf32>
    %14 = arith.addf %13, %2 : vector<1x32xf32>
    %15 = vector.broadcast %14 : vector<1x32xf32> to vector<16x32xf32>
    %16 = arith.mulf %12, %15 : vector<16x32xf32>
    %c0_6 = arith.constant 0 : index
    %c0_7 = arith.constant 0 : index
    %17 = vector.load %arg5[%c0_6, %c0_7] : memref<32x96xbf16, #tpu.memory_space<vmem>>, vector<32x96xbf16>
    %18 = arith.truncf %16 : vector<16x32xf32> to vector<16x32xbf16>
    %cst_8 = arith.constant dense<0.000000e+00> : vector<16x96xf32>
    %19 = tpu.matmul %18, %17, %cst_8 {dimension_numbers = #tpu.dot_dimension_numbers<[1], [0], [0], [1], [0, 0, 1, 1], [], []>} : vector<16x32xbf16>, vector<32x96xbf16>, vector<16x96xf32> -> vector<16x96xf32>
    %20 = vector.extract_strided_slice %19 {offsets = [0, 0], sizes = [16, 32], strides = [1, 1]} : vector<16x96xf32> to vector<16x32xf32>
    %21 = vector.extract_strided_slice %19 {offsets = [0, 32], sizes = [16, 32], strides = [1, 1]} : vector<16x96xf32> to vector<16x32xf32>
    %22 = vector.extract_strided_slice %19 {offsets = [0, 64], sizes = [16, 32], strides = [1, 1]} : vector<16x96xf32> to vector<16x32xf32>
    %c0_9 = arith.constant 0 : index
    %c0_10 = arith.constant 0 : index
    %23 = vector.load %arg1[%c0_9, %c0_10] : memref<16x32xf32, #tpu.memory_space<vmem>>, vector<16x32xf32>
    %c0_11 = arith.constant 0 : index
    %c0_12 = arith.constant 0 : index
    %24 = vector.load %arg2[%c0_11, %c0_12] : memref<16x32xf32, #tpu.memory_space<vmem>>, vector<16x32xf32>
    %c0_13 = arith.constant 0 : index
    %c0_14 = arith.constant 0 : index
    %25 = vector.load %arg3[%c0_13, %c0_14] : memref<32x32xbf16, #tpu.memory_space<vmem>>, vector<32x32xbf16>
    %26 = arith.mulf %20, %23 : vector<16x32xf32>
    %27 = arith.truncf %20 : vector<16x32xf32> to vector<16x32xbf16>
    %cst_15 = arith.constant dense<0.000000e+00> : vector<16x32xf32>
    %28 = tpu.matmul %27, %25, %cst_15 {dimension_numbers = #tpu.dot_dimension_numbers<[1], [0], [0], [1], [0, 0, 1, 1], [], []>} : vector<16x32xbf16>, vector<32x32xbf16>, vector<16x32xf32> -> vector<16x32xf32>
    %29 = arith.mulf %28, %24 : vector<16x32xf32>
    %30 = arith.addf %26, %29 : vector<16x32xf32>
    %31 = arith.mulf %21, %23 : vector<16x32xf32>
    %32 = arith.truncf %21 : vector<16x32xf32> to vector<16x32xbf16>
    %cst_16 = arith.constant dense<0.000000e+00> : vector<16x32xf32>
    %33 = tpu.matmul %32, %25, %cst_16 {dimension_numbers = #tpu.dot_dimension_numbers<[1], [0], [0], [1], [0, 0, 1, 1], [], []>} : vector<16x32xbf16>, vector<32x32xbf16>, vector<16x32xf32> -> vector<16x32xf32>
    %34 = arith.mulf %33, %24 : vector<16x32xf32>
    %35 = arith.addf %31, %34 : vector<16x32xf32>
    %36 = vector.extract_strided_slice %30 {offsets = [0, 0], sizes = [16, 8], strides = [1, 1]} : vector<16x32xf32> to vector<16x8xf32>
    %37 = vector.shape_cast %36 : vector<16x8xf32> to vector<1x2x8x8xf32>
    %38 = vector.extract_strided_slice %30 {offsets = [0, 8], sizes = [16, 8], strides = [1, 1]} : vector<16x32xf32> to vector<16x8xf32>
    %39 = vector.shape_cast %38 : vector<16x8xf32> to vector<1x2x8x8xf32>
    %40 = vector.extract_strided_slice %30 {offsets = [0, 16], sizes = [16, 8], strides = [1, 1]} : vector<16x32xf32> to vector<16x8xf32>
    %41 = vector.shape_cast %40 : vector<16x8xf32> to vector<1x2x8x8xf32>
    %42 = vector.extract_strided_slice %30 {offsets = [0, 24], sizes = [16, 8], strides = [1, 1]} : vector<16x32xf32> to vector<16x8xf32>
    %43 = vector.shape_cast %42 : vector<16x8xf32> to vector<1x2x8x8xf32>
    %44 = tpu.concatenate %37, %39, %41, %43 in 0 : vector<1x2x8x8xf32>, vector<1x2x8x8xf32>, vector<1x2x8x8xf32>, vector<1x2x8x8xf32> -> vector<4x2x8x8xf32>
    %45 = vector.shape_cast %44 : vector<4x2x8x8xf32> to vector<8x8x8xf32>
    %46 = arith.truncf %45 : vector<8x8x8xf32> to vector<8x8x8xbf16>
    %47 = vector.extract_strided_slice %35 {offsets = [0, 0], sizes = [16, 8], strides = [1, 1]} : vector<16x32xf32> to vector<16x8xf32>
    %48 = vector.shape_cast %47 : vector<16x8xf32> to vector<1x2x8x8xf32>
    %49 = vector.extract_strided_slice %35 {offsets = [0, 8], sizes = [16, 8], strides = [1, 1]} : vector<16x32xf32> to vector<16x8xf32>
    %50 = vector.shape_cast %49 : vector<16x8xf32> to vector<1x2x8x8xf32>
    %51 = vector.extract_strided_slice %35 {offsets = [0, 16], sizes = [16, 8], strides = [1, 1]} : vector<16x32xf32> to vector<16x8xf32>
    %52 = vector.shape_cast %51 : vector<16x8xf32> to vector<1x2x8x8xf32>
    %53 = vector.extract_strided_slice %35 {offsets = [0, 24], sizes = [16, 8], strides = [1, 1]} : vector<16x32xf32> to vector<16x8xf32>
    %54 = vector.shape_cast %53 : vector<16x8xf32> to vector<1x2x8x8xf32>
    %55 = tpu.concatenate %48, %50, %52, %54 in 0 : vector<1x2x8x8xf32>, vector<1x2x8x8xf32>, vector<1x2x8x8xf32>, vector<1x2x8x8xf32> -> vector<4x2x8x8xf32>
    %56 = vector.shape_cast %55 : vector<4x2x8x8xf32> to vector<8x8x8xf32>
    %57 = arith.truncf %56 : vector<8x8x8xf32> to vector<8x8x8xbf16>
    %58 = vector.extract_strided_slice %22 {offsets = [0, 0], sizes = [16, 8], strides = [1, 1]} : vector<16x32xf32> to vector<16x8xf32>
    %59 = vector.shape_cast %58 : vector<16x8xf32> to vector<1x2x8x8xf32>
    %60 = vector.extract_strided_slice %22 {offsets = [0, 8], sizes = [16, 8], strides = [1, 1]} : vector<16x32xf32> to vector<16x8xf32>
    %61 = vector.shape_cast %60 : vector<16x8xf32> to vector<1x2x8x8xf32>
    %62 = vector.extract_strided_slice %22 {offsets = [0, 16], sizes = [16, 8], strides = [1, 1]} : vector<16x32xf32> to vector<16x8xf32>
    %63 = vector.shape_cast %62 : vector<16x8xf32> to vector<1x2x8x8xf32>
    %64 = vector.extract_strided_slice %22 {offsets = [0, 24], sizes = [16, 8], strides = [1, 1]} : vector<16x32xf32> to vector<16x8xf32>
    %65 = vector.shape_cast %64 : vector<16x8xf32> to vector<1x2x8x8xf32>
    %66 = tpu.concatenate %59, %61, %63, %65 in 0 : vector<1x2x8x8xf32>, vector<1x2x8x8xf32>, vector<1x2x8x8xf32>, vector<1x2x8x8xf32> -> vector<4x2x8x8xf32>
    %67 = vector.shape_cast %66 : vector<4x2x8x8xf32> to vector<8x8x8xf32>
    %68 = arith.truncf %67 : vector<8x8x8xf32> to vector<8x8x8xbf16>
    "tpu.trace_start"() <{level = 10 : i32, message = "nqd,nkd->nqk"}> : () -> ()
    %cst_17 = arith.constant dense<0.000000e+00> : vector<8x8x8xf32>
    %69 = tpu.matmul %46, %57, %cst_17 {dimension_numbers = #tpu.dot_dimension_numbers<[2], [2], [1], [1], [0, 0, 0, 1, 1, 1], [0], [0]>} : vector<8x8x8xbf16>, vector<8x8x8xbf16>, vector<8x8x8xf32> -> vector<8x8x8xf32>
    "tpu.trace_stop"() : () -> ()
    %cst_18 = arith.constant 0.353553385 : f32
    %70 = vector.broadcast %cst_18 : f32 to vector<8x8x8xf32>
    %71 = arith.mulf %69, %70 : vector<8x8x8xf32>
    %cst_19 = arith.constant dense<0xFF800000> : vector<8x8xf32>
    %72 = vector.multi_reduction <maximumf>, %71, %cst_19 [2] : vector<8x8x8xf32> to vector<8x8xf32>
    %73 = vector.shape_cast %72 : vector<8x8xf32> to vector<8x8x1xf32>
    %74 = vector.broadcast %73 : vector<8x8x1xf32> to vector<8x8x8xf32>
    %75 = arith.subf %71, %74 : vector<8x8x8xf32>
    %76 = math.exp %75 : vector<8x8x8xf32>
    %cst_20 = arith.constant dense<0.000000e+00> : vector<8x8xf32>
    %77 = vector.multi_reduction <add>, %76, %cst_20 [2] : vector<8x8x8xf32> to vector<8x8xf32>
    %78 = vector.shape_cast %77 : vector<8x8xf32> to vector<8x8x1xf32>
    %79 = tpu.reciprocal %78 {approx = true} : vector<8x8x1xf32> -> vector<8x8x1xf32>
    %80 = vector.broadcast %79 : vector<8x8x1xf32> to vector<8x8x8xf32>
    %81 = arith.mulf %76, %80 : vector<8x8x8xf32>
    %82 = arith.truncf %81 : vector<8x8x8xf32> to vector<8x8x8xbf16>
    "tpu.trace_start"() <{level = 10 : i32, message = "nqk,nkd->nqd"}> : () -> ()
    %cst_21 = arith.constant dense<0.000000e+00> : vector<8x8x8xf32>
    %83 = tpu.matmul %82, %68, %cst_21 {dimension_numbers = #tpu.dot_dimension_numbers<[2], [1], [1], [2], [0, 0, 0, 1, 1, 2], [0], [0]>} : vector<8x8x8xbf16>, vector<8x8x8xbf16>, vector<8x8x8xf32> -> vector<8x8x8xf32>
    "tpu.trace_stop"() : () -> ()
    %84 = vector.shape_cast %83 : vector<8x8x8xf32> to vector<4x16x8xf32>
    %85 = vector.extract_strided_slice %84 {offsets = [0, 0, 0], sizes = [1, 16, 8], strides = [1, 1, 1]} : vector<4x16x8xf32> to vector<1x16x8xf32>
    %86 = vector.shape_cast %85 : vector<1x16x8xf32> to vector<16x8xf32>
    %87 = vector.extract_strided_slice %84 {offsets = [1, 0, 0], sizes = [1, 16, 8], strides = [1, 1, 1]} : vector<4x16x8xf32> to vector<1x16x8xf32>
    %88 = vector.shape_cast %87 : vector<1x16x8xf32> to vector<16x8xf32>
    %89 = vector.extract_strided_slice %84 {offsets = [2, 0, 0], sizes = [1, 16, 8], strides = [1, 1, 1]} : vector<4x16x8xf32> to vector<1x16x8xf32>
    %90 = vector.shape_cast %89 : vector<1x16x8xf32> to vector<16x8xf32>
    %91 = vector.extract_strided_slice %84 {offsets = [3, 0, 0], sizes = [1, 16, 8], strides = [1, 1, 1]} : vector<4x16x8xf32> to vector<1x16x8xf32>
    %92 = vector.shape_cast %91 : vector<1x16x8xf32> to vector<16x8xf32>
    %93 = tpu.concatenate %86, %88, %90, %92 in 1 : vector<16x8xf32>, vector<16x8xf32>, vector<16x8xf32>, vector<16x8xf32> -> vector<16x32xf32>
    %94 = arith.truncf %93 : vector<16x32xf32> to vector<16x32xbf16>
    %c0_22 = arith.constant 0 : index
    %c0_23 = arith.constant 0 : index
    %95 = vector.load %arg6[%c0_22, %c0_23] : memref<32x32xbf16, #tpu.memory_space<vmem>>, vector<32x32xbf16>
    %cst_24 = arith.constant dense<0.000000e+00> : vector<16x32xf32>
    %96 = tpu.matmul %94, %95, %cst_24 {dimension_numbers = #tpu.dot_dimension_numbers<[1], [0], [0], [1], [0, 0, 1, 1], [], []>} : vector<16x32xbf16>, vector<32x32xbf16>, vector<16x32xf32> -> vector<16x32xf32>
    %97 = arith.addf %1, %96 : vector<16x32xf32>
    %c0_25 = arith.constant 0 : index
    %c0_26 = arith.constant 0 : index
    %98 = vector.load %arg7[%c0_25, %c0_26] : memref<1x32xf32, #tpu.memory_space<vmem>>, vector<1x32xf32>
    %99 = arith.mulf %97, %97 : vector<16x32xf32>
    %cst_27 = arith.constant dense<0.000000e+00> : vector<16xf32>
    %100 = vector.multi_reduction <add>, %99, %cst_27 [1] : vector<16x32xf32> to vector<16xf32>
    %101 = vector.shape_cast %100 : vector<16xf32> to vector<16x1xf32>
    %cst_28 = arith.constant 3.200000e+01 : f32
    %102 = vector.broadcast %cst_28 : f32 to vector<16x1xf32>
    %103 = arith.divf %101, %102 : vector<16x1xf32>
    %cst_29 = arith.constant 9.99999997E-7 : f32
    %104 = vector.broadcast %cst_29 : f32 to vector<16x1xf32>
    %105 = arith.addf %103, %104 : vector<16x1xf32>
    %106 = math.rsqrt %105 : vector<16x1xf32>
    %107 = vector.broadcast %106 : vector<16x1xf32> to vector<16x32xf32>
    %108 = arith.mulf %97, %107 : vector<16x32xf32>
    %cst_30 = arith.constant 1.000000e+00 : f32
    %109 = vector.broadcast %cst_30 : f32 to vector<1x32xf32>
    %110 = arith.addf %109, %98 : vector<1x32xf32>
    %111 = vector.broadcast %110 : vector<1x32xf32> to vector<16x32xf32>
    %112 = arith.mulf %108, %111 : vector<16x32xf32>
    %c0_31 = arith.constant 0 : index
    %c0_32 = arith.constant 0 : index
    %113 = vector.load %arg8[%c0_31, %c0_32] : memref<32x128xbf16, #tpu.memory_space<vmem>>, vector<32x128xbf16>
    %114 = arith.truncf %112 : vector<16x32xf32> to vector<16x32xbf16>
    %cst_33 = arith.constant dense<0.000000e+00> : vector<16x128xf32>
    %115 = tpu.matmul %114, %113, %cst_33 {dimension_numbers = #tpu.dot_dimension_numbers<[1], [0], [0], [1], [0, 0, 1, 1], [], []>} : vector<16x32xbf16>, vector<32x128xbf16>, vector<16x128xf32> -> vector<16x128xf32>
    %116 = vector.extract_strided_slice %115 {offsets = [0, 0], sizes = [16, 64], strides = [1, 1]} : vector<16x128xf32> to vector<16x64xf32>
    %117 = arith.mulf %116, %116 : vector<16x64xf32>
    %118 = arith.mulf %116, %117 : vector<16x64xf32>
    %cst_34 = arith.constant 4.471500e-02 : f32
    %119 = vector.broadcast %cst_34 : f32 to vector<16x64xf32>
    %120 = arith.mulf %119, %118 : vector<16x64xf32>
    %121 = arith.addf %116, %120 : vector<16x64xf32>
    %cst_35 = arith.constant 0.797884583 : f32
    %122 = vector.broadcast %cst_35 : f32 to vector<16x64xf32>
    %123 = arith.mulf %122, %121 : vector<16x64xf32>
    %124 = math.tanh %123 : vector<16x64xf32>
    %cst_36 = arith.constant 1.000000e+00 : f32
    %125 = vector.broadcast %cst_36 : f32 to vector<16x64xf32>
    %126 = arith.addf %125, %124 : vector<16x64xf32>
    %cst_37 = arith.constant 5.000000e-01 : f32
    %127 = vector.broadcast %cst_37 : f32 to vector<16x64xf32>
    %128 = arith.mulf %127, %126 : vector<16x64xf32>
    %129 = arith.mulf %116, %128 : vector<16x64xf32>
    %130 = vector.extract_strided_slice %115 {offsets = [0, 64], sizes = [16, 64], strides = [1, 1]} : vector<16x128xf32> to vector<16x64xf32>
    %131 = arith.mulf %129, %130 : vector<16x64xf32>
    %c0_38 = arith.constant 0 : index
    %c0_39 = arith.constant 0 : index
    %132 = vector.load %arg9[%c0_38, %c0_39] : memref<64x32xbf16, #tpu.memory_space<vmem>>, vector<64x32xbf16>
    %133 = arith.truncf %131 : vector<16x64xf32> to vector<16x64xbf16>
    %cst_40 = arith.constant dense<0.000000e+00> : vector<16x32xf32>
    %134 = tpu.matmul %133, %132, %cst_40 {dimension_numbers = #tpu.dot_dimension_numbers<[1], [0], [0], [1], [0, 0, 1, 1], [], []>} : vector<16x64xbf16>, vector<64x32xbf16>, vector<16x32xf32> -> vector<16x32xf32>
    %135 = arith.addf %97, %134 : vector<16x32xf32>
    %136 = arith.truncf %135 : vector<16x32xf32> to vector<16x32xbf16>
    %c0_41 = arith.constant 0 : index
    %c0_42 = arith.constant 0 : index
    %137 = vector.load %arg10[%c0_41, %c0_42] : memref<16x32xbf16, #tpu.memory_space<vmem>>, vector<16x32xbf16>
    tpu.vector_store %arg10[%c0_41, %c0_42], %136 {strides = array<i32>} : memref<16x32xbf16, #tpu.memory_space<vmem>>, vector<16x32xbf16>,
    return
  }
}

</mosaic_0001>

<llo_original>
// kernel: paligemma_forward.7
$region0: #{paligemma_forward.7}
  #allocation0 [shape = 'u32[]', space=smem, size = 0x4, offset = 0x4, fixed_abs, tag = 'smem constant byte address 0x4 - core index']
  #allocation1 [shape = 'u32[72,128]{1,0:T(1,128)}', space=vmem, size = 0x9000, scoped, tag = 'internal scratch']
  %s0 = inlined_call_operand.vmem [shape: f32[8,192], index: 0, kind: input, shape index: {}]
  %s1 = inlined_call_operand.vmem [shape: bf16[192,32], index: 1, kind: input, shape index: {}]
  %s2 = inlined_call_operand.vmem [shape: f32[1,32], index: 2, kind: input, shape index: {}]
  %s3 = inlined_call_operand.vmem [shape: f32[8,32], index: 3, kind: input, shape index: {}]
  %s4 = inlined_call_operand.vmem [shape: bf16[8,32], index: 4, kind: output, shape index: {}]
  %s5 = sld [smem:[#allocation0]]
  $region26: #{paligemma_forward.7} parent=0
    _
  %s7 = ssub.s32 1, %s5
  %s8 = scalar_select 0, %s7, %s5
  // Predicated region
  $region2: #{paligemma_forward.7} parent=0 // pred_check
    _
  $region3: #{paligemma_forward.7} parent=0 // pred_check_branch
    %10 = sbr.rel (0) target = $region5
  $region4: #{paligemma_forward.7} parent=0 // pred_region
    _
  $region5: #{paligemma_forward.7} parent=0 // pred_fallthru
    _
  // Predicated region
  $region6: #{paligemma_forward.7} parent=0 // pred_check
    _
  $region7: #{paligemma_forward.7} parent=0 // pred_check_branch
    %12 = sbr.rel (0) target = $region9
  $region8: #{paligemma_forward.7} parent=0 // pred_region
    _
  $region9: #{paligemma_forward.7} parent=0 // pred_fallthru
    _
  // Predicated region
  $region10: #{paligemma_forward.7} parent=0 // pred_check
    _
  $region11: #{paligemma_forward.7} parent=0 // pred_check_branch
    %14 = sbr.rel (0) target = $region13
  $region12: #{paligemma_forward.7} parent=0 // pred_region
    _
  $region13: #{paligemma_forward.7} parent=0 // pred_fallthru
    _
  // Predicated region
  $region14: #{paligemma_forward.7} parent=0 // pred_check
    _
  $region15: #{paligemma_forward.7} parent=0 // pred_check_branch
    %16 = sbr.rel (0) target = $region17
  $region16: #{paligemma_forward.7} parent=0 // pred_region
    _
  $region17: #{paligemma_forward.7} parent=0 // pred_fallthru
    _
  %v18 = vld [vmem:[%s0] sm:$0xff]
  %v19 = vld [vmem:[%s0 + $0x8] sm:$0xff]
  %v20 = vld [vmem:[%s1] sm:$0xf]
  %v21 = vld [vmem:[%s1 + $0x4] sm:$0xf]
  %v22 = vld [vmem:[%s1 + $0x8] sm:$0xf]
  %v23 = vld [vmem:[%s1 + $0xc] sm:$0xf]
  %v24 = vld [vmem:[%s1 + $0x10] sm:$0xf]
  %v25 = vld [vmem:[%s1 + $0x14] sm:$0xf]
  %v26 = vld [vmem:[%s1 + $0x18] sm:$0xf]
  %v27 = vld [vmem:[%s1 + $0x1c] sm:$0xf]
  %v28 = vld [vmem:[%s1 + $0x20] sm:$0xf]
  %v29 = vld [vmem:[%s1 + $0x24] sm:$0xf]
  %v30 = vld [vmem:[%s1 + $0x28] sm:$0xf]
  %v31 = vld [vmem:[%s1 + $0x2c] sm:$0xf]
  %v32 = vld [vmem:[%s1 + $0x30] sm:$0xf]
  %v33 = vld [vmem:[%s1 + $0x34] sm:$0xf]
  %v34 = vld [vmem:[%s1 + $0x38] sm:$0xf]
  %v35 = vld [vmem:[%s1 + $0x3c] sm:$0xf]
  %v36 = vld [vmem:[%s1 + $0x40] sm:$0xf]
  %v37 = vld [vmem:[%s1 + $0x44] sm:$0xf]
  %v38 = vld [vmem:[%s1 + $0x48] sm:$0xf]
  %v39 = vld [vmem:[%s1 + $0x4c] sm:$0xf]
  %v40 = vld [vmem:[%s1 + $0x50] sm:$0xf]
  %v41 = vld [vmem:[%s1 + $0x54] sm:$0xf]
  %v42 = vld [vmem:[%s1 + $0x58] sm:$0xf]
  %v43 = vld [vmem:[%s1 + $0x5c] sm:$0xf]
  %v44 = vpack.c.bf16 %v18, %v18
  %v45 = vpack.c.bf16 %v19, %v19
  %v46 = vld [vmem:[%s2] sm:$0x1]
  %v48 = vperm.slane %v46, 0
  %v74 = vunpack.c.l.b16 %v20
  %v75 = vunpack.c.l.b16 %v21
  %v76 = vunpack.c.l.b16 %v22
  %v77 = vunpack.c.l.b16 %v23
  %v78 = vunpack.c.l.b16 %v24
  %v79 = vunpack.c.l.b16 %v25
  %v80 = vunpack.c.l.b16 %v26
  %v81 = vunpack.c.l.b16 %v27
  %v82 = vunpack.c.l.b16 %v28
  %v83 = vunpack.c.l.b16 %v29
  %v84 = vunpack.c.l.b16 %v30
  %v85 = vunpack.c.l.b16 %v31
  %v86 = vunpack.c.l.b16 %v32
  %v87 = vunpack.c.l.b16 %v33
  %v88 = vunpack.c.l.b16 %v34
  %v89 = vunpack.c.l.b16 %v35
  %v90 = vunpack.c.l.b16 %v36
  %v91 = vunpack.c.l.b16 %v37
  %v92 = vunpack.c.l.b16 %v38
  %v93 = vunpack.c.l.b16 %v39
  %v94 = vunpack.c.l.b16 %v40
  %v95 = vunpack.c.l.b16 %v41
  %v96 = vunpack.c.l.b16 %v42
  %v97 = vunpack.c.l.b16 %v43
  %v98 = vpack.c.b16 %v75, %v74
  %v99 = vpack.c.b16 %v77, %v76
  %v100 = vpack.c.b16 %v79, %v78
  %v101 = vpack.c.b16 %v81, %v80
  %v102 = vpack.c.b16 %v83, %v82
  %v103 = vpack.c.b16 %v85, %v84
  %v104 = vpack.c.b16 %v87, %v86
  %v105 = vpack.c.b16 %v89, %v88
  %v106 = vpack.c.b16 %v91, %v90
  %v107 = vpack.c.b16 %v93, %v92
  %v108 = vpack.c.b16 %v95, %v94
  %v109 = vpack.c.b16 %v97, %v96
  %vm122 = vcmask 523264
  %v124 = vsel %vm122, %v45, 0
  %126 = vmatpush.bf16.msra.mxu0 %v105
  %127 = vmatpush.bf16.msra.mxu0 %v104
  %128 = vmatpush.bf16.msra.mxu0 %v103
  %129 = vmatpush.bf16.msra.mxu0 %v102
  %130 = vmatpush.bf16.msra.mxu0 %v101
  %131 = vmatpush.bf16.msra.mxu0 %v100
  %132 = vmatpush.bf16.msra.mxu0 %v99
  %133 = vmatpush.bf16.msra.mxu0 %v98
  %134 = vmatmul.bf16.gmra.mxu0 %v44
  %v135 = vpop.f32.mrf.mxu0
  %v136 = vadd.f32 %v48, %v135
  %v137 = vpop.f32.mrf.mxu0
  %138 = vdwg.mxu0
  %139 = vmatpush.bf16.msra.mxu0 0
  %140 = vmatpush.bf16.msra.mxu0 0
  %141 = vmatpush.bf16.msra.mxu0 0
  %142 = vmatpush.bf16.msra.mxu0 0
  %143 = vmatpush.bf16.msra.mxu0 %v109
  %144 = vmatpush.bf16.msra.mxu0 %v108
  %145 = vmatpush.bf16.msra.mxu0 %v107
  %146 = vmatpush.bf16.msra.mxu0 %v106
  %147 = vmatmul.bf16.gmra.mxu0 %v124
  %v148 = vpop.f32.mrf.mxu0
  %v149 = vadd.f32 %v136, %v148
  %v150 = vpop.f32.mrf.mxu0
  %151 = vdwg.mxu0
  %v152 = vld [vmem:[%s3] sm:$0xff]
  %v153 = vadd.f32 %v149, %v152
  %v154 = vpack.c.bf16 %v153, %v153
  %vm155 = vcmask 257024
  %156 = vst.msk [vmem:[%s4] sm:$0xf] %vm155, %v154
  // Predicated region
  $region18: #{paligemma_forward.7} parent=0 // pred_check
    _
  $region19: #{paligemma_forward.7} parent=0 // pred_check_branch
    %158 = sbr.rel (0) target = $region21
  $region20: #{paligemma_forward.7} parent=0 // pred_region
    _
  $region21: #{paligemma_forward.7} parent=0 // pred_fallthru
    _
  // Predicated region
  $region22: #{paligemma_forward.7} parent=0 // pred_check
    _
  $region23: #{paligemma_forward.7} parent=0 // pred_check_branch
    %160 = sbr.rel (0) target = $region25
  $region24: #{paligemma_forward.7} parent=0 // pred_region
    _
  $region25: #{paligemma_forward.7} parent=0 // pred_fallthru
    _

// kernel: paligemma_forward.10
$region0: #{paligemma_forward.10}
  #allocation0 [shape = 'u32[]', space=smem, size = 0x4, offset = 0x4, fixed_abs, tag = 'smem constant byte address 0x4 - core index']
  #allocation1 [shape = 'u32[72,128]{1,0:T(1,128)}', space=vmem, size = 0x9000, scoped, tag = 'internal scratch']
  %s0 = inlined_call_operand.vmem [shape: bf16[8,32], index: 0, kind: input, shape index: {}]
  %s1 = inlined_call_operand.vmem [shape: f32[1,32], index: 1, kind: input, shape index: {}]
  %s2 = inlined_call_operand.vmem [shape: f32[1,32], index: 2, kind: input, shape index: {}]
  %s3 = inlined_call_operand.vmem [shape: bf16[32,32], index: 3, kind: input, shape index: {}]
  %s4 = inlined_call_operand.vmem [shape: f32[8,32], index: 4, kind: output, shape index: {}]
  %s5 = sld [smem:[#allocation0]]
  $region26: #{paligemma_forward.10} parent=0
    _
  %s7 = ssub.s32 1, %s5
  %s8 = scalar_select 0, %s7, %s5
  // Predicated region
  $region2: #{paligemma_forward.10} parent=0 // pred_check
    _
  $region3: #{paligemma_forward.10} parent=0 // pred_check_branch
    %10 = sbr.rel (0) target = $region5
  $region4: #{paligemma_forward.10} parent=0 // pred_region
    _
  $region5: #{paligemma_forward.10} parent=0 // pred_fallthru
    _
  // Predicated region
  $region6: #{paligemma_forward.10} parent=0 // pred_check
    _
  $region7: #{paligemma_forward.10} parent=0 // pred_check_branch
    %12 = sbr.rel (0) target = $region9
  $region8: #{paligemma_forward.10} parent=0 // pred_region
    _
  $region9: #{paligemma_forward.10} parent=0 // pred_fallthru
    _
  // Predicated region
  $region10: #{paligemma_forward.10} parent=0 // pred_check
    _
  $region11: #{paligemma_forward.10} parent=0 // pred_check_branch
    %14 = sbr.rel (0) target = $region13
  $region12: #{paligemma_forward.10} parent=0 // pred_region
    _
  $region13: #{paligemma_forward.10} parent=0 // pred_fallthru
    _
  // Predicated region
  $region14: #{paligemma_forward.10} parent=0 // pred_check
    _
  $region15: #{paligemma_forward.10} parent=0 // pred_check_branch
    %16 = sbr.rel (0) target = $region17
  $region16: #{paligemma_forward.10} parent=0 // pred_region
    _
  $region17: #{paligemma_forward.10} parent=0 // pred_fallthru
    _
  %v18 = vld [vmem:[%s0] sm:$0xf]
  %v19 = vunpack.c.l.bf16 %v18
  %v20 = vld [vmem:[%s1] sm:$0x1]
  %v21 = vld [vmem:[%s2] sm:$0x1]
  %vm22 = vcmask 261120
  %v23 = vsel %vm22, %v19, 0.0
  %24 = vadd.xlane.f32.xlu0 %v23
  %v25 = vpop.xlane.xlu0 %24
  %v26 = vrcp.pop 32.0
  %v27 = vmul.f32 32.0, %v26
  %v28 = vsub.f32 1.0, %v27
  %v29 = vmul.f32 %v26, %v28
  %v30 = vadd.f32 %v26, %v29
  %vm31 = vweird.f32 %v26
  %v32 = vsel %vm31, %v26, %v30
  %v33 = vmul.f32 %v25, %v32
  %v34 = vsub.f32 %v19, %v33
  %v35 = vmul.f32 %v34, %v34
  %v36 = vsel %vm22, %v35, 0.0
  %37 = vadd.xlane.f32.xlu0 %v36
  %v38 = vpop.xlane.xlu0 %37
  %v39 = vmul.f32 %v38, %v32
  %v40 = vadd.f32 %v39, 1e-06
  %v41 = vrsqrt.pop %v40
  %v42 = vmul.f32 %v41, %v40
  %v43 = vmul.f32 %v42, %v41
  %v44 = vmul.f32 0.5, %v43
  %v45 = vsub.f32 1.5, %v44
  %v46 = vmul.f32 %v41, %v45
  %vm47 = vweird.f32 %v40
  %vm48 = vweird.f32 %v41
  %vm49 = vmor %vm47, %vm48
  %v50 = vsel %vm49, %v41, %v46
  %v51 = vmul.f32 %v34, %v50
  %v53 = vperm.slane %v20, 0
  %v55 = vmul.f32 %v51, %v53
  %v57 = vperm.slane %v21, 0
  %v59 = vadd.f32 %v55, %v57
  %v60 = vld [vmem:[%s3] sm:$0xf]
  %v61 = vld [vmem:[%s3 + $0x4] sm:$0xf]
  %v62 = vld [vmem:[%s3 + $0x8] sm:$0xf]
  %v63 = vld [vmem:[%s3 + $0xc] sm:$0xf]
  %v64 = vpack.c.bf16 %v59, %v59
  %v69 = vunpack.c.l.b16 %v60
  %v70 = vunpack.c.l.b16 %v61
  %v71 = vunpack.c.l.b16 %v62
  %v72 = vunpack.c.l.b16 %v63
  %v73 = vpack.c.b16 %v70, %v69
  %v74 = vpack.c.b16 %v72, %v71
  %v78 = vsel %vm22, %v64, 0
  %80 = vmatpush.bf16.msra.mxu0 0
  %81 = vmatpush.bf16.msra.mxu0 0
  %82 = vmatpush.bf16.msra.mxu0 0
  %83 = vmatpush.bf16.msra.mxu0 0
  %84 = vmatpush.bf16.msra.mxu0 0
  %85 = vmatpush.bf16.msra.mxu0 0
  %86 = vmatpush.bf16.msra.mxu0 %v74
  %87 = vmatpush.bf16.msra.mxu0 %v73
  %88 = vmatmul.bf16.gmra.mxu0 %v78
  %v89 = vpop.f32.mrf.mxu0
  %v90 = vadd.f32 0.0, %v89
  %v91 = vpop.f32.mrf.mxu0
  %92 = vdwg.mxu0
  %v93 = vmul.f32 %v90, 0.17677669
  %94 = vst.msk [vmem:[%s4] sm:$0xff] %vm22, %v93
  // Predicated region
  $region18: #{paligemma_forward.10} parent=0 // pred_check
    _
  $region19: #{paligemma_forward.10} parent=0 // pred_check_branch
    %96 = sbr.rel (0) target = $region21
  $region20: #{paligemma_forward.10} parent=0 // pred_region
    _
  $region21: #{paligemma_forward.10} parent=0 // pred_fallthru
    _
  // Predicated region
  $region22: #{paligemma_forward.10} parent=0 // pred_check
    _
  $region23: #{paligemma_forward.10} parent=0 // pred_check_branch
    %98 = sbr.rel (0) target = $region25
  $region24: #{paligemma_forward.10} parent=0 // pred_region
    _
  $region25: #{paligemma_forward.10} parent=0 // pred_fallthru
    _

// kernel: paligemma_forward.8
$region0: #{paligemma_forward.8}
  #allocation0 [shape = 'u32[]', space=smem, size = 0x4, offset = 0x4, fixed_abs, tag = 'smem constant byte address 0x4 - core index']
  #allocation1 [shape = 'u32[72,128]{1,0:T(1,128)}', space=vmem, size = 0x9000, scoped, tag = 'internal scratch']
  %s0 = inlined_call_operand.vmem [shape: bf16[8,32], index: 0, kind: input, shape index: {}]
  %s1 = inlined_call_operand.vmem [shape: f32[1,32], index: 1, kind: input, shape index: {}]
  %s2 = inlined_call_operand.vmem [shape: f32[1,32], index: 2, kind: input, shape index: {}]
  %s3 = inlined_call_operand.vmem [shape: bf16[32,96], index: 3, kind: input, shape index: {}]
  %s4 = inlined_call_operand.vmem [shape: f32[1,96], index: 4, kind: input, shape index: {}]
  %s5 = inlined_call_operand.vmem [shape: bf16[32,32], index: 5, kind: input, shape index: {}]
  %s6 = inlined_call_operand.vmem [shape: f32[1,32], index: 6, kind: input, shape index: {}]
  %s7 = inlined_call_operand.vmem [shape: f32[1,32], index: 7, kind: input, shape index: {}]
  %s8 = inlined_call_operand.vmem [shape: f32[1,32], index: 8, kind: input, shape index: {}]
  %s9 = inlined_call_operand.vmem [shape: bf16[32,64], index: 9, kind: input, shape index: {}]
  %s10 = inlined_call_operand.vmem [shape: f32[1,64], index: 10, kind: input, shape index: {}]
  %s11 = inlined_call_operand.vmem [shape: bf16[64,32], index: 11, kind: input, shape index: {}]
  %s12 = inlined_call_operand.vmem [shape: f32[1,32], index: 12, kind: input, shape index: {}]
  %s13 = inlined_call_operand.vmem [shape: bf16[8,32], index: 13, kind: output, shape index: {}]
  %s14 = sld [smem:[#allocation0]]
  $region62: #{paligemma_forward.8} parent=0
    _
  %s16 = ssub.s32 1, %s14
  %s17 = scalar_select 0, %s16, %s14
  // Predicated region
  $region2: #{paligemma_forward.8} parent=0 // pred_check
    _
  $region3: #{paligemma_forward.8} parent=0 // pred_check_branch
    %19 = sbr.rel (0) target = $region5
  $region4: #{paligemma_forward.8} parent=0 // pred_region
    _
  $region5: #{paligemma_forward.8} parent=0 // pred_fallthru
    _
  // Predicated region
  $region6: #{paligemma_forward.8} parent=0 // pred_check
    _
  $region7: #{paligemma_forward.8} parent=0 // pred_check_branch
    %21 = sbr.rel (0) target = $region9
  $region8: #{paligemma_forward.8} parent=0 // pred_region
    _
  $region9: #{paligemma_forward.8} parent=0 // pred_fallthru
    _
  // Predicated region
  $region10: #{paligemma_forward.8} parent=0 // pred_check
    _
  $region11: #{paligemma_forward.8} parent=0 // pred_check_branch
    %23 = sbr.rel (0) target = $region13
  $region12: #{paligemma_forward.8} parent=0 // pred_region
    _
  $region13: #{paligemma_forward.8} parent=0 // pred_fallthru
    _
  // Predicated region
  $region14: #{paligemma_forward.8} parent=0 // pred_check
    _
  $region15: #{paligemma_forward.8} parent=0 // pred_check_branch
    %25 = sbr.rel (0) target = $region17
  $region16: #{paligemma_forward.8} parent=0 // pred_region
    _
  $region17: #{paligemma_forward.8} parent=0 // pred_fallthru
    _
  // Predicated region
  $region18: #{paligemma_forward.8} parent=0 // pred_check
    _
  $region19: #{paligemma_forward.8} parent=0 // pred_check_branch
    %27 = sbr.rel (0) target = $region21
  $region20: #{paligemma_forward.8} parent=0 // pred_region
    _
  $region21: #{paligemma_forward.8} parent=0 // pred_fallthru
    _
  // Predicated region
  $region22: #{paligemma_forward.8} parent=0 // pred_check
    _
  $region23: #{paligemma_forward.8} parent=0 // pred_check_branch
    %29 = sbr.rel (0) target = $region25
  $region24: #{paligemma_forward.8} parent=0 // pred_region
    _
  $region25: #{paligemma_forward.8} parent=0 // pred_fallthru
    _
  // Predicated region
  $region26: #{paligemma_forward.8} parent=0 // pred_check
    _
  $region27: #{paligemma_forward.8} parent=0 // pred_check_branch
    %31 = sbr.rel (0) target = $region29
  $region28: #{paligemma_forward.8} parent=0 // pred_region
    _
  $region29: #{paligemma_forward.8} parent=0 // pred_fallthru
    _
  // Predicated region
  $region30: #{paligemma_forward.8} parent=0 // pred_check
    _
  $region31: #{paligemma_forward.8} parent=0 // pred_check_branch
    %33 = sbr.rel (0) target = $region33
  $region32: #{paligemma_forward.8} parent=0 // pred_region
    _
  $region33: #{paligemma_forward.8} parent=0 // pred_fallthru
    _
  // Predicated region
  $region34: #{paligemma_forward.8} parent=0 // pred_check
    _
  $region35: #{paligemma_forward.8} parent=0 // pred_check_branch
    %35 = sbr.rel (0) target = $region37
  $region36: #{paligemma_forward.8} parent=0 // pred_region
    _
  $region37: #{paligemma_forward.8} parent=0 // pred_fallthru
    _
  // Predicated region
  $region38: #{paligemma_forward.8} parent=0 // pred_check
    _
  $region39: #{paligemma_forward.8} parent=0 // pred_check_branch
    %37 = sbr.rel (0) target = $region41
  $region40: #{paligemma_forward.8} parent=0 // pred_region
    _
  $region41: #{paligemma_forward.8} parent=0 // pred_fallthru
    _
  // Predicated region
  $region42: #{paligemma_forward.8} parent=0 // pred_check
    _
  $region43: #{paligemma_forward.8} parent=0 // pred_check_branch
    %39 = sbr.rel (0) target = $region45
  $region44: #{paligemma_forward.8} parent=0 // pred_region
    _
  $region45: #{paligemma_forward.8} parent=0 // pred_fallthru
    _
  // Predicated region
  $region46: #{paligemma_forward.8} parent=0 // pred_check
    _
  $region47: #{paligemma_forward.8} parent=0 // pred_check_branch
    %41 = sbr.rel (0) target = $region49
  $region48: #{paligemma_forward.8} parent=0 // pred_region
    _
  $region49: #{paligemma_forward.8} parent=0 // pred_fallthru
    _
  // Predicated region
  $region50: #{paligemma_forward.8} parent=0 // pred_check
    _
  $region51: #{paligemma_forward.8} parent=0 // pred_check_branch
    %43 = sbr.rel (0) target = $region53
  $region52: #{paligemma_forward.8} parent=0 // pred_region
    _
  $region53: #{paligemma_forward.8} parent=0 // pred_fallthru
    _
  %v45 = vld [vmem:[%s0] sm:$0xf]
  %v46 = vunpack.c.l.bf16 %v45
  %v47 = vld [vmem:[%s1] sm:$0x1]
  %v48 = vld [vmem:[%s2] sm:$0x1]
  %vm49 = vcmask 261120
  %v50 = vsel %vm49, %v46, 0.0
  %51 = vadd.xlane.f32.xlu0 %v50
  %v52 = vpop.xlane.xlu0 %51
  %v53 = vrcp.pop 32.0
  %v54 = vmul.f32 32.0, %v53
  %v55 = vsub.f32 1.0, %v54
  %v56 = vmul.f32 %v53, %v55
  %v57 = vadd.f32 %v53, %v56
  %vm58 = vweird.f32 %v53
  %v59 = vsel %vm58, %v53, %v57
  %v60 = vmul.f32 %v52, %v59
  %v61 = vsub.f32 %v46, %v60
  %v62 = vmul.f32 %v61, %v61
  %v63 = vsel %vm49, %v62, 0.0
  %64 = vadd.xlane.f32.xlu0 %v63
  %v65 = vpop.xlane.xlu0 %64
  %v66 = vmul.f32 %v65, %v59
  %v67 = vadd.f32 %v66, 1e-06
  %v68 = vrsqrt.pop %v67
  %v69 = vmul.f32 %v68, %v67
  %v70 = vmul.f32 %v69, %v68
  %v71 = vmul.f32 0.5, %v70
  %v72 = vsub.f32 1.5, %v71
  %v73 = vmul.f32 %v68, %v72
  %vm74 = vweird.f32 %v67
  %vm75 = vweird.f32 %v68
  %vm76 = vmor %vm74, %vm75
  %v77 = vsel %vm76, %v68, %v73
  %v78 = vmul.f32 %v61, %v77
  %v80 = vperm.slane %v47, 0
  %v82 = vmul.f32 %v78, %v80
  %v84 = vperm.slane %v48, 0
  %v86 = vadd.f32 %v82, %v84
  %v87 = vld [vmem:[%s3] sm:$0xf]
  %v88 = vld [vmem:[%s3 + $0x4] sm:$0xf]
  %v89 = vld [vmem:[%s3 + $0x8] sm:$0xf]
  %v90 = vld [vmem:[%s3 + $0xc] sm:$0xf]
  %v91 = vpack.c.bf16 %v86, %v86
  %v92 = vld [vmem:[%s4] sm:$0x1]
  %v94 = vperm.slane %v92, 0
  %v100 = vunpack.c.l.b16 %v87
  %v101 = vunpack.c.l.b16 %v88
  %v102 = vunpack.c.l.b16 %v89
  %v103 = vunpack.c.l.b16 %v90
  %v104 = vpack.c.b16 %v101, %v100
  %v105 = vpack.c.b16 %v103, %v102
  %v109 = vsel %vm49, %v91, 0
  %111 = vmatpush.bf16.msra.mxu0 0
  %112 = vmatpush.bf16.msra.mxu0 0
  %113 = vmatpush.bf16.msra.mxu0 0
  %114 = vmatpush.bf16.msra.mxu0 0
  %115 = vmatpush.bf16.msra.mxu0 0
  %116 = vmatpush.bf16.msra.mxu0 0
  %117 = vmatpush.bf16.msra.mxu0 %v105
  %118 = vmatpush.bf16.msra.mxu0 %v104
  %119 = vmatmul.bf16.gmra.mxu0 %v109
  %v120 = vpop.f32.mrf.mxu0
  %v121 = vadd.f32 %v94, %v120
  %v122 = vpop.f32.mrf.mxu0
  %123 = vdwg.mxu0
  %v125 = vrot.slane %v121, 4
  %127 = vrot.lane.b32.xlu0 %v121, 120
  %v128 = vpop.permute.xlu0 %127
  %129 = vrot.lane.b32.xlu0 %v125, 120
  %v130 = vpop.permute.xlu0 %129
  %133 = vrot.lane.b32.xlu0 %v121, 112
  %v134 = vpop.permute.xlu0 %133
  %135 = vrot.lane.b32.xlu0 %v125, 112
  %v136 = vpop.permute.xlu0 %135
  %139 = vrot.lane.b32.xlu0 %v121, 104
  %v140 = vpop.permute.xlu0 %139
  %141 = vrot.lane.b32.xlu0 %v125, 104
  %v142 = vpop.permute.xlu0 %141
  %v145 = vpack.c.bf16 %v121, %v121
  %v146 = vpack.c.bf16 %v125, %v125
  %v147 = vpack.c.bf16 %v128, %v128
  %v148 = vpack.c.bf16 %v130, %v130
  %v149 = vpack.c.bf16 %v134, %v134
  %v150 = vpack.c.bf16 %v136, %v136
  %v151 = vpack.c.bf16 %v140, %v140
  %v152 = vpack.c.bf16 %v142, %v142
  %v154 = vunpack.c.l.b16 %v145
  %v155 = vpack.c.b16 %v154, %v154
  %156 = vrot.lane.b32.xlu0 %v155, 96
  %v157 = vpop.permute.xlu0 %156
  %vm158 = vcmask 64512
  %v160 = vsel %vm158, %v145, 0
  %v163 = vsel %vm158, %v157, 0
  %165 = vmatpush.bf16.xpose.msra.mxu0 0
  %166 = vmatpush.bf16.xpose.msra.mxu0 0
  %167 = vmatpush.bf16.xpose.msra.mxu0 0
  %168 = vmatpush.bf16.xpose.msra.mxu0 0
  %169 = vmatpush.bf16.xpose.msra.mxu0 0
  %170 = vmatpush.bf16.xpose.msra.mxu0 0
  %171 = vmatpush.bf16.xpose.msra.mxu0 0
  %172 = vmatpush.bf16.xpose.msra.mxu0 %v163
  %173 = vmatmul.bf16.gmra.mxu0 %v160
  %v174 = vpop.f32.mrf.mxu0
  %v175 = vadd.f32 0.0, %v174
  %v176 = vpop.f32.mrf.mxu0
  %177 = vdwg.mxu0
  %v179 = vunpack.c.l.b16 %v146
  %v180 = vpack.c.b16 %v179, %v179
  %181 = vrot.lane.b32.xlu0 %v180, 96
  %v182 = vpop.permute.xlu0 %181
  %v184 = vsel %vm158, %v146, 0
  %v187 = vsel %vm158, %v182, 0
  %189 = vmatpush.bf16.xpose.msra.mxu0 0
  %190 = vmatpush.bf16.xpose.msra.mxu0 0
  %191 = vmatpush.bf16.xpose.msra.mxu0 0
  %192 = vmatpush.bf16.xpose.msra.mxu0 0
  %193 = vmatpush.bf16.xpose.msra.mxu0 0
  %194 = vmatpush.bf16.xpose.msra.mxu0 0
  %195 = vmatpush.bf16.xpose.msra.mxu0 0
  %196 = vmatpush.bf16.xpose.msra.mxu0 %v187
  %197 = vmatmul.bf16.gmra.mxu0 %v184
  %v198 = vpop.f32.mrf.mxu0
  %v199 = vadd.f32 0.0, %v198
  %v200 = vpop.f32.mrf.mxu0
  %201 = vdwg.mxu0
  %v203 = vunpack.c.l.b16 %v147
  %v204 = vpack.c.b16 %v203, %v203
  %205 = vrot.lane.b32.xlu0 %v204, 96
  %v206 = vpop.permute.xlu0 %205
  %v208 = vsel %vm158, %v147, 0
  %v211 = vsel %vm158, %v206, 0
  %213 = vmatpush.bf16.xpose.msra.mxu0 0
  %214 = vmatpush.bf16.xpose.msra.mxu0 0
  %215 = vmatpush.bf16.xpose.msra.mxu0 0
  %216 = vmatpush.bf16.xpose.msra.mxu0 0
  %217 = vmatpush.bf16.xpose.msra.mxu0 0
  %218 = vmatpush.bf16.xpose.msra.mxu0 0
  %219 = vmatpush.bf16.xpose.msra.mxu0 0
  %220 = vmatpush.bf16.xpose.msra.mxu0 %v211
  %221 = vmatmul.bf16.gmra.mxu0 %v208
  %v222 = vpop.f32.mrf.mxu0
  %v223 = vadd.f32 0.0, %v222
  %v224 = vpop.f32.mrf.mxu0
  %225 = vdwg.mxu0
  %v227 = vunpack.c.l.b16 %v148
  %v228 = vpack.c.b16 %v227, %v227
  %229 = vrot.lane.b32.xlu0 %v228, 96
  %v230 = vpop.permute.xlu0 %229
  %v232 = vsel %vm158, %v148, 0
  %v235 = vsel %vm158, %v230, 0
  %237 = vmatpush.bf16.xpose.msra.mxu0 0
  %238 = vmatpush.bf16.xpose.msra.mxu0 0
  %239 = vmatpush.bf16.xpose.msra.mxu0 0
  %240 = vmatpush.bf16.xpose.msra.mxu0 0
  %241 = vmatpush.bf16.xpose.msra.mxu0 0
  %242 = vmatpush.bf16.xpose.msra.mxu0 0
  %243 = vmatpush.bf16.xpose.msra.mxu0 0
  %244 = vmatpush.bf16.xpose.msra.mxu0 %v235
  %245 = vmatmul.bf16.gmra.mxu0 %v232
  %v246 = vpop.f32.mrf.mxu0
  %v247 = vadd.f32 0.0, %v246
  %v248 = vpop.f32.mrf.mxu0
  %249 = vdwg.mxu0
  %v251 = vunpack.c.l.b16 %v149
  %v252 = vpack.c.b16 %v251, %v251
  %253 = vrot.lane.b32.xlu0 %v252, 96
  %v254 = vpop.permute.xlu0 %253
  %v256 = vsel %vm158, %v149, 0
  %v259 = vsel %vm158, %v254, 0
  %261 = vmatpush.bf16.xpose.msra.mxu0 0
  %262 = vmatpush.bf16.xpose.msra.mxu0 0
  %263 = vmatpush.bf16.xpose.msra.mxu0 0
  %264 = vmatpush.bf16.xpose.msra.mxu0 0
  %265 = vmatpush.bf16.xpose.msra.mxu0 0
  %266 = vmatpush.bf16.xpose.msra.mxu0 0
  %267 = vmatpush.bf16.xpose.msra.mxu0 0
  %268 = vmatpush.bf16.xpose.msra.mxu0 %v259
  %269 = vmatmul.bf16.gmra.mxu0 %v256
  %v270 = vpop.f32.mrf.mxu0
  %v271 = vadd.f32 0.0, %v270
  %v272 = vpop.f32.mrf.mxu0
  %273 = vdwg.mxu0
  %v275 = vunpack.c.l.b16 %v150
  %v276 = vpack.c.b16 %v275, %v275
  %277 = vrot.lane.b32.xlu0 %v276, 96
  %v278 = vpop.permute.xlu0 %277
  %v280 = vsel %vm158, %v150, 0
  %v283 = vsel %vm158, %v278, 0
  %285 = vmatpush.bf16.xpose.msra.mxu0 0
  %286 = vmatpush.bf16.xpose.msra.mxu0 0
  %287 = vmatpush.bf16.xpose.msra.mxu0 0
  %288 = vmatpush.bf16.xpose.msra.mxu0 0
  %289 = vmatpush.bf16.xpose.msra.mxu0 0
  %290 = vmatpush.bf16.xpose.msra.mxu0 0
  %291 = vmatpush.bf16.xpose.msra.mxu0 0
  %292 = vmatpush.bf16.xpose.msra.mxu0 %v283
  %293 = vmatmul.bf16.gmra.mxu0 %v280
  %v294 = vpop.f32.mrf.mxu0
  %v295 = vadd.f32 0.0, %v294
  %v296 = vpop.f32.mrf.mxu0
  %297 = vdwg.mxu0
  %v299 = vunpack.c.l.b16 %v151
  %v300 = vpack.c.b16 %v299, %v299
  %301 = vrot.lane.b32.xlu0 %v300, 96
  %v302 = vpop.permute.xlu0 %301
  %v304 = vsel %vm158, %v151, 0
  %v307 = vsel %vm158, %v302, 0
  %309 = vmatpush.bf16.xpose.msra.mxu0 0
  %310 = vmatpush.bf16.xpose.msra.mxu0 0
  %311 = vmatpush.bf16.xpose.msra.mxu0 0
  %312 = vmatpush.bf16.xpose.msra.mxu0 0
  %313 = vmatpush.bf16.xpose.msra.mxu0 0
  %314 = vmatpush.bf16.xpose.msra.mxu0 0
  %315 = vmatpush.bf16.xpose.msra.mxu0 0
  %316 = vmatpush.bf16.xpose.msra.mxu0 %v307
  %317 = vmatmul.bf16.gmra.mxu0 %v304
  %v318 = vpop.f32.mrf.mxu0
  %v319 = vadd.f32 0.0, %v318
  %v320 = vpop.f32.mrf.mxu0
  %321 = vdwg.mxu0
  %v323 = vunpack.c.l.b16 %v152
  %v324 = vpack.c.b16 %v323, %v323
  %325 = vrot.lane.b32.xlu0 %v324, 96
  %v326 = vpop.permute.xlu0 %325
  %v328 = vsel %vm158, %v152, 0
  %v331 = vsel %vm158, %v326, 0
  %333 = vmatpush.bf16.xpose.msra.mxu0 0
  %334 = vmatpush.bf16.xpose.msra.mxu0 0
  %335 = vmatpush.bf16.xpose.msra.mxu0 0
  %336 = vmatpush.bf16.xpose.msra.mxu0 0
  %337 = vmatpush.bf16.xpose.msra.mxu0 0
  %338 = vmatpush.bf16.xpose.msra.mxu0 0
  %339 = vmatpush.bf16.xpose.msra.mxu0 0
  %340 = vmatpush.bf16.xpose.msra.mxu0 %v331
  %341 = vmatmul.bf16.gmra.mxu0 %v328
  %v342 = vpop.f32.mrf.mxu0
  %v343 = vadd.f32 0.0, %v342
  %v344 = vpop.f32.mrf.mxu0
  %345 = vdwg.mxu0
  %v346 = vmul.f32 %v175, 0.35355338
  %v347 = vmul.f32 %v199, 0.35355338
  %v348 = vmul.f32 %v223, 0.35355338
  %v349 = vmul.f32 %v247, 0.35355338
  %v350 = vmul.f32 %v271, 0.35355338
  %v351 = vmul.f32 %v295, 0.35355338
  %v352 = vmul.f32 %v319, 0.35355338
  %v353 = vmul.f32 %v343, 0.35355338
  %vm354 = vcmask 27648
  %v355 = vsel %vm354, %v346, -inf
  %356 = vmax.xlane.f32.xlu0 %v355
  %v357 = vpop.xlane.xlu0 %356
  %v358 = vsel %vm354, %v347, -inf
  %359 = vmax.xlane.f32.xlu0 %v358
  %v360 = vpop.xlane.xlu0 %359
  %v361 = vsel %vm354, %v348, -inf
  %362 = vmax.xlane.f32.xlu0 %v361
  %v363 = vpop.xlane.xlu0 %362
  %v364 = vsel %vm354, %v349, -inf
  %365 = vmax.xlane.f32.xlu0 %v364
  %v366 = vpop.xlane.xlu0 %365
  %v367 = vsel %vm354, %v350, -inf
  %368 = vmax.xlane.f32.xlu0 %v367
  %v369 = vpop.xlane.xlu0 %368
  %v370 = vsel %vm354, %v351, -inf
  %371 = vmax.xlane.f32.xlu0 %v370
  %v372 = vpop.xlane.xlu0 %371
  %v373 = vsel %vm354, %v352, -inf
  %374 = vmax.xlane.f32.xlu0 %v373
  %v375 = vpop.xlane.xlu0 %374
  %v376 = vsel %vm354, %v353, -inf
  %377 = vmax.xlane.f32.xlu0 %v376
  %v378 = vpop.xlane.xlu0 %377
  %v379 = vsub.f32 %v346, %v357
  %v380 = vsub.f32 %v347, %v360
  %v381 = vsub.f32 %v348, %v363
  %v382 = vsub.f32 %v349, %v366
  %v383 = vsub.f32 %v350, %v369
  %v384 = vsub.f32 %v351, %v372
  %v385 = vsub.f32 %v352, %v375
  %v386 = vsub.f32 %v353, %v378
  %v387 = vmul.f32 %v379, 1.442695
  %v388 = vpow.pop %v387
  %v389 = vmul.f32 %v380, 1.442695
  %v390 = vpow.pop %v389
  %v391 = vmul.f32 %v381, 1.442695
  %v392 = vpow.pop %v391
  %v393 = vmul.f32 %v382, 1.442695
  %v394 = vpow.pop %v393
  %v395 = vmul.f32 %v383, 1.442695
  %v396 = vpow.pop %v395
  %v397 = vmul.f32 %v384, 1.442695
  %v398 = vpow.pop %v397
  %v399 = vmul.f32 %v385, 1.442695
  %v400 = vpow.pop %v399
  %v401 = vmul.f32 %v386, 1.442695
  %v402 = vpow.pop %v401
  %v403 = vsel %vm354, %v388, 0.0
  %404 = vadd.xlane.f32.xlu0 %v403
  %v405 = vpop.xlane.xlu0 %404
  %v406 = vsel %vm354, %v390, 0.0
  %407 = vadd.xlane.f32.xlu0 %v406
  %v408 = vpop.xlane.xlu0 %407
  %v409 = vsel %vm354, %v392, 0.0
  %410 = vadd.xlane.f32.xlu0 %v409
  %v411 = vpop.xlane.xlu0 %410
  %v412 = vsel %vm354, %v394, 0.0
  %413 = vadd.xlane.f32.xlu0 %v412
  %v414 = vpop.xlane.xlu0 %413
  %v415 = vsel %vm354, %v396, 0.0
  %416 = vadd.xlane.f32.xlu0 %v415
  %v417 = vpop.xlane.xlu0 %416
  %v418 = vsel %vm354, %v398, 0.0
  %419 = vadd.xlane.f32.xlu0 %v418
  %v420 = vpop.xlane.xlu0 %419
  %v421 = vsel %vm354, %v400, 0.0
  %422 = vadd.xlane.f32.xlu0 %v421
  %v423 = vpop.xlane.xlu0 %422
  %v424 = vsel %vm354, %v402, 0.0
  %425 = vadd.xlane.f32.xlu0 %v424
  %v426 = vpop.xlane.xlu0 %425
  %v427 = vrcp.pop %v405
  %v428 = vrcp.pop %v408
  %v429 = vrcp.pop %v411
  %v430 = vrcp.pop %v414
  %v431 = vrcp.pop %v417
  %v432 = vrcp.pop %v420
  %v433 = vrcp.pop %v423
  %v434 = vrcp.pop %v426
  %v435 = vmul.f32 %v388, %v427
  %v436 = vmul.f32 %v390, %v428
  %v437 = vmul.f32 %v392, %v429
  %v438 = vmul.f32 %v394, %v430
  %v439 = vmul.f32 %v396, %v431
  %v440 = vmul.f32 %v398, %v432
  %v441 = vmul.f32 %v400, %v433
  %v442 = vmul.f32 %v402, %v434
  %v443 = vpack.c.bf16 %v435, %v435
  %v444 = vpack.c.bf16 %v436, %v436
  %v445 = vpack.c.bf16 %v437, %v437
  %v446 = vpack.c.bf16 %v438, %v438
  %v447 = vpack.c.bf16 %v439, %v439
  %v448 = vpack.c.bf16 %v440, %v440
  %v449 = vpack.c.bf16 %v441, %v441
  %v450 = vpack.c.bf16 %v442, %v442
  %451 = vrot.lane.b32.xlu0 %v155, 64
  %v452 = vpop.permute.xlu0 %451
  %vm453 = vcmask 31744
  %v455 = vsel %vm453, %v443, 0
  %vm457 = vcmask 1041408
  %v459 = vsel %vm457, %v452, 0
  %461 = vmatpush.bf16.msra.mxu0 0
  %462 = vmatpush.bf16.msra.mxu0 0
  %463 = vmatpush.bf16.msra.mxu0 0
  %464 = vmatpush.bf16.msra.mxu0 0
  %465 = vmatpush.bf16.msra.mxu0 0
  %466 = vmatpush.bf16.msra.mxu0 0
  %467 = vmatpush.bf16.msra.mxu0 0
  %468 = vmatpush.bf16.msra.mxu0 %v459
  %469 = vmatmul.bf16.gmra.mxu0 %v455
  %v470 = vpop.f32.mrf.mxu0
  %v471 = vadd.f32 0.0, %v470
  %v472 = vpop.f32.mrf.mxu0
  %473 = vdwg.mxu0
  %474 = vrot.lane.b32.xlu0 %v180, 64
  %v475 = vpop.permute.xlu0 %474
  %v477 = vsel %vm453, %v444, 0
  %v480 = vsel %vm457, %v475, 0
  %482 = vmatpush.bf16.msra.mxu0 0
  %483 = vmatpush.bf16.msra.mxu0 0
  %484 = vmatpush.bf16.msra.mxu0 0
  %485 = vmatpush.bf16.msra.mxu0 0
  %486 = vmatpush.bf16.msra.mxu0 0
  %487 = vmatpush.bf16.msra.mxu0 0
  %488 = vmatpush.bf16.msra.mxu0 0
  %489 = vmatpush.bf16.msra.mxu0 %v480
  %490 = vmatmul.bf16.gmra.mxu0 %v477
  %v491 = vpop.f32.mrf.mxu0
  %v492 = vadd.f32 0.0, %v491
  %v493 = vpop.f32.mrf.mxu0
  %494 = vdwg.mxu0
  %495 = vrot.lane.b32.xlu0 %v204, 64
  %v496 = vpop.permute.xlu0 %495
  %v498 = vsel %vm453, %v445, 0
  %v501 = vsel %vm457, %v496, 0
  %503 = vmatpush.bf16.msra.mxu0 0
  %504 = vmatpush.bf16.msra.mxu0 0
  %505 = vmatpush.bf16.msra.mxu0 0
  %506 = vmatpush.bf16.msra.mxu0 0
  %507 = vmatpush.bf16.msra.mxu0 0
  %508 = vmatpush.bf16.msra.mxu0 0
  %509 = vmatpush.bf16.msra.mxu0 0
  %510 = vmatpush.bf16.msra.mxu0 %v501
  %511 = vmatmul.bf16.gmra.mxu0 %v498
  %v512 = vpop.f32.mrf.mxu0
  %v513 = vadd.f32 0.0, %v512
  %v514 = vpop.f32.mrf.mxu0
  %515 = vdwg.mxu0
  %516 = vrot.lane.b32.xlu0 %v228, 64
  %v517 = vpop.permute.xlu0 %516
  %v519 = vsel %vm453, %v446, 0
  %v522 = vsel %vm457, %v517, 0
  %524 = vmatpush.bf16.msra.mxu0 0
  %525 = vmatpush.bf16.msra.mxu0 0
  %526 = vmatpush.bf16.msra.mxu0 0
  %527 = vmatpush.bf16.msra.mxu0 0
  %528 = vmatpush.bf16.msra.mxu0 0
  %529 = vmatpush.bf16.msra.mxu0 0
  %530 = vmatpush.bf16.msra.mxu0 0
  %531 = vmatpush.bf16.msra.mxu0 %v522
  %532 = vmatmul.bf16.gmra.mxu0 %v519
  %v533 = vpop.f32.mrf.mxu0
  %v534 = vadd.f32 0.0, %v533
  %v535 = vpop.f32.mrf.mxu0
  %536 = vdwg.mxu0
  %537 = vrot.lane.b32.xlu0 %v252, 64
  %v538 = vpop.permute.xlu0 %537
  %v540 = vsel %vm453, %v447, 0
  %v543 = vsel %vm457, %v538, 0
  %545 = vmatpush.bf16.msra.mxu0 0
  %546 = vmatpush.bf16.msra.mxu0 0
  %547 = vmatpush.bf16.msra.mxu0 0
  %548 = vmatpush.bf16.msra.mxu0 0
  %549 = vmatpush.bf16.msra.mxu0 0
  %550 = vmatpush.bf16.msra.mxu0 0
  %551 = vmatpush.bf16.msra.mxu0 0
  %552 = vmatpush.bf16.msra.mxu0 %v543
  %553 = vmatmul.bf16.gmra.mxu0 %v540
  %v554 = vpop.f32.mrf.mxu0
  %v555 = vadd.f32 0.0, %v554
  %v556 = vpop.f32.mrf.mxu0
  %557 = vdwg.mxu0
  %558 = vrot.lane.b32.xlu0 %v276, 64
  %v559 = vpop.permute.xlu0 %558
  %v561 = vsel %vm453, %v448, 0
  %v564 = vsel %vm457, %v559, 0
  %566 = vmatpush.bf16.msra.mxu0 0
  %567 = vmatpush.bf16.msra.mxu0 0
  %568 = vmatpush.bf16.msra.mxu0 0
  %569 = vmatpush.bf16.msra.mxu0 0
  %570 = vmatpush.bf16.msra.mxu0 0
  %571 = vmatpush.bf16.msra.mxu0 0
  %572 = vmatpush.bf16.msra.mxu0 0
  %573 = vmatpush.bf16.msra.mxu0 %v564
  %574 = vmatmul.bf16.gmra.mxu0 %v561
  %v575 = vpop.f32.mrf.mxu0
  %v576 = vadd.f32 0.0, %v575
  %v577 = vpop.f32.mrf.mxu0
  %578 = vdwg.mxu0
  %579 = vrot.lane.b32.xlu0 %v300, 64
  %v580 = vpop.permute.xlu0 %579
  %v582 = vsel %vm453, %v449, 0
  %v585 = vsel %vm457, %v580, 0
  %587 = vmatpush.bf16.msra.mxu0 0
  %588 = vmatpush.bf16.msra.mxu0 0
  %589 = vmatpush.bf16.msra.mxu0 0
  %590 = vmatpush.bf16.msra.mxu0 0
  %591 = vmatpush.bf16.msra.mxu0 0
  %592 = vmatpush.bf16.msra.mxu0 0
  %593 = vmatpush.bf16.msra.mxu0 0
  %594 = vmatpush.bf16.msra.mxu0 %v585
  %595 = vmatmul.bf16.gmra.mxu0 %v582
  %v596 = vpop.f32.mrf.mxu0
  %v597 = vadd.f32 0.0, %v596
  %v598 = vpop.f32.mrf.mxu0
  %599 = vdwg.mxu0
  %600 = vrot.lane.b32.xlu0 %v324, 64
  %v601 = vpop.permute.xlu0 %600
  %v603 = vsel %vm453, %v450, 0
  %v606 = vsel %vm457, %v601, 0
  %608 = vmatpush.bf16.msra.mxu0 0
  %609 = vmatpush.bf16.msra.mxu0 0
  %610 = vmatpush.bf16.msra.mxu0 0
  %611 = vmatpush.bf16.msra.mxu0 0
  %612 = vmatpush.bf16.msra.mxu0 0
  %613 = vmatpush.bf16.msra.mxu0 0
  %614 = vmatpush.bf16.msra.mxu0 0
  %615 = vmatpush.bf16.msra.mxu0 %v606
  %616 = vmatmul.bf16.gmra.mxu0 %v603
  %v617 = vpop.f32.mrf.mxu0
  %v618 = vadd.f32 0.0, %v617
  %v619 = vpop.f32.mrf.mxu0
  %620 = vdwg.mxu0
  %623 = vst [vmem:[#allocation1] ss:$2 sm:$0xff] %v471
  %s624 = scalar_lea.vmem [#allocation1], 1
  %625 = vst [vmem:[%s624] ss:$2 sm:$0xff] %v492
  %v626 = vld.sshfl [vmem:[#allocation1] sm:$0xff pattern:$0x75316420]
  %630 = vst [vmem:[#allocation1] ss:$2 sm:$0xff] %v513
  %s631 = scalar_lea.vmem [#allocation1], 1
  %632 = vst [vmem:[%s631] ss:$2 sm:$0xff] %v534
  %v633 = vld.sshfl [vmem:[#allocation1] sm:$0xff pattern:$0x75316420]
  %634 = vrot.lane.b32.xlu0 %v633, 8
  %v635 = vpop.permute.xlu0 %634
  %639 = vst [vmem:[#allocation1] ss:$2 sm:$0xff] %v555
  %s640 = scalar_lea.vmem [#allocation1], 1
  %641 = vst [vmem:[%s640] ss:$2 sm:$0xff] %v576
  %v642 = vld.sshfl [vmem:[#allocation1] sm:$0xff pattern:$0x75316420]
  %643 = vrot.lane.b32.xlu0 %v642, 16
  %v644 = vpop.permute.xlu0 %643
  %648 = vst [vmem:[#allocation1] ss:$2 sm:$0xff] %v597
  %s649 = scalar_lea.vmem [#allocation1], 1
  %650 = vst [vmem:[%s649] ss:$2 sm:$0xff] %v618
  %v651 = vld.sshfl [vmem:[#allocation1] sm:$0xff pattern:$0x75316420]
  %652 = vrot.lane.b32.xlu0 %v651, 24
  %v653 = vpop.permute.xlu0 %652
  %v655 = vsel %vm158, %v626, %v635
  %vm656 = vcmask 130048
  %v657 = vsel %vm656, %v655, %v644
  %vm658 = vcmask 195584
  %v659 = vsel %vm658, %v657, %v653
  %v660 = vpack.c.bf16 %v659, %v659
  %v661 = vld [vmem:[%s5] sm:$0xf]
  %v662 = vld [vmem:[%s5 + $0x4] sm:$0xf]
  %v663 = vld [vmem:[%s5 + $0x8] sm:$0xf]
  %v664 = vld [vmem:[%s5 + $0xc] sm:$0xf]
  %v669 = vunpack.c.l.b16 %v661
  %v670 = vunpack.c.l.b16 %v662
  %v671 = vunpack.c.l.b16 %v663
  %v672 = vunpack.c.l.b16 %v664
  %v673 = vpack.c.b16 %v670, %v669
  %v674 = vpack.c.b16 %v672, %v671
  %v678 = vsel %vm49, %v660, 0
  %680 = vmatpush.bf16.msra.mxu0 0
  %681 = vmatpush.bf16.msra.mxu0 0
  %682 = vmatpush.bf16.msra.mxu0 0
  %683 = vmatpush.bf16.msra.mxu0 0
  %684 = vmatpush.bf16.msra.mxu0 0
  %685 = vmatpush.bf16.msra.mxu0 0
  %686 = vmatpush.bf16.msra.mxu0 %v674
  %687 = vmatpush.bf16.msra.mxu0 %v673
  %688 = vmatmul.bf16.gmra.mxu0 %v678
  %v689 = vpop.f32.mrf.mxu0
  %v690 = vadd.f32 0.0, %v689
  %v691 = vpop.f32.mrf.mxu0
  %692 = vdwg.mxu0
  %v693 = vadd.f32 %v46, %v690
  %v694 = vld [vmem:[%s6] sm:$0x1]
  %v696 = vperm.slane %v694, 0
  %v698 = vadd.f32 %v693, %v696
  %v699 = vld [vmem:[%s7] sm:$0x1]
  %v700 = vld [vmem:[%s8] sm:$0x1]
  %v701 = vsel %vm49, %v698, 0.0
  %702 = vadd.xlane.f32.xlu0 %v701
  %v703 = vpop.xlane.xlu0 %702
  %v704 = vmul.f32 %v703, %v59
  %v705 = vsub.f32 %v698, %v704
  %v706 = vmul.f32 %v705, %v705
  %v707 = vsel %vm49, %v706, 0.0
  %708 = vadd.xlane.f32.xlu0 %v707
  %v709 = vpop.xlane.xlu0 %708
  %v710 = vmul.f32 %v709, %v59
  %v711 = vadd.f32 %v710, 1e-06
  %v712 = vrsqrt.pop %v711
  %v713 = vmul.f32 %v712, %v711
  %v714 = vmul.f32 %v713, %v712
  %v715 = vmul.f32 0.5, %v714
  %v716 = vsub.f32 1.5, %v715
  %v717 = vmul.f32 %v712, %v716
  %vm718 = vweird.f32 %v711
  %vm719 = vweird.f32 %v712
  %vm720 = vmor %vm718, %vm719
  %v721 = vsel %vm720, %v712, %v717
  %v722 = vmul.f32 %v705, %v721
  %v724 = vperm.slane %v699, 0
  %v726 = vmul.f32 %v722, %v724
  %v728 = vperm.slane %v700, 0
  %v730 = vadd.f32 %v726, %v728
  %v731 = vld [vmem:[%s9] sm:$0xf]
  %v732 = vld [vmem:[%s9 + $0x4] sm:$0xf]
  %v733 = vld [vmem:[%s9 + $0x8] sm:$0xf]
  %v734 = vld [vmem:[%s9 + $0xc] sm:$0xf]
  %v735 = vpack.c.bf16 %v730, %v730
  %v736 = vld [vmem:[%s10] sm:$0x1]
  %v738 = vperm.slane %v736, 0
  %v744 = vunpack.c.l.b16 %v731
  %v745 = vunpack.c.l.b16 %v732
  %v746 = vunpack.c.l.b16 %v733
  %v747 = vunpack.c.l.b16 %v734
  %v748 = vpack.c.b16 %v745, %v744
  %v749 = vpack.c.b16 %v747, %v746
  %v753 = vsel %vm49, %v735, 0
  %755 = vmatpush.bf16.msra.mxu0 0
  %756 = vmatpush.bf16.msra.mxu0 0
  %757 = vmatpush.bf16.msra.mxu0 0
  %758 = vmatpush.bf16.msra.mxu0 0
  %759 = vmatpush.bf16.msra.mxu0 0
  %760 = vmatpush.bf16.msra.mxu0 0
  %761 = vmatpush.bf16.msra.mxu0 %v749
  %762 = vmatpush.bf16.msra.mxu0 %v748
  %763 = vmatmul.bf16.gmra.mxu0 %v753
  %v764 = vpop.f32.mrf.mxu0
  %v765 = vadd.f32 %v738, %v764
  %v766 = vpop.f32.mrf.mxu0
  %767 = vdwg.mxu0
  %v768 = vmul.f32 %v765, %v765
  %v769 = vmul.f32 %v765, %v768
  %v770 = vmul.f32 %v769, 0.044715
  %v771 = vadd.f32 %v765, %v770
  %v772 = vmul.f32 %v771, 0.7978846
  %v773 = vtanh.pop %v772
  %v774 = vadd.f32 %v773, 1.0
  %v775 = vmul.f32 %v774, 0.5
  %v776 = vmul.f32 %v765, %v775
  %v777 = vld [vmem:[%s11] sm:$0xf]
  %v778 = vld [vmem:[%s11 + $0x4] sm:$0xf]
  %v779 = vld [vmem:[%s11 + $0x8] sm:$0xf]
  %v780 = vld [vmem:[%s11 + $0xc] sm:$0xf]
  %v781 = vld [vmem:[%s11 + $0x10] sm:$0xf]
  %v782 = vld [vmem:[%s11 + $0x14] sm:$0xf]
  %v783 = vld [vmem:[%s11 + $0x18] sm:$0xf]
  %v784 = vld [vmem:[%s11 + $0x1c] sm:$0xf]
  %v785 = vpack.c.bf16 %v776, %v776
  %v794 = vunpack.c.l.b16 %v777
  %v795 = vunpack.c.l.b16 %v778
  %v796 = vunpack.c.l.b16 %v779
  %v797 = vunpack.c.l.b16 %v780
  %v798 = vunpack.c.l.b16 %v781
  %v799 = vunpack.c.l.b16 %v782
  %v800 = vunpack.c.l.b16 %v783
  %v801 = vunpack.c.l.b16 %v784
  %v802 = vpack.c.b16 %v795, %v794
  %v803 = vpack.c.b16 %v797, %v796
  %v804 = vpack.c.b16 %v799, %v798
  %v805 = vpack.c.b16 %v801, %v800
  %vm810 = vcmask 523264
  %v812 = vsel %vm810, %v785, 0
  %814 = vmatpush.bf16.msra.mxu0 0
  %815 = vmatpush.bf16.msra.mxu0 0
  %816 = vmatpush.bf16.msra.mxu0 0
  %817 = vmatpush.bf16.msra.mxu0 0
  %818 = vmatpush.bf16.msra.mxu0 %v805
  %819 = vmatpush.bf16.msra.mxu0 %v804
  %820 = vmatpush.bf16.msra.mxu0 %v803
  %821 = vmatpush.bf16.msra.mxu0 %v802
  %822 = vmatmul.bf16.gmra.mxu0 %v812
  %v823 = vpop.f32.mrf.mxu0
  %v824 = vadd.f32 0.0, %v823
  %v825 = vpop.f32.mrf.mxu0
  %826 = vdwg.mxu0
  %v827 = vadd.f32 %v698, %v824
  %v828 = vld [vmem:[%s12] sm:$0x1]
  %v830 = vperm.slane %v828, 0
  %v832 = vadd.f32 %v827, %v830
  %v833 = vpack.c.bf16 %v832, %v832
  %vm834 = vcmask 257024
  %835 = vst.msk [vmem:[%s13] sm:$0xf] %vm834, %v833
  // Predicated region
  $region54: #{paligemma_forward.8} parent=0 // pred_check
    _
  $region55: #{paligemma_forward.8} parent=0 // pred_check_branch
    %837 = sbr.rel (0) target = $region57
  $region56: #{paligemma_forward.8} parent=0 // pred_region
    _
  $region57: #{paligemma_forward.8} parent=0 // pred_fallthru
    _
  // Predicated region
  $region58: #{paligemma_forward.8} parent=0 // pred_check
    _
  $region59: #{paligemma_forward.8} parent=0 // pred_check_branch
    %839 = sbr.rel (0) target = $region61
  $region60: #{paligemma_forward.8} parent=0 // pred_region
    _
  $region61: #{paligemma_forward.8} parent=0 // pred_fallthru
    _

// kernel: tile.28
$region0: #{tile.28}
  %s0 = inlined_call_operand.vmem [shape: f32[2,1,8,4,8], index: 0, kind: input, shape index: {}]
  %s1 = inlined_call_operand.vmem [shape: f32[16,32], index: 1, kind: output, shape index: {}]
  $region1: #{tile.28} parent=0
    #allocation0 [shape = 'u8[65536]{0}', space=vmem, size = 0x10000, scoped, tag = 'scoped mem for input reshape']
    %s3 = ssub.s32 16, 1
    %s4 = scalar_lea.vmem %s0, 60
    %v5 = vld [vmem:[%s4] sm:%s3]
    %s6 = scalar_lea.vmem [#allocation0], 120
    %7 = vst [vmem:[%s6] sm:%s3] %v5
    %s8 = scalar_lea.vmem %s0, 56
    %v9 = vld [vmem:[%s8] sm:%s3]
    %s10 = scalar_lea.vmem [#allocation0], 112
    %11 = vst [vmem:[%s10] sm:%s3] %v9
    %s12 = scalar_lea.vmem %s0, 52
    %v13 = vld [vmem:[%s12] sm:%s3]
    %s14 = scalar_lea.vmem [#allocation0], 104
    %15 = vst [vmem:[%s14] sm:%s3] %v13
    %s16 = scalar_lea.vmem %s0, 48
    %v17 = vld [vmem:[%s16] sm:%s3]
    %s18 = scalar_lea.vmem [#allocation0], 96
    %19 = vst [vmem:[%s18] sm:%s3] %v17
    %s20 = scalar_lea.vmem %s0, 44
    %v21 = vld [vmem:[%s20] sm:%s3]
    %s22 = scalar_lea.vmem [#allocation0], 88
    %23 = vst [vmem:[%s22] sm:%s3] %v21
    %s24 = scalar_lea.vmem %s0, 40
    %v25 = vld [vmem:[%s24] sm:%s3]
    %s26 = scalar_lea.vmem [#allocation0], 80
    %27 = vst [vmem:[%s26] sm:%s3] %v25
    %s28 = scalar_lea.vmem %s0, 36
    %v29 = vld [vmem:[%s28] sm:%s3]
    %s30 = scalar_lea.vmem [#allocation0], 72
    %31 = vst [vmem:[%s30] sm:%s3] %v29
    %s32 = scalar_lea.vmem %s0, 32
    %v33 = vld [vmem:[%s32] sm:%s3]
    %s34 = scalar_lea.vmem [#allocation0], 64
    %35 = vst [vmem:[%s34] sm:%s3] %v33
    %s36 = scalar_lea.vmem %s0, 28
    %v37 = vld [vmem:[%s36] sm:%s3]
    %s38 = scalar_lea.vmem [#allocation0], 56
    %39 = vst [vmem:[%s38] sm:%s3] %v37
    %s40 = scalar_lea.vmem %s0, 24
    %v41 = vld [vmem:[%s40] sm:%s3]
    %s42 = scalar_lea.vmem [#allocation0], 48
    %43 = vst [vmem:[%s42] sm:%s3] %v41
    %s44 = scalar_lea.vmem %s0, 20
    %v45 = vld [vmem:[%s44] sm:%s3]
    %s46 = scalar_lea.vmem [#allocation0], 40
    %47 = vst [vmem:[%s46] sm:%s3] %v45
    %s48 = scalar_lea.vmem %s0, 16
    %v49 = vld [vmem:[%s48] sm:%s3]
    %s50 = scalar_lea.vmem [#allocation0], 32
    %51 = vst [vmem:[%s50] sm:%s3] %v49
    %s52 = scalar_lea.vmem %s0, 12
    %v53 = vld [vmem:[%s52] sm:%s3]
    %s54 = scalar_lea.vmem [#allocation0], 24
    %55 = vst [vmem:[%s54] sm:%s3] %v53
    %s56 = scalar_lea.vmem %s0, 8
    %v57 = vld [vmem:[%s56] sm:%s3]
    %s58 = scalar_lea.vmem [#allocation0], 16
    %59 = vst [vmem:[%s58] sm:%s3] %v57
    %s60 = scalar_lea.vmem %s0, 4
    %v61 = vld [vmem:[%s60] sm:%s3]
    %s62 = scalar_lea.vmem [#allocation0], 8
    %63 = vst [vmem:[%s62] sm:%s3] %v61
    %v64 = vld [vmem:[%s0] sm:%s3]
    %65 = vst [vmem:[#allocation0] sm:%s3] %v64
    %v66 = vld [vmem:[#allocation0] ss:$8 sm:$0xf]
    %v67 = vld [vmem:[#allocation0] ss:$8 sm:$0xf0]
    %vm68 = vcmask 1047556
    %v69 = vsel %vm68, %v67, %v66
    %vm70 = vcmask 64512
    %71 = vst.msk [vmem:[%s1] sm:$0xff] %vm70, %v69
    %s72 = scalar_lea.vmem [#allocation0], 64
    %v73 = vld [vmem:[%s72] ss:$8 sm:$0xf]
    %s74 = scalar_lea.vmem [#allocation0], 64
    %v75 = vld [vmem:[%s74] ss:$8 sm:$0xf0]
    %vm76 = vcmask 1047556
    %v77 = vsel %vm76, %v75, %v73
    %vm78 = vcmask 64512
    %s79 = scalar_lea.vmem %s1, 8
    %80 = vst.msk [vmem:[%s79] sm:$0xff] %vm78, %v77
    %s81 = scalar_lea.vmem [#allocation0], 3
    %v82 = vld [vmem:[%s81] ss:$8 sm:$0xf]
    %s83 = scalar_lea.vmem [#allocation0], 3
    %v84 = vld [vmem:[%s83] ss:$8 sm:$0xf0]
    %vm85 = vcmask 1047556
    %v86 = vsel %vm85, %v84, %v82
    %87 = vrot.lane.b32.xlu0 %v86, 24
    %v88 = vpop.permute.xlu0 %87
    %vm89 = vcmask 261312
    %90 = vst.msk [vmem:[%s1] sm:$0xff] %vm89, %v88
    %s91 = scalar_lea.vmem [#allocation0], 67
    %v92 = vld [vmem:[%s91] ss:$8 sm:$0xf]
    %s93 = scalar_lea.vmem [#allocation0], 67
    %v94 = vld [vmem:[%s93] ss:$8 sm:$0xf0]
    %vm95 = vcmask 1047556
    %v96 = vsel %vm95, %v94, %v92
    %97 = vrot.lane.b32.xlu0 %v96, 24
    %v98 = vpop.permute.xlu0 %97
    %vm99 = vcmask 261312
    %s100 = scalar_lea.vmem %s1, 8
    %101 = vst.msk [vmem:[%s100] sm:$0xff] %vm99, %v98
    %s102 = scalar_lea.vmem [#allocation0], 2
    %v103 = vld [vmem:[%s102] ss:$8 sm:$0xf]
    %s104 = scalar_lea.vmem [#allocation0], 2
    %v105 = vld [vmem:[%s104] ss:$8 sm:$0xf0]
    %vm106 = vcmask 1047556
    %v107 = vsel %vm106, %v105, %v103
    %108 = vrot.lane.b32.xlu0 %v107, 16
    %v109 = vpop.permute.xlu0 %108
    %vm110 = vcmask 195712
    %111 = vst.msk [vmem:[%s1] sm:$0xff] %vm110, %v109
    %s112 = scalar_lea.vmem [#allocation0], 66
    %v113 = vld [vmem:[%s112] ss:$8 sm:$0xf]
    %s114 = scalar_lea.vmem [#allocation0], 66
    %v115 = vld [vmem:[%s114] ss:$8 sm:$0xf0]
    %vm116 = vcmask 1047556
    %v117 = vsel %vm116, %v115, %v113
    %118 = vrot.lane.b32.xlu0 %v117, 16
    %v119 = vpop.permute.xlu0 %118
    %vm120 = vcmask 195712
    %s121 = scalar_lea.vmem %s1, 8
    %122 = vst.msk [vmem:[%s121] sm:$0xff] %vm120, %v119
    %s123 = scalar_lea.vmem [#allocation0], 1
    %v124 = vld [vmem:[%s123] ss:$8 sm:$0xf]
    %s125 = scalar_lea.vmem [#allocation0], 1
    %v126 = vld [vmem:[%s125] ss:$8 sm:$0xf0]
    %vm127 = vcmask 1047556
    %v128 = vsel %vm127, %v126, %v124
    %129 = vrot.lane.b32.xlu0 %v128, 8
    %v130 = vpop.permute.xlu0 %129
    %vm131 = vcmask 130112
    %132 = vst.msk [vmem:[%s1] sm:$0xff] %vm131, %v130
    %s133 = scalar_lea.vmem [#allocation0], 65
    %v134 = vld [vmem:[%s133] ss:$8 sm:$0xf]
    %s135 = scalar_lea.vmem [#allocation0], 65
    %v136 = vld [vmem:[%s135] ss:$8 sm:$0xf0]
    %vm137 = vcmask 1047556
    %v138 = vsel %vm137, %v136, %v134
    %139 = vrot.lane.b32.xlu0 %v138, 8
    %v140 = vpop.permute.xlu0 %139
    %vm141 = vcmask 130112
    %s142 = scalar_lea.vmem %s1, 8
    %143 = vst.msk [vmem:[%s142] sm:$0xff] %vm141, %v140

// kernel: paligemma_forward.13
$region0: #{paligemma_forward.13}
  #allocation0 [shape = 'u32[]', space=smem, size = 0x4, offset = 0x4, fixed_abs, tag = 'smem constant byte address 0x4 - core index']
  #allocation1 [shape = 'u32[72,128]{1,0:T(1,128)}', space=vmem, size = 0x9000, scoped, tag = 'internal scratch']
  %s0 = inlined_call_operand.vmem [shape: bf16[16,32], index: 0, kind: input, shape index: {}]
  %s1 = inlined_call_operand.vmem [shape: f32[1,32], index: 1, kind: input, shape index: {}]
  %s2 = inlined_call_operand.vmem [shape: bf16[32,128], index: 2, kind: input, shape index: {}]
  %s3 = inlined_call_operand.hbm [shape: f32[16,128], index: 3, kind: output, shape index: {}]
  %s4 = sld [smem:[#allocation0]]
  $region45: #{paligemma_forward.13} parent=0
    _
  %s6 = ssub.s32 1, %s4
  %s7 = scalar_select 0, %s6, %s4
  $region1: #{paligemma_forward.13} parent=0
    #allocation2 [shape = 'u8[8192]{0}', space=vmem, size = 0x2000, scoped, tag = 'output window, operand 0']
    #allocation3 [shape = 's32[2]{0}', space=sflag, size = 0x8, scoped, tag = 'scoped memory for paligemma_forward.13']
    %8 = vsyncpa [#allocation3], 0
    %s9 = scalar_lea.sflag [#allocation3], 1
    %10 = vsyncpa %s9, 0
    loop: start=0, step=1, limit=4
    $region2: #{paligemma_forward.13} parent=1 // loop_pre_header
      _
    $region3: #{paligemma_forward.13} parent=1 // loop_header
      %s12 = sphi 0, %s16
      %p13 = scmp.ge.s32.totalorder %s12, 4
      %s22 = sphi 0, %s24
      %s25 = sphi 0, %s22
      %s26 = sphi 0, %s25
      %s42 = sphi 0, %s26
      %s46 = sphi 0, %s46
      %s48 = sphi 0, %s46
      %s49 = sphi 0, %s48
      %s63 = sphi 0, %s49
      %s67 = sphi 0, %s67
      %s69 = sphi 0, %s67
      %s70 = sphi 0, %s69
      %s84 = sphi 0, %s70
      %s90 = sphi 0, %s92
      %s93 = sphi 0, %s90
      %s94 = sphi 0, %s93
      %s110 = sphi 0, %s94
    $region4: #{paligemma_forward.13} parent=1 // loop_header_branch
      %15 = sbr.rel (%p13) target = $region8
    $region5: #{paligemma_forward.13} parent=1 // loop_body
      %s17 = ssub.s32 %s12, 1
      %s18 = ssub.s32 %s12, 2
      %s19 = sadd.s32 %s12, 1
      %s20 = ssub.s32 %s12, %s19
      %p21 = scmp.eq.s32.totalorder %s20, 0
      %s23 = sadd.s32 %s22, 1
      %s24 = scalar_select %p21, %s22, %s23
      %p27 = pneg %p21
      %p28 = scmp.eq.s32.totalorder %s12, 1
      %p29 = por %p27, %p28
      %p30 = scmp.ne.s32.totalorder %s22, %s25
      %p31 = scmp.eq.s32.totalorder %s12, 0
      %p32 = por %p30, %p31
      %p33 = scmp.ne.s32.totalorder %s22, %s25
      %p34 = scmp.eq.s32.totalorder %s17, 1
      %p35 = por %p33, %p34
      %p36 = scmp.ne.s32.totalorder %s25, %s26
      %p37 = scmp.eq.s32.totalorder %s17, 0
      %p38 = por %p36, %p37
      %p39 = scmp.ne.s32.totalorder %s25, %s26
      %p40 = scmp.eq.s32.totalorder %s18, 1
      %p41 = por %p39, %p40
      %p43 = scmp.ne.s32.totalorder %s26, %s42
      %p44 = scmp.eq.s32.totalorder %s18, 0
      %p45 = por %p43, %p44
      %s47 = sadd.s32 %s46, 1
      %p50 = scmp.eq.s32.totalorder %s12, 1
      %p51 = scmp.ne.s32.totalorder %s46, %s48
      %p52 = scmp.eq.s32.totalorder %s12, 0
      %p53 = por %p51, %p52
      %p54 = scmp.ne.s32.totalorder %s46, %s48
      %p55 = scmp.eq.s32.totalorder %s17, 1
      %p56 = por %p54, %p55
      %p57 = scmp.ne.s32.totalorder %s48, %s49
      %p58 = scmp.eq.s32.totalorder %s17, 0
      %p59 = por %p57, %p58
      %p60 = scmp.ne.s32.totalorder %s48, %s49
      %p61 = scmp.eq.s32.totalorder %s18, 1
      %p62 = por %p60, %p61
      %p64 = scmp.ne.s32.totalorder %s49, %s63
      %p65 = scmp.eq.s32.totalorder %s18, 0
      %p66 = por %p64, %p65
      %s68 = sadd.s32 %s67, 1
      %p71 = scmp.eq.s32.totalorder %s12, 1
      %p72 = scmp.ne.s32.totalorder %s67, %s69
      %p73 = scmp.eq.s32.totalorder %s12, 0
      %p74 = por %p72, %p73
      %p75 = scmp.ne.s32.totalorder %s67, %s69
      %p76 = scmp.eq.s32.totalorder %s17, 1
      %p77 = por %p75, %p76
      %p78 = scmp.ne.s32.totalorder %s69, %s70
      %p79 = scmp.eq.s32.totalorder %s17, 0
      %p80 = por %p78, %p79
      %p81 = scmp.ne.s32.totalorder %s69, %s70
      %p82 = scmp.eq.s32.totalorder %s18, 1
      %p83 = por %p81, %p82
      %p85 = scmp.ne.s32.totalorder %s70, %s84
      %p86 = scmp.eq.s32.totalorder %s18, 0
      %p87 = por %p85, %p86
      %s88 = ssub.s32 %s12, %s19
      %p89 = scmp.eq.s32.totalorder %s88, 0
      %s91 = sadd.s32 %s90, 1
      %s92 = scalar_select %p89, %s90, %s91
      %p95 = pneg %p89
      %p96 = scmp.eq.s32.totalorder %s12, 1
      %p97 = por %p95, %p96
      %p98 = scmp.ne.s32.totalorder %s90, %s93
      %p99 = scmp.eq.s32.totalorder %s12, 0
      %p100 = por %p98, %p99
      %p101 = scmp.ne.s32.totalorder %s90, %s93
      %p102 = scmp.eq.s32.totalorder %s17, 1
      %p103 = por %p101, %p102
      %p104 = scmp.ne.s32.totalorder %s93, %s94
      %p105 = scmp.eq.s32.totalorder %s17, 0
      %p106 = por %p104, %p105
      %p107 = scmp.ne.s32.totalorder %s93, %s94
      %p108 = scmp.eq.s32.totalorder %s18, 1
      %p109 = por %p107, %p108
      %p111 = scmp.ne.s32.totalorder %s94, %s110
      %p112 = scmp.eq.s32.totalorder %s18, 0
      %p113 = por %p111, %p112
      %p114 = scmp.le.s32.totalorder 1, %s12
      %p115 = scmp.lt.s32.totalorder %s12, 3
      %p116 = pnand %p114, %p115
      %p117 = pneg %p116
      // Predicated region
      $region9: #{paligemma_forward.13} parent=5 // pred_check
        _
      $region10: #{paligemma_forward.13} parent=5 // pred_check_branch
        %119 = sbr.rel (%p116) target = $region12
      $region11: #{paligemma_forward.13} parent=5 // pred_region
        %s120 = ssub.s32 %s12, 1
        // Predicated region
        $region13: #{paligemma_forward.13} parent=11 // pred_check
          %p121 = pneg %p59
        $region14: #{paligemma_forward.13} parent=11 // pred_check_branch
          %123 = sbr.rel (%p121) target = $region16
        $region15: #{paligemma_forward.13} parent=11 // pred_region
          _
        $region16: #{paligemma_forward.13} parent=11 // pred_fallthru
          _
        // Predicated region
        $region17: #{paligemma_forward.13} parent=11 // pred_check
          %p124 = pneg %p80
        $region18: #{paligemma_forward.13} parent=11 // pred_check_branch
          %126 = sbr.rel (%p124) target = $region20
        $region19: #{paligemma_forward.13} parent=11 // pred_region
          _
        $region20: #{paligemma_forward.13} parent=11 // pred_fallthru
          _
      $region12: #{paligemma_forward.13} parent=5 // pred_fallthru
        _
      %p127 = scmp.lt.s32.totalorder %s12, 2
      // Predicated region
      $region21: #{paligemma_forward.13} parent=5 // pred_check
        %p128 = pneg %p127
      $region22: #{paligemma_forward.13} parent=5 // pred_check_branch
        %130 = sbr.rel (%p128) target = $region24
      $region23: #{paligemma_forward.13} parent=5 // pred_region
        // Predicated region
        $region25: #{paligemma_forward.13} parent=23 // pred_check
          %p131 = pneg %p32
        $region26: #{paligemma_forward.13} parent=23 // pred_check_branch
          %133 = sbr.rel (%p131) target = $region28
        $region27: #{paligemma_forward.13} parent=23 // pred_region
          %p134 = scmp.lt.s32.totalorder %s12, 1
          %s135 = scalar_select %p134, %s12, 1
          %s136 = smul.addr %s135, 4
          %s137 = scalar_lea.vmem %s0, %s136
        $region28: #{paligemma_forward.13} parent=23 // pred_fallthru
          _
      $region24: #{paligemma_forward.13} parent=5 // pred_fallthru
        _
      %p138 = scmp.le.s32.totalorder 1, %s12
      %p139 = scmp.lt.s32.totalorder %s12, 3
      %p140 = pnand %p138, %p139
      %p141 = pneg %p140
      // Predicated region
      $region29: #{paligemma_forward.13} parent=5 // pred_check
        _
      $region30: #{paligemma_forward.13} parent=5 // pred_check_branch
        %143 = sbr.rel (%p140) target = $region32
      $region31: #{paligemma_forward.13} parent=5 // pred_region
        %s144 = ssub.s32 %s12, 1
        %p145 = scmp.lt.s32.totalorder %s17, 1
        %s146 = scalar_select %p145, %s17, 1
        %s147 = smul.addr %s146, 4
        %s148 = scalar_lea.vmem %s0, %s147
        %p149 = pneg %p38
        %p150 = pneg %p35
        %p151 = pneg %p59
        %p152 = pneg %p56
        %p153 = pneg %p80
        %p154 = pneg %p77
        %p155 = pneg %p106
        %p156 = pneg %p103
        %s157 = sand.u32 %s93, 1
        %s158 = scalar_lea.sflag [#allocation3], %s157
        %s159 = sand.u32 %s93, 1
        %s160 = smul.addr %s159, 8
        %s161 = scalar_lea.vmem [#allocation2], %s160
        %p162 = scmp.lt.s32.totalorder %s17, 1
        %s163 = scalar_select %p162, %s17, 1
        %s164 = smul.addr %s163, 4
        %s165 = scalar_lea.vmem %s0, %s164
        %v167 = vld [vmem:[%s165] sm:$0xf]
        %v168 = vunpack.c.l.bf16 %v167
        %v169 = vld [vmem:[%s1] sm:$0x1]
        %v170 = vmul.f32 %v168, %v168
        %vm171 = vcmask 261120
        %v172 = vsel %vm171, %v170, 0.0
        %173 = vadd.xlane.f32.xlu0 %v172
        %v174 = vpop.xlane.xlu0 %173
        %v175 = vrcp.pop 32.0
        %v176 = vmul.f32 32.0, %v175
        %v177 = vsub.f32 1.0, %v176
        %v178 = vmul.f32 %v175, %v177
        %v179 = vadd.f32 %v175, %v178
        %vm180 = vweird.f32 %v175
        %v181 = vsel %vm180, %v175, %v179
        %v182 = vmul.f32 %v174, %v181
        %v183 = vadd.f32 %v182, 1e-06
        %v184 = vrsqrt.pop %v183
        %v185 = vmul.f32 %v184, %v183
        %v186 = vmul.f32 %v185, %v184
        %v187 = vmul.f32 0.5, %v186
        %v188 = vsub.f32 1.5, %v187
        %v189 = vmul.f32 %v184, %v188
        %vm190 = vweird.f32 %v183
        %vm191 = vweird.f32 %v184
        %vm192 = vmor %vm190, %vm191
        %v193 = vsel %vm192, %v184, %v189
        %v194 = vmul.f32 %v168, %v193
        %v195 = vadd.f32 %v169, 1.0
        %v197 = vperm.slane %v195, 0
        %v199 = vmul.f32 %v194, %v197
        %v200 = vld [vmem:[%s2] sm:$0xf]
        %v201 = vld [vmem:[%s2 + $0x4] sm:$0xf]
        %v202 = vld [vmem:[%s2 + $0x8] sm:$0xf]
        %v203 = vld [vmem:[%s2 + $0xc] sm:$0xf]
        %v204 = vpack.c.bf16 %v199, %v199
        %v209 = vunpack.c.l.b16 %v200
        %v210 = vunpack.c.l.b16 %v201
        %v211 = vunpack.c.l.b16 %v202
        %v212 = vunpack.c.l.b16 %v203
        %v213 = vpack.c.b16 %v210, %v209
        %v214 = vpack.c.b16 %v212, %v211
        %v218 = vsel %vm171, %v204, 0
        %220 = vmatpush.bf16.msra.mxu0 0
        %221 = vmatpush.bf16.msra.mxu0 0
        %222 = vmatpush.bf16.msra.mxu0 0
        %223 = vmatpush.bf16.msra.mxu0 0
        %224 = vmatpush.bf16.msra.mxu0 0
        %225 = vmatpush.bf16.msra.mxu0 0
        %226 = vmatpush.bf16.msra.mxu0 %v214
        %227 = vmatpush.bf16.msra.mxu0 %v213
        %228 = vmatmul.bf16.gmra.mxu0 %v218
        %v229 = vpop.f32.mrf.mxu0
        %v230 = vadd.f32 0.0, %v229
        %v231 = vpop.f32.mrf.mxu0
        %232 = vdwg.mxu0
        %233 = vst [vmem:[%s161] sm:$0xff] %v230
        %s234 = sand.u32 %s93, 1
        %s235 = scalar_lea.sflag [#allocation3], %s234
        %s236 = sand.u32 %s93, 1
        %s237 = smul.addr %s236, 8
        %s238 = scalar_lea.vmem [#allocation2], %s237
        // Predicated region
        $region33: #{paligemma_forward.13} parent=31 // pred_check
          %p239 = pneg %p103
        $region34: #{paligemma_forward.13} parent=31 // pred_check_branch
          %241 = sbr.rel (%p239) target = $region36
        $region35: #{paligemma_forward.13} parent=31 // pred_region
          %243 = vsyncadd %s235, 0
          %s244 = smul.addr %s17, 8
          %s245 = scalar_lea.hbm %s3, %s244
          %s247 = sshll.u32 %s238, 4
          %s248 = int_to_ptr.vmem [resolvable:$true] %s247
          %s249 = sshll.u32 %s245, 4
          %s250 = int_to_ptr.hbm [resolvable:$true] %s249
          %252 = dma.vmem_to_hbm [thread:$0]  %s248, 128, %s250, %s235
        $region36: #{paligemma_forward.13} parent=31 // pred_fallthru
          _
      $region32: #{paligemma_forward.13} parent=5 // pred_fallthru
        _
      %p253 = scmp.le.s32.totalorder 2, %s12
      // Predicated region
      $region37: #{paligemma_forward.13} parent=5 // pred_check
        %p254 = pneg %p253
      $region38: #{paligemma_forward.13} parent=5 // pred_check_branch
        %256 = sbr.rel (%p254) target = $region40
      $region39: #{paligemma_forward.13} parent=5 // pred_region
        %s257 = ssub.s32 %s12, 2
        // Predicated region
        $region41: #{paligemma_forward.13} parent=39 // pred_check
          %p258 = pneg %p109
        $region42: #{paligemma_forward.13} parent=39 // pred_check_branch
          %260 = sbr.rel (%p258) target = $region44
        $region43: #{paligemma_forward.13} parent=39 // pred_region
          %s261 = sand.u32 %s94, 1
          %s262 = scalar_lea.sflag [#allocation3], %s261
          %s263 = sand.u32 %s94, 1
          %s264 = smul.addr %s263, 8
          %s265 = scalar_lea.vmem [#allocation2], %s264
          %267 = dma.done %s262, 128
        $region44: #{paligemma_forward.13} parent=39 // pred_fallthru
          _
      $region40: #{paligemma_forward.13} parent=5 // pred_fallthru
        _
    $region6: #{paligemma_forward.13} parent=1 // loop_footer
      %s16 = sadd.s32 1, %s12
    $region7: #{paligemma_forward.13} parent=1 // loop_footer_branch
      %11 = sbr.rel target = $region3
    $region8: #{paligemma_forward.13} parent=1 // loop_exit
      _
    %268 = vsyncpa [#allocation3], 1
    %s269 = scalar_lea.sflag [#allocation3], 1
    %270 = vsyncpa %s269, 1

// kernel: paligemma_forward.11
$region0: #{paligemma_forward.11}
  #allocation0 [shape = 'u32[]', space=smem, size = 0x4, offset = 0x4, fixed_abs, tag = 'smem constant byte address 0x4 - core index']
  #allocation1 [shape = 'u32[72,128]{1,0:T(1,128)}', space=vmem, size = 0x9000, scoped, tag = 'internal scratch']
  %s0 = inlined_call_operand.vmem [shape: bf16[16,32], index: 0, kind: input, shape index: {}]
  %s1 = inlined_call_operand.vmem [shape: f32[16,32], index: 1, kind: input, shape index: {}]
  %s2 = inlined_call_operand.vmem [shape: f32[16,32], index: 2, kind: input, shape index: {}]
  %s3 = inlined_call_operand.vmem [shape: bf16[32,32], index: 3, kind: input, shape index: {}]
  %s4 = inlined_call_operand.vmem [shape: f32[1,32], index: 4, kind: input, shape index: {}]
  %s5 = inlined_call_operand.vmem [shape: bf16[32,96], index: 5, kind: input, shape index: {}]
  %s6 = inlined_call_operand.vmem [shape: bf16[32,32], index: 6, kind: input, shape index: {}]
  %s7 = inlined_call_operand.vmem [shape: f32[1,32], index: 7, kind: input, shape index: {}]
  %s8 = inlined_call_operand.vmem [shape: bf16[32,128], index: 8, kind: input, shape index: {}]
  %s9 = inlined_call_operand.vmem [shape: bf16[64,32], index: 9, kind: input, shape index: {}]
  %s10 = inlined_call_operand.vmem [shape: bf16[16,32], index: 10, kind: output, shape index: {}]
  %s11 = sld [smem:[#allocation0]]
  $region50: #{paligemma_forward.11} parent=0
    _
  %s13 = ssub.s32 1, %s11
  %s14 = scalar_select 0, %s13, %s11
  // Predicated region
  $region2: #{paligemma_forward.11} parent=0 // pred_check
    _
  $region3: #{paligemma_forward.11} parent=0 // pred_check_branch
    %16 = sbr.rel (0) target = $region5
  $region4: #{paligemma_forward.11} parent=0 // pred_region
    _
  $region5: #{paligemma_forward.11} parent=0 // pred_fallthru
    _
  // Predicated region
  $region6: #{paligemma_forward.11} parent=0 // pred_check
    _
  $region7: #{paligemma_forward.11} parent=0 // pred_check_branch
    %18 = sbr.rel (0) target = $region9
  $region8: #{paligemma_forward.11} parent=0 // pred_region
    _
  $region9: #{paligemma_forward.11} parent=0 // pred_fallthru
    _
  // Predicated region
  $region10: #{paligemma_forward.11} parent=0 // pred_check
    _
  $region11: #{paligemma_forward.11} parent=0 // pred_check_branch
    %20 = sbr.rel (0) target = $region13
  $region12: #{paligemma_forward.11} parent=0 // pred_region
    _
  $region13: #{paligemma_forward.11} parent=0 // pred_fallthru
    _
  // Predicated region
  $region14: #{paligemma_forward.11} parent=0 // pred_check
    _
  $region15: #{paligemma_forward.11} parent=0 // pred_check_branch
    %22 = sbr.rel (0) target = $region17
  $region16: #{paligemma_forward.11} parent=0 // pred_region
    _
  $region17: #{paligemma_forward.11} parent=0 // pred_fallthru
    _
  // Predicated region
  $region18: #{paligemma_forward.11} parent=0 // pred_check
    _
  $region19: #{paligemma_forward.11} parent=0 // pred_check_branch
    %24 = sbr.rel (0) target = $region21
  $region20: #{paligemma_forward.11} parent=0 // pred_region
    _
  $region21: #{paligemma_forward.11} parent=0 // pred_fallthru
    _
  // Predicated region
  $region22: #{paligemma_forward.11} parent=0 // pred_check
    _
  $region23: #{paligemma_forward.11} parent=0 // pred_check_branch
    %26 = sbr.rel (0) target = $region25
  $region24: #{paligemma_forward.11} parent=0 // pred_region
    _
  $region25: #{paligemma_forward.11} parent=0 // pred_fallthru
    _
  // Predicated region
  $region26: #{paligemma_forward.11} parent=0 // pred_check
    _
  $region27: #{paligemma_forward.11} parent=0 // pred_check_branch
    %28 = sbr.rel (0) target = $region29
  $region28: #{paligemma_forward.11} parent=0 // pred_region
    _
  $region29: #{paligemma_forward.11} parent=0 // pred_fallthru
    _
  // Predicated region
  $region30: #{paligemma_forward.11} parent=0 // pred_check
    _
  $region31: #{paligemma_forward.11} parent=0 // pred_check_branch
    %30 = sbr.rel (0) target = $region33
  $region32: #{paligemma_forward.11} parent=0 // pred_region
    _
  $region33: #{paligemma_forward.11} parent=0 // pred_fallthru
    _
  // Predicated region
  $region34: #{paligemma_forward.11} parent=0 // pred_check
    _
  $region35: #{paligemma_forward.11} parent=0 // pred_check_branch
    %32 = sbr.rel (0) target = $region37
  $region36: #{paligemma_forward.11} parent=0 // pred_region
    _
  $region37: #{paligemma_forward.11} parent=0 // pred_fallthru
    _
  // Predicated region
  $region38: #{paligemma_forward.11} parent=0 // pred_check
    _
  $region39: #{paligemma_forward.11} parent=0 // pred_check_branch
    %34 = sbr.rel (0) target = $region41
  $region40: #{paligemma_forward.11} parent=0 // pred_region
    _
  $region41: #{paligemma_forward.11} parent=0 // pred_fallthru
    _
  %v36 = vld [vmem:[%s0] sm:$0xf]
  %v37 = vld [vmem:[%s0 + $0x4] sm:$0xf]
  %v38 = vunpack.c.l.bf16 %v36
  %v39 = vunpack.c.l.bf16 %v37
  %v40 = vld [vmem:[%s4] sm:$0x1]
  %v41 = vmul.f32 %v38, %v38
  %v42 = vmul.f32 %v39, %v39
  %vm43 = vcmask 261120
  %v44 = vsel %vm43, %v41, 0.0
  %45 = vadd.xlane.f32.xlu0 %v44
  %v46 = vpop.xlane.xlu0 %45
  %v47 = vsel %vm43, %v42, 0.0
  %48 = vadd.xlane.f32.xlu0 %v47
  %v49 = vpop.xlane.xlu0 %48
  %v50 = vrcp.pop 32.0
  %v51 = vmul.f32 32.0, %v50
  %v52 = vsub.f32 1.0, %v51
  %v53 = vmul.f32 %v50, %v52
  %v54 = vadd.f32 %v50, %v53
  %vm55 = vweird.f32 %v50
  %v56 = vsel %vm55, %v50, %v54
  %v57 = vmul.f32 %v46, %v56
  %v58 = vmul.f32 %v49, %v56
  %v59 = vadd.f32 %v57, 1e-06
  %v60 = vadd.f32 %v58, 1e-06
  %v61 = vrsqrt.pop %v59
  %v62 = vmul.f32 %v61, %v59
  %v63 = vmul.f32 %v62, %v61
  %v64 = vmul.f32 0.5, %v63
  %v65 = vsub.f32 1.5, %v64
  %v66 = vmul.f32 %v61, %v65
  %vm67 = vweird.f32 %v59
  %vm68 = vweird.f32 %v61
  %vm69 = vmor %vm67, %vm68
  %v70 = vsel %vm69, %v61, %v66
  %v71 = vrsqrt.pop %v60
  %v72 = vmul.f32 %v71, %v60
  %v73 = vmul.f32 %v72, %v71
  %v74 = vmul.f32 0.5, %v73
  %v75 = vsub.f32 1.5, %v74
  %v76 = vmul.f32 %v71, %v75
  %vm77 = vweird.f32 %v60
  %vm78 = vweird.f32 %v71
  %vm79 = vmor %vm77, %vm78
  %v80 = vsel %vm79, %v71, %v76
  %v81 = vmul.f32 %v38, %v70
  %v82 = vmul.f32 %v39, %v80
  %v83 = vadd.f32 %v40, 1.0
  %v85 = vperm.slane %v83, 0
  %v87 = vmul.f32 %v81, %v85
  %v88 = vmul.f32 %v82, %v85
  %v89 = vld [vmem:[%s5] sm:$0xf]
  %v90 = vld [vmem:[%s5 + $0x4] sm:$0xf]
  %v91 = vld [vmem:[%s5 + $0x8] sm:$0xf]
  %v92 = vld [vmem:[%s5 + $0xc] sm:$0xf]
  %v93 = vpack.c.bf16 %v88, %v87
  %v98 = vunpack.c.l.b16 %v89
  %v99 = vunpack.c.l.b16 %v90
  %v100 = vunpack.c.l.b16 %v91
  %v101 = vunpack.c.l.b16 %v92
  %v102 = vpack.c.b16 %v99, %v98
  %v103 = vpack.c.b16 %v101, %v100
  %v107 = vsel %vm43, %v93, 0
  %109 = vmatpush.bf16.msra.mxu0 0
  %110 = vmatpush.bf16.msra.mxu0 0
  %111 = vmatpush.bf16.msra.mxu0 0
  %112 = vmatpush.bf16.msra.mxu0 0
  %113 = vmatpush.bf16.msra.mxu0 0
  %114 = vmatpush.bf16.msra.mxu0 0
  %115 = vmatpush.bf16.msra.mxu0 %v103
  %116 = vmatpush.bf16.msra.mxu0 %v102
  %117 = vmatmul.bf16.gmra.mxu0 %v107
  %v118 = vpop.f32.mrf.mxu0
  %v119 = vadd.f32 0.0, %v118
  %v120 = vpop.f32.mrf.mxu0
  %v121 = vadd.f32 0.0, %v120
  %122 = vdwg.mxu0
  %v123 = vld [vmem:[%s1] sm:$0xff]
  %v124 = vld [vmem:[%s1 + $0x8] sm:$0xff]
  %v125 = vld [vmem:[%s2] sm:$0xff]
  %v126 = vld [vmem:[%s2 + $0x8] sm:$0xff]
  %v127 = vld [vmem:[%s3] sm:$0xf]
  %v128 = vld [vmem:[%s3 + $0x4] sm:$0xf]
  %v129 = vld [vmem:[%s3 + $0x8] sm:$0xf]
  %v130 = vld [vmem:[%s3 + $0xc] sm:$0xf]
  %v131 = vmul.f32 %v119, %v123
  %v132 = vmul.f32 %v121, %v124
  %v133 = vpack.c.bf16 %v121, %v119
  %v138 = vunpack.c.l.b16 %v127
  %v139 = vunpack.c.l.b16 %v128
  %v140 = vunpack.c.l.b16 %v129
  %v141 = vunpack.c.l.b16 %v130
  %v142 = vpack.c.b16 %v139, %v138
  %v143 = vpack.c.b16 %v141, %v140
  %v147 = vsel %vm43, %v133, 0
  %149 = vmatpush.bf16.msra.mxu0 0
  %150 = vmatpush.bf16.msra.mxu0 0
  %151 = vmatpush.bf16.msra.mxu0 0
  %152 = vmatpush.bf16.msra.mxu0 0
  %153 = vmatpush.bf16.msra.mxu0 0
  %154 = vmatpush.bf16.msra.mxu0 0
  %155 = vmatpush.bf16.msra.mxu0 %v143
  %156 = vmatpush.bf16.msra.mxu0 %v142
  %157 = vmatmul.bf16.gmra.mxu0 %v147
  %v158 = vpop.f32.mrf.mxu0
  %v159 = vadd.f32 0.0, %v158
  %v160 = vpop.f32.mrf.mxu0
  %v161 = vadd.f32 0.0, %v160
  %162 = vdwg.mxu0
  %v163 = vmul.f32 %v159, %v125
  %v164 = vmul.f32 %v161, %v126
  %v165 = vadd.f32 %v131, %v163
  %v166 = vadd.f32 %v132, %v164
  %169 = vrot.lane.b32.xlu0 %v123, 32
  %v170 = vpop.permute.xlu0 %169
  %171 = vrot.lane.b32.xlu0 %v124, 32
  %v172 = vpop.permute.xlu0 %171
  %v175 = vmul.f32 %v119, %v170
  %v176 = vmul.f32 %v121, %v172
  %178 = vrot.lane.b32.xlu0 %v133, 96
  %v179 = vpop.permute.xlu0 %178
  %v181 = vsel %vm43, %v179, 0
  %183 = vmatpush.bf16.msra.mxu0 0
  %184 = vmatpush.bf16.msra.mxu0 0
  %185 = vmatpush.bf16.msra.mxu0 0
  %186 = vmatpush.bf16.msra.mxu0 0
  %187 = vmatpush.bf16.msra.mxu0 0
  %188 = vmatpush.bf16.msra.mxu0 0
  %189 = vmatpush.bf16.msra.mxu0 %v143
  %190 = vmatpush.bf16.msra.mxu0 %v142
  %191 = vmatmul.bf16.gmra.mxu0 %v181
  %v192 = vpop.f32.mrf.mxu0
  %v193 = vadd.f32 0.0, %v192
  %v194 = vpop.f32.mrf.mxu0
  %v195 = vadd.f32 0.0, %v194
  %196 = vdwg.mxu0
  %v197 = vmul.f32 %v193, %v125
  %v198 = vmul.f32 %v195, %v126
  %201 = vrot.lane.b32.xlu0 %v197, 32
  %v202 = vpop.permute.xlu0 %201
  %203 = vrot.lane.b32.xlu0 %v198, 32
  %v204 = vpop.permute.xlu0 %203
  %v207 = vadd.f32 %v175, %v202
  %v208 = vadd.f32 %v176, %v204
  %211 = vrot.lane.b32.xlu0 %v165, 120
  %v212 = vpop.permute.xlu0 %211
  %213 = vrot.lane.b32.xlu0 %v166, 120
  %v214 = vpop.permute.xlu0 %213
  %217 = vrot.lane.b32.xlu0 %v165, 112
  %v218 = vpop.permute.xlu0 %217
  %219 = vrot.lane.b32.xlu0 %v166, 112
  %v220 = vpop.permute.xlu0 %219
  %223 = vrot.lane.b32.xlu0 %v165, 104
  %v224 = vpop.permute.xlu0 %223
  %225 = vrot.lane.b32.xlu0 %v166, 104
  %v226 = vpop.permute.xlu0 %225
  %v229 = vpack.c.bf16 %v165, %v165
  %v230 = vpack.c.bf16 %v166, %v166
  %v231 = vpack.c.bf16 %v212, %v212
  %v232 = vpack.c.bf16 %v214, %v214
  %v233 = vpack.c.bf16 %v218, %v218
  %v234 = vpack.c.bf16 %v220, %v220
  %v235 = vpack.c.bf16 %v224, %v224
  %v236 = vpack.c.bf16 %v226, %v226
  %239 = vrot.lane.b32.xlu0 %v207, 120
  %v240 = vpop.permute.xlu0 %239
  %241 = vrot.lane.b32.xlu0 %v208, 120
  %v242 = vpop.permute.xlu0 %241
  %245 = vrot.lane.b32.xlu0 %v207, 112
  %v246 = vpop.permute.xlu0 %245
  %247 = vrot.lane.b32.xlu0 %v208, 112
  %v248 = vpop.permute.xlu0 %247
  %251 = vrot.lane.b32.xlu0 %v207, 104
  %v252 = vpop.permute.xlu0 %251
  %253 = vrot.lane.b32.xlu0 %v208, 104
  %v254 = vpop.permute.xlu0 %253
  %v257 = vpack.c.bf16 %v207, %v207
  %v258 = vpack.c.bf16 %v208, %v208
  %v259 = vpack.c.bf16 %v240, %v240
  %v260 = vpack.c.bf16 %v242, %v242
  %v261 = vpack.c.bf16 %v246, %v246
  %v262 = vpack.c.bf16 %v248, %v248
  %v263 = vpack.c.bf16 %v252, %v252
  %v264 = vpack.c.bf16 %v254, %v254
  %267 = vrot.lane.b32.xlu0 %v119, 120
  %v268 = vpop.permute.xlu0 %267
  %269 = vrot.lane.b32.xlu0 %v121, 120
  %v270 = vpop.permute.xlu0 %269
  %273 = vrot.lane.b32.xlu0 %v119, 112
  %v274 = vpop.permute.xlu0 %273
  %275 = vrot.lane.b32.xlu0 %v121, 112
  %v276 = vpop.permute.xlu0 %275
  %279 = vrot.lane.b32.xlu0 %v119, 104
  %v280 = vpop.permute.xlu0 %279
  %281 = vrot.lane.b32.xlu0 %v121, 104
  %v282 = vpop.permute.xlu0 %281
  %v285 = vpack.c.bf16 %v119, %v119
  %v286 = vpack.c.bf16 %v121, %v121
  %v287 = vpack.c.bf16 %v268, %v268
  %v288 = vpack.c.bf16 %v270, %v270
  %v289 = vpack.c.bf16 %v274, %v274
  %v290 = vpack.c.bf16 %v276, %v276
  %v291 = vpack.c.bf16 %v280, %v280
  %v292 = vpack.c.bf16 %v282, %v282
  %v294 = vunpack.c.l.b16 %v257
  %v295 = vpack.c.b16 %v294, %v294
  %296 = vrot.lane.b32.xlu0 %v295, 96
  %v297 = vpop.permute.xlu0 %296
  %vm298 = vcmask 64512
  %v300 = vsel %vm298, %v229, 0
  %v303 = vsel %vm298, %v297, 0
  %305 = vmatpush.bf16.xpose.msra.mxu0 0
  %306 = vmatpush.bf16.xpose.msra.mxu0 0
  %307 = vmatpush.bf16.xpose.msra.mxu0 0
  %308 = vmatpush.bf16.xpose.msra.mxu0 0
  %309 = vmatpush.bf16.xpose.msra.mxu0 0
  %310 = vmatpush.bf16.xpose.msra.mxu0 0
  %311 = vmatpush.bf16.xpose.msra.mxu0 0
  %312 = vmatpush.bf16.xpose.msra.mxu0 %v303
  %313 = vmatmul.bf16.gmra.mxu0 %v300
  %v314 = vpop.f32.mrf.mxu0
  %v315 = vadd.f32 0.0, %v314
  %v316 = vpop.f32.mrf.mxu0
  %317 = vdwg.mxu0
  %v319 = vunpack.c.l.b16 %v258
  %v320 = vpack.c.b16 %v319, %v319
  %321 = vrot.lane.b32.xlu0 %v320, 96
  %v322 = vpop.permute.xlu0 %321
  %v324 = vsel %vm298, %v230, 0
  %v327 = vsel %vm298, %v322, 0
  %329 = vmatpush.bf16.xpose.msra.mxu0 0
  %330 = vmatpush.bf16.xpose.msra.mxu0 0
  %331 = vmatpush.bf16.xpose.msra.mxu0 0
  %332 = vmatpush.bf16.xpose.msra.mxu0 0
  %333 = vmatpush.bf16.xpose.msra.mxu0 0
  %334 = vmatpush.bf16.xpose.msra.mxu0 0
  %335 = vmatpush.bf16.xpose.msra.mxu0 0
  %336 = vmatpush.bf16.xpose.msra.mxu0 %v327
  %337 = vmatmul.bf16.gmra.mxu0 %v324
  %v338 = vpop.f32.mrf.mxu0
  %v339 = vadd.f32 0.0, %v338
  %v340 = vpop.f32.mrf.mxu0
  %341 = vdwg.mxu0
  %v343 = vunpack.c.l.b16 %v259
  %v344 = vpack.c.b16 %v343, %v343
  %345 = vrot.lane.b32.xlu0 %v344, 96
  %v346 = vpop.permute.xlu0 %345
  %v348 = vsel %vm298, %v231, 0
  %v351 = vsel %vm298, %v346, 0
  %353 = vmatpush.bf16.xpose.msra.mxu0 0
  %354 = vmatpush.bf16.xpose.msra.mxu0 0
  %355 = vmatpush.bf16.xpose.msra.mxu0 0
  %356 = vmatpush.bf16.xpose.msra.mxu0 0
  %357 = vmatpush.bf16.xpose.msra.mxu0 0
  %358 = vmatpush.bf16.xpose.msra.mxu0 0
  %359 = vmatpush.bf16.xpose.msra.mxu0 0
  %360 = vmatpush.bf16.xpose.msra.mxu0 %v351
  %361 = vmatmul.bf16.gmra.mxu0 %v348
  %v362 = vpop.f32.mrf.mxu0
  %v363 = vadd.f32 0.0, %v362
  %v364 = vpop.f32.mrf.mxu0
  %365 = vdwg.mxu0
  %v367 = vunpack.c.l.b16 %v260
  %v368 = vpack.c.b16 %v367, %v367
  %369 = vrot.lane.b32.xlu0 %v368, 96
  %v370 = vpop.permute.xlu0 %369
  %v372 = vsel %vm298, %v232, 0
  %v375 = vsel %vm298, %v370, 0
  %377 = vmatpush.bf16.xpose.msra.mxu0 0
  %378 = vmatpush.bf16.xpose.msra.mxu0 0
  %379 = vmatpush.bf16.xpose.msra.mxu0 0
  %380 = vmatpush.bf16.xpose.msra.mxu0 0
  %381 = vmatpush.bf16.xpose.msra.mxu0 0
  %382 = vmatpush.bf16.xpose.msra.mxu0 0
  %383 = vmatpush.bf16.xpose.msra.mxu0 0
  %384 = vmatpush.bf16.xpose.msra.mxu0 %v375
  %385 = vmatmul.bf16.gmra.mxu0 %v372
  %v386 = vpop.f32.mrf.mxu0
  %v387 = vadd.f32 0.0, %v386
  %v388 = vpop.f32.mrf.mxu0
  %389 = vdwg.mxu0
  %v391 = vunpack.c.l.b16 %v261
  %v392 = vpack.c.b16 %v391, %v391
  %393 = vrot.lane.b32.xlu0 %v392, 96
  %v394 = vpop.permute.xlu0 %393
  %v396 = vsel %vm298, %v233, 0
  %v399 = vsel %vm298, %v394, 0
  %401 = vmatpush.bf16.xpose.msra.mxu0 0
  %402 = vmatpush.bf16.xpose.msra.mxu0 0
  %403 = vmatpush.bf16.xpose.msra.mxu0 0
  %404 = vmatpush.bf16.xpose.msra.mxu0 0
  %405 = vmatpush.bf16.xpose.msra.mxu0 0
  %406 = vmatpush.bf16.xpose.msra.mxu0 0
  %407 = vmatpush.bf16.xpose.msra.mxu0 0
  %408 = vmatpush.bf16.xpose.msra.mxu0 %v399
  %409 = vmatmul.bf16.gmra.mxu0 %v396
  %v410 = vpop.f32.mrf.mxu0
  %v411 = vadd.f32 0.0, %v410
  %v412 = vpop.f32.mrf.mxu0
  %413 = vdwg.mxu0
  %v415 = vunpack.c.l.b16 %v262
  %v416 = vpack.c.b16 %v415, %v415
  %417 = vrot.lane.b32.xlu0 %v416, 96
  %v418 = vpop.permute.xlu0 %417
  %v420 = vsel %vm298, %v234, 0
  %v423 = vsel %vm298, %v418, 0
  %425 = vmatpush.bf16.xpose.msra.mxu0 0
  %426 = vmatpush.bf16.xpose.msra.mxu0 0
  %427 = vmatpush.bf16.xpose.msra.mxu0 0
  %428 = vmatpush.bf16.xpose.msra.mxu0 0
  %429 = vmatpush.bf16.xpose.msra.mxu0 0
  %430 = vmatpush.bf16.xpose.msra.mxu0 0
  %431 = vmatpush.bf16.xpose.msra.mxu0 0
  %432 = vmatpush.bf16.xpose.msra.mxu0 %v423
  %433 = vmatmul.bf16.gmra.mxu0 %v420
  %v434 = vpop.f32.mrf.mxu0
  %v435 = vadd.f32 0.0, %v434
  %v436 = vpop.f32.mrf.mxu0
  %437 = vdwg.mxu0
  %v439 = vunpack.c.l.b16 %v263
  %v440 = vpack.c.b16 %v439, %v439
  %441 = vrot.lane.b32.xlu0 %v440, 96
  %v442 = vpop.permute.xlu0 %441
  %v444 = vsel %vm298, %v235, 0
  %v447 = vsel %vm298, %v442, 0
  %449 = vmatpush.bf16.xpose.msra.mxu0 0
  %450 = vmatpush.bf16.xpose.msra.mxu0 0
  %451 = vmatpush.bf16.xpose.msra.mxu0 0
  %452 = vmatpush.bf16.xpose.msra.mxu0 0
  %453 = vmatpush.bf16.xpose.msra.mxu0 0
  %454 = vmatpush.bf16.xpose.msra.mxu0 0
  %455 = vmatpush.bf16.xpose.msra.mxu0 0
  %456 = vmatpush.bf16.xpose.msra.mxu0 %v447
  %457 = vmatmul.bf16.gmra.mxu0 %v444
  %v458 = vpop.f32.mrf.mxu0
  %v459 = vadd.f32 0.0, %v458
  %v460 = vpop.f32.mrf.mxu0
  %461 = vdwg.mxu0
  %v463 = vunpack.c.l.b16 %v264
  %v464 = vpack.c.b16 %v463, %v463
  %465 = vrot.lane.b32.xlu0 %v464, 96
  %v466 = vpop.permute.xlu0 %465
  %v468 = vsel %vm298, %v236, 0
  %v471 = vsel %vm298, %v466, 0
  %473 = vmatpush.bf16.xpose.msra.mxu0 0
  %474 = vmatpush.bf16.xpose.msra.mxu0 0
  %475 = vmatpush.bf16.xpose.msra.mxu0 0
  %476 = vmatpush.bf16.xpose.msra.mxu0 0
  %477 = vmatpush.bf16.xpose.msra.mxu0 0
  %478 = vmatpush.bf16.xpose.msra.mxu0 0
  %479 = vmatpush.bf16.xpose.msra.mxu0 0
  %480 = vmatpush.bf16.xpose.msra.mxu0 %v471
  %481 = vmatmul.bf16.gmra.mxu0 %v468
  %v482 = vpop.f32.mrf.mxu0
  %v483 = vadd.f32 0.0, %v482
  %v484 = vpop.f32.mrf.mxu0
  %485 = vdwg.mxu0
  %v486 = vmul.f32 %v315, 0.35355338
  %v487 = vmul.f32 %v339, 0.35355338
  %v488 = vmul.f32 %v363, 0.35355338
  %v489 = vmul.f32 %v387, 0.35355338
  %v490 = vmul.f32 %v411, 0.35355338
  %v491 = vmul.f32 %v435, 0.35355338
  %v492 = vmul.f32 %v459, 0.35355338
  %v493 = vmul.f32 %v483, 0.35355338
  %v494 = vsel %vm298, %v486, -inf
  %495 = vmax.xlane.f32.xlu0 %v494
  %v496 = vpop.xlane.xlu0 %495
  %v497 = vsel %vm298, %v487, -inf
  %498 = vmax.xlane.f32.xlu0 %v497
  %v499 = vpop.xlane.xlu0 %498
  %v500 = vsel %vm298, %v488, -inf
  %501 = vmax.xlane.f32.xlu0 %v500
  %v502 = vpop.xlane.xlu0 %501
  %v503 = vsel %vm298, %v489, -inf
  %504 = vmax.xlane.f32.xlu0 %v503
  %v505 = vpop.xlane.xlu0 %504
  %v506 = vsel %vm298, %v490, -inf
  %507 = vmax.xlane.f32.xlu0 %v506
  %v508 = vpop.xlane.xlu0 %507
  %v509 = vsel %vm298, %v491, -inf
  %510 = vmax.xlane.f32.xlu0 %v509
  %v511 = vpop.xlane.xlu0 %510
  %v512 = vsel %vm298, %v492, -inf
  %513 = vmax.xlane.f32.xlu0 %v512
  %v514 = vpop.xlane.xlu0 %513
  %v515 = vsel %vm298, %v493, -inf
  %516 = vmax.xlane.f32.xlu0 %v515
  %v517 = vpop.xlane.xlu0 %516
  %v518 = vsub.f32 %v486, %v496
  %v519 = vsub.f32 %v487, %v499
  %v520 = vsub.f32 %v488, %v502
  %v521 = vsub.f32 %v489, %v505
  %v522 = vsub.f32 %v490, %v508
  %v523 = vsub.f32 %v491, %v511
  %v524 = vsub.f32 %v492, %v514
  %v525 = vsub.f32 %v493, %v517
  %v526 = vmul.f32 %v518, 1.442695
  %v527 = vpow.pop %v526
  %v528 = vmul.f32 %v519, 1.442695
  %v529 = vpow.pop %v528
  %v530 = vmul.f32 %v520, 1.442695
  %v531 = vpow.pop %v530
  %v532 = vmul.f32 %v521, 1.442695
  %v533 = vpow.pop %v532
  %v534 = vmul.f32 %v522, 1.442695
  %v535 = vpow.pop %v534
  %v536 = vmul.f32 %v523, 1.442695
  %v537 = vpow.pop %v536
  %v538 = vmul.f32 %v524, 1.442695
  %v539 = vpow.pop %v538
  %v540 = vmul.f32 %v525, 1.442695
  %v541 = vpow.pop %v540
  %v542 = vsel %vm298, %v527, 0.0
  %543 = vadd.xlane.f32.xlu0 %v542
  %v544 = vpop.xlane.xlu0 %543
  %v545 = vsel %vm298, %v529, 0.0
  %546 = vadd.xlane.f32.xlu0 %v545
  %v547 = vpop.xlane.xlu0 %546
  %v548 = vsel %vm298, %v531, 0.0
  %549 = vadd.xlane.f32.xlu0 %v548
  %v550 = vpop.xlane.xlu0 %549
  %v551 = vsel %vm298, %v533, 0.0
  %552 = vadd.xlane.f32.xlu0 %v551
  %v553 = vpop.xlane.xlu0 %552
  %v554 = vsel %vm298, %v535, 0.0
  %555 = vadd.xlane.f32.xlu0 %v554
  %v556 = vpop.xlane.xlu0 %555
  %v557 = vsel %vm298, %v537, 0.0
  %558 = vadd.xlane.f32.xlu0 %v557
  %v559 = vpop.xlane.xlu0 %558
  %v560 = vsel %vm298, %v539, 0.0
  %561 = vadd.xlane.f32.xlu0 %v560
  %v562 = vpop.xlane.xlu0 %561
  %v563 = vsel %vm298, %v541, 0.0
  %564 = vadd.xlane.f32.xlu0 %v563
  %v565 = vpop.xlane.xlu0 %564
  %v566 = vrcp.pop %v544
  %v567 = vrcp.pop %v547
  %v568 = vrcp.pop %v550
  %v569 = vrcp.pop %v553
  %v570 = vrcp.pop %v556
  %v571 = vrcp.pop %v559
  %v572 = vrcp.pop %v562
  %v573 = vrcp.pop %v565
  %v574 = vmul.f32 %v527, %v566
  %v575 = vmul.f32 %v529, %v567
  %v576 = vmul.f32 %v531, %v568
  %v577 = vmul.f32 %v533, %v569
  %v578 = vmul.f32 %v535, %v570
  %v579 = vmul.f32 %v537, %v571
  %v580 = vmul.f32 %v539, %v572
  %v581 = vmul.f32 %v541, %v573
  %v582 = vpack.c.bf16 %v574, %v574
  %v583 = vpack.c.bf16 %v575, %v575
  %v584 = vpack.c.bf16 %v576, %v576
  %v585 = vpack.c.bf16 %v577, %v577
  %v586 = vpack.c.bf16 %v578, %v578
  %v587 = vpack.c.bf16 %v579, %v579
  %v588 = vpack.c.bf16 %v580, %v580
  %v589 = vpack.c.bf16 %v581, %v581
  %v591 = vunpack.c.l.b16 %v285
  %v592 = vpack.c.b16 %v591, %v591
  %593 = vrot.lane.b32.xlu0 %v592, 64
  %v594 = vpop.permute.xlu0 %593
  %v596 = vsel %vm298, %v582, 0
  %vm598 = vcmask 1043456
  %v600 = vsel %vm598, %v594, 0
  %602 = vmatpush.bf16.msra.mxu0 0
  %603 = vmatpush.bf16.msra.mxu0 0
  %604 = vmatpush.bf16.msra.mxu0 0
  %605 = vmatpush.bf16.msra.mxu0 0
  %606 = vmatpush.bf16.msra.mxu0 0
  %607 = vmatpush.bf16.msra.mxu0 0
  %608 = vmatpush.bf16.msra.mxu0 0
  %609 = vmatpush.bf16.msra.mxu0 %v600
  %610 = vmatmul.bf16.gmra.mxu0 %v596
  %v611 = vpop.f32.mrf.mxu0
  %v612 = vadd.f32 0.0, %v611
  %v613 = vpop.f32.mrf.mxu0
  %614 = vdwg.mxu0
  %v616 = vunpack.c.l.b16 %v286
  %v617 = vpack.c.b16 %v616, %v616
  %618 = vrot.lane.b32.xlu0 %v617, 64
  %v619 = vpop.permute.xlu0 %618
  %v621 = vsel %vm298, %v583, 0
  %v624 = vsel %vm598, %v619, 0
  %626 = vmatpush.bf16.msra.mxu0 0
  %627 = vmatpush.bf16.msra.mxu0 0
  %628 = vmatpush.bf16.msra.mxu0 0
  %629 = vmatpush.bf16.msra.mxu0 0
  %630 = vmatpush.bf16.msra.mxu0 0
  %631 = vmatpush.bf16.msra.mxu0 0
  %632 = vmatpush.bf16.msra.mxu0 0
  %633 = vmatpush.bf16.msra.mxu0 %v624
  %634 = vmatmul.bf16.gmra.mxu0 %v621
  %v635 = vpop.f32.mrf.mxu0
  %v636 = vadd.f32 0.0, %v635
  %v637 = vpop.f32.mrf.mxu0
  %638 = vdwg.mxu0
  %v640 = vunpack.c.l.b16 %v287
  %v641 = vpack.c.b16 %v640, %v640
  %642 = vrot.lane.b32.xlu0 %v641, 64
  %v643 = vpop.permute.xlu0 %642
  %v645 = vsel %vm298, %v584, 0
  %v648 = vsel %vm598, %v643, 0
  %650 = vmatpush.bf16.msra.mxu0 0
  %651 = vmatpush.bf16.msra.mxu0 0
  %652 = vmatpush.bf16.msra.mxu0 0
  %653 = vmatpush.bf16.msra.mxu0 0
  %654 = vmatpush.bf16.msra.mxu0 0
  %655 = vmatpush.bf16.msra.mxu0 0
  %656 = vmatpush.bf16.msra.mxu0 0
  %657 = vmatpush.bf16.msra.mxu0 %v648
  %658 = vmatmul.bf16.gmra.mxu0 %v645
  %v659 = vpop.f32.mrf.mxu0
  %v660 = vadd.f32 0.0, %v659
  %v661 = vpop.f32.mrf.mxu0
  %662 = vdwg.mxu0
  %v664 = vunpack.c.l.b16 %v288
  %v665 = vpack.c.b16 %v664, %v664
  %666 = vrot.lane.b32.xlu0 %v665, 64
  %v667 = vpop.permute.xlu0 %666
  %v669 = vsel %vm298, %v585, 0
  %v672 = vsel %vm598, %v667, 0
  %674 = vmatpush.bf16.msra.mxu0 0
  %675 = vmatpush.bf16.msra.mxu0 0
  %676 = vmatpush.bf16.msra.mxu0 0
  %677 = vmatpush.bf16.msra.mxu0 0
  %678 = vmatpush.bf16.msra.mxu0 0
  %679 = vmatpush.bf16.msra.mxu0 0
  %680 = vmatpush.bf16.msra.mxu0 0
  %681 = vmatpush.bf16.msra.mxu0 %v672
  %682 = vmatmul.bf16.gmra.mxu0 %v669
  %v683 = vpop.f32.mrf.mxu0
  %v684 = vadd.f32 0.0, %v683
  %v685 = vpop.f32.mrf.mxu0
  %686 = vdwg.mxu0
  %v688 = vunpack.c.l.b16 %v289
  %v689 = vpack.c.b16 %v688, %v688
  %690 = vrot.lane.b32.xlu0 %v689, 64
  %v691 = vpop.permute.xlu0 %690
  %v693 = vsel %vm298, %v586, 0
  %v696 = vsel %vm598, %v691, 0
  %698 = vmatpush.bf16.msra.mxu0 0
  %699 = vmatpush.bf16.msra.mxu0 0
  %700 = vmatpush.bf16.msra.mxu0 0
  %701 = vmatpush.bf16.msra.mxu0 0
  %702 = vmatpush.bf16.msra.mxu0 0
  %703 = vmatpush.bf16.msra.mxu0 0
  %704 = vmatpush.bf16.msra.mxu0 0
  %705 = vmatpush.bf16.msra.mxu0 %v696
  %706 = vmatmul.bf16.gmra.mxu0 %v693
  %v707 = vpop.f32.mrf.mxu0
  %v708 = vadd.f32 0.0, %v707
  %v709 = vpop.f32.mrf.mxu0
  %710 = vdwg.mxu0
  %v712 = vunpack.c.l.b16 %v290
  %v713 = vpack.c.b16 %v712, %v712
  %714 = vrot.lane.b32.xlu0 %v713, 64
  %v715 = vpop.permute.xlu0 %714
  %v717 = vsel %vm298, %v587, 0
  %v720 = vsel %vm598, %v715, 0
  %722 = vmatpush.bf16.msra.mxu0 0
  %723 = vmatpush.bf16.msra.mxu0 0
  %724 = vmatpush.bf16.msra.mxu0 0
  %725 = vmatpush.bf16.msra.mxu0 0
  %726 = vmatpush.bf16.msra.mxu0 0
  %727 = vmatpush.bf16.msra.mxu0 0
  %728 = vmatpush.bf16.msra.mxu0 0
  %729 = vmatpush.bf16.msra.mxu0 %v720
  %730 = vmatmul.bf16.gmra.mxu0 %v717
  %v731 = vpop.f32.mrf.mxu0
  %v732 = vadd.f32 0.0, %v731
  %v733 = vpop.f32.mrf.mxu0
  %734 = vdwg.mxu0
  %v736 = vunpack.c.l.b16 %v291
  %v737 = vpack.c.b16 %v736, %v736
  %738 = vrot.lane.b32.xlu0 %v737, 64
  %v739 = vpop.permute.xlu0 %738
  %v741 = vsel %vm298, %v588, 0
  %v744 = vsel %vm598, %v739, 0
  %746 = vmatpush.bf16.msra.mxu0 0
  %747 = vmatpush.bf16.msra.mxu0 0
  %748 = vmatpush.bf16.msra.mxu0 0
  %749 = vmatpush.bf16.msra.mxu0 0
  %750 = vmatpush.bf16.msra.mxu0 0
  %751 = vmatpush.bf16.msra.mxu0 0
  %752 = vmatpush.bf16.msra.mxu0 0
  %753 = vmatpush.bf16.msra.mxu0 %v744
  %754 = vmatmul.bf16.gmra.mxu0 %v741
  %v755 = vpop.f32.mrf.mxu0
  %v756 = vadd.f32 0.0, %v755
  %v757 = vpop.f32.mrf.mxu0
  %758 = vdwg.mxu0
  %v760 = vunpack.c.l.b16 %v292
  %v761 = vpack.c.b16 %v760, %v760
  %762 = vrot.lane.b32.xlu0 %v761, 64
  %v763 = vpop.permute.xlu0 %762
  %v765 = vsel %vm298, %v589, 0
  %v768 = vsel %vm598, %v763, 0
  %770 = vmatpush.bf16.msra.mxu0 0
  %771 = vmatpush.bf16.msra.mxu0 0
  %772 = vmatpush.bf16.msra.mxu0 0
  %773 = vmatpush.bf16.msra.mxu0 0
  %774 = vmatpush.bf16.msra.mxu0 0
  %775 = vmatpush.bf16.msra.mxu0 0
  %776 = vmatpush.bf16.msra.mxu0 0
  %777 = vmatpush.bf16.msra.mxu0 %v768
  %778 = vmatmul.bf16.gmra.mxu0 %v765
  %v779 = vpop.f32.mrf.mxu0
  %v780 = vadd.f32 0.0, %v779
  %v781 = vpop.f32.mrf.mxu0
  %782 = vdwg.mxu0
  %785 = vrot.lane.b32.xlu0 %v660, 8
  %v786 = vpop.permute.xlu0 %785
  %787 = vrot.lane.b32.xlu0 %v684, 8
  %v788 = vpop.permute.xlu0 %787
  %793 = vrot.lane.b32.xlu0 %v708, 16
  %v794 = vpop.permute.xlu0 %793
  %795 = vrot.lane.b32.xlu0 %v732, 16
  %v796 = vpop.permute.xlu0 %795
  %801 = vrot.lane.b32.xlu0 %v756, 24
  %v802 = vpop.permute.xlu0 %801
  %803 = vrot.lane.b32.xlu0 %v780, 24
  %v804 = vpop.permute.xlu0 %803
  %v807 = vsel %vm298, %v612, %v786
  %v808 = vsel %vm298, %v636, %v788
  %vm809 = vcmask 130048
  %v810 = vsel %vm809, %v807, %v794
  %v811 = vsel %vm809, %v808, %v796
  %vm812 = vcmask 195584
  %v813 = vsel %vm812, %v810, %v802
  %v814 = vsel %vm812, %v811, %v804
  %v815 = vpack.c.bf16 %v814, %v813
  %v816 = vld [vmem:[%s6] sm:$0xf]
  %v817 = vld [vmem:[%s6 + $0x4] sm:$0xf]
  %v818 = vld [vmem:[%s6 + $0x8] sm:$0xf]
  %v819 = vld [vmem:[%s6 + $0xc] sm:$0xf]
  %v824 = vunpack.c.l.b16 %v816
  %v825 = vunpack.c.l.b16 %v817
  %v826 = vunpack.c.l.b16 %v818
  %v827 = vunpack.c.l.b16 %v819
  %v828 = vpack.c.b16 %v825, %v824
  %v829 = vpack.c.b16 %v827, %v826
  %v833 = vsel %vm43, %v815, 0
  %835 = vmatpush.bf16.msra.mxu0 0
  %836 = vmatpush.bf16.msra.mxu0 0
  %837 = vmatpush.bf16.msra.mxu0 0
  %838 = vmatpush.bf16.msra.mxu0 0
  %839 = vmatpush.bf16.msra.mxu0 0
  %840 = vmatpush.bf16.msra.mxu0 0
  %841 = vmatpush.bf16.msra.mxu0 %v829
  %842 = vmatpush.bf16.msra.mxu0 %v828
  %843 = vmatmul.bf16.gmra.mxu0 %v833
  %v844 = vpop.f32.mrf.mxu0
  %v845 = vadd.f32 0.0, %v844
  %v846 = vpop.f32.mrf.mxu0
  %v847 = vadd.f32 0.0, %v846
  %848 = vdwg.mxu0
  %v849 = vadd.f32 %v38, %v845
  %v850 = vadd.f32 %v39, %v847
  %v851 = vld [vmem:[%s7] sm:$0x1]
  %v852 = vmul.f32 %v849, %v849
  %v853 = vmul.f32 %v850, %v850
  %v854 = vsel %vm43, %v852, 0.0
  %855 = vadd.xlane.f32.xlu0 %v854
  %v856 = vpop.xlane.xlu0 %855
  %v857 = vsel %vm43, %v853, 0.0
  %858 = vadd.xlane.f32.xlu0 %v857
  %v859 = vpop.xlane.xlu0 %858
  %v860 = vmul.f32 %v856, %v56
  %v861 = vmul.f32 %v859, %v56
  %v862 = vadd.f32 %v860, 1e-06
  %v863 = vadd.f32 %v861, 1e-06
  %v864 = vrsqrt.pop %v862
  %v865 = vmul.f32 %v864, %v862
  %v866 = vmul.f32 %v865, %v864
  %v867 = vmul.f32 0.5, %v866
  %v868 = vsub.f32 1.5, %v867
  %v869 = vmul.f32 %v864, %v868
  %vm870 = vweird.f32 %v862
  %vm871 = vweird.f32 %v864
  %vm872 = vmor %vm870, %vm871
  %v873 = vsel %vm872, %v864, %v869
  %v874 = vrsqrt.pop %v863
  %v875 = vmul.f32 %v874, %v863
  %v876 = vmul.f32 %v875, %v874
  %v877 = vmul.f32 0.5, %v876
  %v878 = vsub.f32 1.5, %v877
  %v879 = vmul.f32 %v874, %v878
  %vm880 = vweird.f32 %v863
  %vm881 = vweird.f32 %v874
  %vm882 = vmor %vm880, %vm881
  %v883 = vsel %vm882, %v874, %v879
  %v884 = vmul.f32 %v849, %v873
  %v885 = vmul.f32 %v850, %v883
  %v886 = vadd.f32 %v851, 1.0
  %v888 = vperm.slane %v886, 0
  %v890 = vmul.f32 %v884, %v888
  %v891 = vmul.f32 %v885, %v888
  %v892 = vld [vmem:[%s8] sm:$0xf]
  %v893 = vld [vmem:[%s8 + $0x4] sm:$0xf]
  %v894 = vld [vmem:[%s8 + $0x8] sm:$0xf]
  %v895 = vld [vmem:[%s8 + $0xc] sm:$0xf]
  %v896 = vpack.c.bf16 %v891, %v890
  %v901 = vunpack.c.l.b16 %v892
  %v902 = vunpack.c.l.b16 %v893
  %v903 = vunpack.c.l.b16 %v894
  %v904 = vunpack.c.l.b16 %v895
  %v905 = vpack.c.b16 %v902, %v901
  %v906 = vpack.c.b16 %v904, %v903
  %v910 = vsel %vm43, %v896, 0
  %912 = vmatpush.bf16.msra.mxu0 0
  %913 = vmatpush.bf16.msra.mxu0 0
  %914 = vmatpush.bf16.msra.mxu0 0
  %915 = vmatpush.bf16.msra.mxu0 0
  %916 = vmatpush.bf16.msra.mxu0 0
  %917 = vmatpush.bf16.msra.mxu0 0
  %918 = vmatpush.bf16.msra.mxu0 %v906
  %919 = vmatpush.bf16.msra.mxu0 %v905
  %920 = vmatmul.bf16.gmra.mxu0 %v910
  %v921 = vpop.f32.mrf.mxu0
  %v922 = vadd.f32 0.0, %v921
  %v923 = vpop.f32.mrf.mxu0
  %v924 = vadd.f32 0.0, %v923
  %925 = vdwg.mxu0
  %v926 = vmul.f32 %v922, %v922
  %v927 = vmul.f32 %v924, %v924
  %v928 = vmul.f32 %v922, %v926
  %v929 = vmul.f32 %v924, %v927
  %v930 = vmul.f32 %v928, 0.044715
  %v931 = vmul.f32 %v929, 0.044715
  %v932 = vadd.f32 %v922, %v930
  %v933 = vadd.f32 %v924, %v931
  %v934 = vmul.f32 %v932, 0.7978846
  %v935 = vmul.f32 %v933, 0.7978846
  %v936 = vtanh.pop %v934
  %v937 = vtanh.pop %v935
  %v938 = vadd.f32 %v936, 1.0
  %v939 = vadd.f32 %v937, 1.0
  %v940 = vmul.f32 %v938, 0.5
  %v941 = vmul.f32 %v939, 0.5
  %v942 = vmul.f32 %v922, %v940
  %v943 = vmul.f32 %v924, %v941
  %946 = vrot.lane.b32.xlu0 %v922, 64
  %v947 = vpop.permute.xlu0 %946
  %948 = vrot.lane.b32.xlu0 %v924, 64
  %v949 = vpop.permute.xlu0 %948
  %v952 = vmul.f32 %v942, %v947
  %v953 = vmul.f32 %v943, %v949
  %v954 = vld [vmem:[%s9] sm:$0xf]
  %v955 = vld [vmem:[%s9 + $0x4] sm:$0xf]
  %v956 = vld [vmem:[%s9 + $0x8] sm:$0xf]
  %v957 = vld [vmem:[%s9 + $0xc] sm:$0xf]
  %v958 = vld [vmem:[%s9 + $0x10] sm:$0xf]
  %v959 = vld [vmem:[%s9 + $0x14] sm:$0xf]
  %v960 = vld [vmem:[%s9 + $0x18] sm:$0xf]
  %v961 = vld [vmem:[%s9 + $0x1c] sm:$0xf]
  %v962 = vpack.c.bf16 %v953, %v952
  %v971 = vunpack.c.l.b16 %v954
  %v972 = vunpack.c.l.b16 %v955
  %v973 = vunpack.c.l.b16 %v956
  %v974 = vunpack.c.l.b16 %v957
  %v975 = vunpack.c.l.b16 %v958
  %v976 = vunpack.c.l.b16 %v959
  %v977 = vunpack.c.l.b16 %v960
  %v978 = vunpack.c.l.b16 %v961
  %v979 = vpack.c.b16 %v972, %v971
  %v980 = vpack.c.b16 %v974, %v973
  %v981 = vpack.c.b16 %v976, %v975
  %v982 = vpack.c.b16 %v978, %v977
  %vm987 = vcmask 523264
  %v989 = vsel %vm987, %v962, 0
  %991 = vmatpush.bf16.msra.mxu0 0
  %992 = vmatpush.bf16.msra.mxu0 0
  %993 = vmatpush.bf16.msra.mxu0 0
  %994 = vmatpush.bf16.msra.mxu0 0
  %995 = vmatpush.bf16.msra.mxu0 %v982
  %996 = vmatpush.bf16.msra.mxu0 %v981
  %997 = vmatpush.bf16.msra.mxu0 %v980
  %998 = vmatpush.bf16.msra.mxu0 %v979
  %999 = vmatmul.bf16.gmra.mxu0 %v989
  %v1000 = vpop.f32.mrf.mxu0
  %v1001 = vadd.f32 0.0, %v1000
  %v1002 = vpop.f32.mrf.mxu0
  %v1003 = vadd.f32 0.0, %v1002
  %1004 = vdwg.mxu0
  %v1005 = vadd.f32 %v849, %v1001
  %v1006 = vadd.f32 %v850, %v1003
  %v1007 = vpack.c.bf16 %v1005, %v1005
  %v1008 = vpack.c.bf16 %v1006, %v1006
  %vm1009 = vcmask 257024
  %1010 = vst.msk [vmem:[%s10] sm:$0xf] %vm1009, %v1007
  %1011 = vst.msk [vmem:[%s10 + $0x4] sm:$0xf] %vm1009, %v1008
  // Predicated region
  $region42: #{paligemma_forward.11} parent=0 // pred_check
    _
  $region43: #{paligemma_forward.11} parent=0 // pred_check_branch
    %1013 = sbr.rel (0) target = $region45
  $region44: #{paligemma_forward.11} parent=0 // pred_region
    _
  $region45: #{paligemma_forward.11} parent=0 // pred_fallthru
    _
  // Predicated region
  $region46: #{paligemma_forward.11} parent=0 // pred_check
    _
  $region47: #{paligemma_forward.11} parent=0 // pred_check_branch
    %1015 = sbr.rel (0) target = $region49
  $region48: #{paligemma_forward.11} parent=0 // pred_region
    _
  $region49: #{paligemma_forward.11} parent=0 // pred_fallthru
    _

</llo_original>
